<compile_context>
chip_gen: v7x
topology: tpu7x:2x2x1
jax: 0.10.0
libtpu: 0.0.40
codegen_flags: <defaults>
</compile_context>

<pallas_src>
import functools

import jax
import jax.numpy as jnp
from jax import lax
from jax.experimental import pallas as pl
from jax.experimental.pallas import tpu as pltpu


# ----------------------------------------------------------------------------
# small helpers
# ----------------------------------------------------------------------------
def _round_up(x, m):
    return ((x + m - 1) // m) * m


def _pick_tile(dim_padded):
    """Largest of 512/256/128 that divides an already 128-padded dim."""
    for t in (512, 256, 128):
        if dim_padded % t == 0:
            return t
    return 128


def _row_pad_tile(m):
    """Pad row count and pick the row tile (multiple of 8; <=256 so big layers
    expose >=2 parallel row blocks)."""
    mp = _round_up(m, 8)
    if mp <= 256:
        return mp, mp
    return _round_up(mp, 256), 256


def _tm_for(mp):
    return mp if mp <= 256 else 256


# ----------------------------------------------------------------------------
# Pallas kernels
# ----------------------------------------------------------------------------
def _mm_bnstats_kernel(a_ref, b_ref, o_ref, ps_ref, pq_ref, acc_ref):
    """bf16 x bf16 -> f32-accumulated matmul tile with a BatchNorm-statistics
    epilogue (per-channel partial sum and sum of squares per output tile)."""
    @pl.when(pl.program_id(2) == 0)
    def _():
        acc_ref[...] = jnp.zeros_like(acc_ref)

    acc_ref[...] += jnp.dot(a_ref[...], b_ref[...],
                            preferred_element_type=jnp.float32)

    @pl.when(pl.program_id(2) == pl.num_programs(2) - 1)
    def _():
        acc = acc_ref[...]
        o_ref[...] = acc.astype(o_ref.dtype)
        ps_ref[...] = jnp.broadcast_to(
            jnp.sum(acc, axis=0, keepdims=True), ps_ref.shape)
        pq_ref[...] = jnp.broadcast_to(
            jnp.sum(acc * acc, axis=0, keepdims=True), pq_ref.shape)


def _bn_relu_kernel(x_ref, s_ref, b_ref, o_ref):
    y = x_ref[...].astype(jnp.float32) * s_ref[...] + b_ref[...]
    o_ref[...] = jnp.maximum(y, 0.0).astype(o_ref.dtype)


def _bn_add_relu_kernel(x_ref, s_ref, b_ref, r_ref, o_ref):
    y = x_ref[...].astype(jnp.float32) * s_ref[...] + b_ref[...]
    y = y + r_ref[...].astype(jnp.float32)
    o_ref[...] = jnp.maximum(y, 0.0).astype(o_ref.dtype)


def _bn_bn_add_relu_kernel(x_ref, s_ref, b_ref, r_ref, rs_ref, rb_ref, o_ref):
    y = x_ref[...].astype(jnp.float32) * s_ref[...] + b_ref[...]
    y = y + r_ref[...].astype(jnp.float32) * rs_ref[...] + rb_ref[...]
    o_ref[...] = jnp.maximum(y, 0.0).astype(o_ref.dtype)


_AFFINE_KERNELS = {
    'bn': (_bn_relu_kernel, 0),            # bn + relu
    'bn_add': (_bn_add_relu_kernel, 1),    # bn + identity residual + relu
    'bn_bn_add': (_bn_bn_add_relu_kernel, 2),  # bn + (bn of downsample) + relu
}


# ----------------------------------------------------------------------------
# pallas_call builders (cached per shape; the whole forward is jitted outside)
# ----------------------------------------------------------------------------
@functools.lru_cache(maxsize=None)
def _make_matmul(mp, kp, np_, tm, tn, tk):
    grid = (mp // tm, np_ // tn, kp // tk)
    mt = mp // tm
    return pl.pallas_call(
        _mm_bnstats_kernel,
        out_shape=(jax.ShapeDtypeStruct((mp, np_), jnp.bfloat16),
                   jax.ShapeDtypeStruct((8 * mt, np_), jnp.float32),
                   jax.ShapeDtypeStruct((8 * mt, np_), jnp.float32)),
        grid_spec=pltpu.PrefetchScalarGridSpec(
            num_scalar_prefetch=0,
            grid=grid,
            in_specs=[pl.BlockSpec((tm, tk), lambda i, j, k: (i, k)),
                      pl.BlockSpec((tk, tn), lambda i, j, k: (k, j))],
            out_specs=[pl.BlockSpec((tm, tn), lambda i, j, k: (i, j)),
                       pl.BlockSpec((8, tn), lambda i, j, k: (i, j)),
                       pl.BlockSpec((8, tn), lambda i, j, k: (i, j))],
            scratch_shapes=[pltpu.VMEM((tm, tn), jnp.float32)]),
        compiler_params=pltpu.CompilerParams(
            dimension_semantics=("parallel", "parallel", "arbitrary")))


@functools.lru_cache(maxsize=None)
def _make_affine(mp, cp, tm, variant):
    kernel, extra = _AFFINE_KERNELS[variant]
    row = pl.BlockSpec((tm, cp), lambda i: (i, 0))
    vec = pl.BlockSpec((1, cp), lambda i: (0, 0))
    in_specs = [row, vec, vec]
    if extra >= 1:
        in_specs.append(pl.BlockSpec((tm, cp), lambda i: (i, 0)))
    if extra == 2:
        in_specs += [vec, vec]
    return pl.pallas_call(
        kernel,
        out_shape=jax.ShapeDtypeStruct((mp, cp), jnp.bfloat16),
        grid_spec=pltpu.PrefetchScalarGridSpec(
            num_scalar_prefetch=0,
            grid=(mp // tm,),
            in_specs=in_specs,
            out_specs=pl.BlockSpec((tm, cp), lambda i: (i, 0))),
        compiler_params=pltpu.CompilerParams(
            dimension_semantics=("parallel",)))


# ----------------------------------------------------------------------------
# thin wrappers used inside the jitted forward
# ----------------------------------------------------------------------------
def _matmul_bnstats(a_padded, w_packed):
    mp, kp = a_padded.shape
    np_ = w_packed.shape[1]
    call = _make_matmul(mp, kp, np_, _tm_for(mp), _pick_tile(np_), _pick_tile(kp))
    return call(a_padded, w_packed)


def _pad2d(a, mp, kp):
    m, k = a.shape
    if m == mp and k == kp:
        return a
    return jnp.pad(a, ((0, mp - m), (0, kp - k)))


def _im2col(x, kh, kw, stride, dilation, padding):
    """NHWC -> (N*OH*OW, C*kh*kw), channel-major / tap-minor (matches
    PyTorch weight.reshape(Cout, Cin*kh*kw))."""
    n, h, w, c = x.shape
    oh = (h + 2 * padding - dilation * (kh - 1) - 1) // stride + 1
    ow = (w + 2 * padding - dilation * (kw - 1) - 1) // stride + 1
    xp = jnp.pad(x, ((0, 0), (padding, padding), (padding, padding), (0, 0)))
    taps = []
    for i in range(kh):
        for j in range(kw):
            hi, wj = i * dilation, j * dilation
            taps.append(xp[:, hi:hi + (oh - 1) * stride + 1:stride,
                           wj:wj + (ow - 1) * stride + 1:stride, :])
    col = jnp.stack(taps, axis=-1)           # (N, OH, OW, C, kh*kw)
    return col.reshape(n * oh * ow, c * kh * kw), oh, ow


def _conv_nhwc(x, w_packed, cspec, stride=1, dilation=1, padding=0):
    """x: NHWC bf16 (unpadded channels). Returns padded 2-D bf16 conv output,
    BN partial sums, true row count and output spatial size."""
    kh, kw = cspec['kh'], cspec['kw']
    n, h, w, c = x.shape
    if kh == 1 and kw == 1:
        xs = x[:, ::stride, ::stride, :] if stride > 1 else x
        oh, ow = xs.shape[1], xs.shape[2]
        a = xs.reshape(n * oh * ow, c)
    else:
        a, oh, ow = _im2col(x, kh, kw, stride, dilation, padding)
    m = n * oh * ow
    mp, _ = _row_pad_tile(m)
    a = _pad2d(a, mp, cspec['kp'])
    y, ps, pq = _matmul_bnstats(a, w_packed)
    return y, ps, pq, m, oh, ow


def _bn_scale_shift(ps, pq, m_rows, gamma, beta, eps=1e-5):
    """Training-mode BatchNorm (batch statistics, biased variance) folded into
    a per-channel (scale, shift)."""
    cout = gamma.shape[0]
    s = jnp.sum(ps[0::8, :cout], axis=0)
    q = jnp.sum(pq[0::8, :cout], axis=0)
    mean = s / m_rows
    var = jnp.maximum(q / m_rows - mean * mean, 0.0)
    scale = gamma * lax.rsqrt(var + eps)
    shift = beta - mean * scale
    return scale, shift


def _vec(v, cp):
    return jnp.pad(v, (0, cp - v.shape[0])).reshape(1, cp).astype(jnp.float32)


def _bn_relu(y, scale, shift):
    mp, cp = y.shape
    return _make_affine(mp, cp, _tm_for(mp), 'bn')(y, _vec(scale, cp),
                                                   _vec(shift, cp))


def _bn_add_relu(y, scale, shift, residual):
    mp, cp = y.shape
    return _make_affine(mp, cp, _tm_for(mp), 'bn_add')(
        y, _vec(scale, cp), _vec(shift, cp), residual)


def _bn_bn_add_relu(y, scale, shift, r, rscale, rshift):
    mp, cp = y.shape
    return _make_affine(mp, cp, _tm_for(mp), 'bn_bn_add')(
        y, _vec(scale, cp), _vec(shift, cp), r, _vec(rscale, cp),
        _vec(rshift, cp))


# ----------------------------------------------------------------------------
# Bottleneck forward (whole thing runs under one jax.jit)
# ----------------------------------------------------------------------------
def bottleneck_forward(params, x_nchw, spec):
    stride, rate = spec['stride'], spec['rate']
    x = jnp.transpose(x_nchw, (0, 2, 3, 1))                  # NCHW -> NHWC
    n, h, w, cin = x.shape
    xb = x.astype(jnp.bfloat16)

    # ---- conv1 (1x1) + bn1 + relu ------------------------------------------
    c1, c3 = spec['w1'], spec['w3']
    m1 = n * h * w
    mp1, _ = _row_pad_tile(m1)
    a_in = _pad2d(xb.reshape(m1, cin), mp1, c1['kp'])        # also the identity residual
    y1, ps1, pq1 = _matmul_bnstats(a_in, params['w1'])
    sc1, sh1 = _bn_scale_shift(ps1, pq1, m1, params['bn1_g'], params['bn1_b'])
    a1 = _bn_relu(y1, sc1, sh1)
    x1 = a1[:m1, :c1['cout']].reshape(n, h, w, c1['cout'])   # NHWC for the 3x3

    # ---- conv2 (3x3, stride, dilation=rate, padding=rate) + bn2 + relu ------
    c2 = spec['w2']
    y2, ps2, pq2, m2, oh, ow = _conv_nhwc(x1, params['w2'], c2,
                                          stride=stride, dilation=rate,
                                          padding=rate)
    sc2, sh2 = _bn_scale_shift(ps2, pq2, m2, params['bn2_g'], params['bn2_b'])
    a2 = _bn_relu(y2, sc2, sh2)                              # stays padded 2-D

    # ---- conv3 (1x1): padded 2-D activation fed straight to the MXU ---------
    y3, ps3, pq3 = _matmul_bnstats(a2, params['w3'])
    sc3, sh3 = _bn_scale_shift(ps3, pq3, m2, params['bn3_g'], params['bn3_b'])

    # ---- bn3 + residual (+ downsample BN) + relu, fully fused ---------------
    if spec['has_down']:
        cd = spec['wd']
        yd, psd, pqd, md, _, _ = _conv_nhwc(xb, params['wd'], cd, stride=stride)
        scd, shd = _bn_scale_shift(psd, pqd, md,
                                   params['bnd_g'], params['bnd_b'])
        out2d = _bn_bn_add_relu(y3, sc3, sh3, yd, scd, shd)
    else:
        assert stride == 1 and cin == c3['cout']
        out2d = _bn_add_relu(y3, sc3, sh3, a_in)

    cout = c3['cout']
    out = out2d[:m2, :cout].reshape(n, oh, ow, cout).astype(jnp.float32)
    return jnp.transpose(out, (0, 3, 1, 2))                  # -> NCHW


# ----------------------------------------------------------------------------
# parameters (deterministic, in-script), pre-packed for the MXU
# ----------------------------------------------------------------------------
def _pack_conv(w):
    cout, cin, kh, kw = w.shape
    k = cin * kh * kw
    kp, np_ = _round_up(k, 128), _round_up(cout, 128)
    wm = jnp.pad(w.reshape(cout, k).T, ((0, kp - k), (0, np_ - cout)))
    cspec = dict(kh=kh, kw=kw, cin=cin, cout=cout, kp=kp, np=np_)
    return wm.astype(jnp.bfloat16), cspec


class ParamFactory:
    def __init__(self, key):
        self.key, self.count = key, 0

    def _next(self):
        self.count += 1
        return jax.random.fold_in(self.key, self.count)

    def conv(self, cout, cin, kh, kw):
        fan_in = cin * kh * kw
        return (jax.random.normal(self._next(), (cout, cin, kh, kw),
                                  jnp.float32) * (2.0 / fan_in) ** 0.5)

    def bn(self, c):
        g = 1.0 + 0.01 * jax.random.normal(self._next(), (c,), jnp.float32)
        b = 0.01 * jax.random.normal(self._next(), (c,), jnp.float32)
        return g, b


def make_bottleneck(key, inplanes, planes, stride=1, rate=1):
    pf = ParamFactory(key)
    has_down = (stride != 1) or (inplanes != planes * 4)
    raw = {'w1': pf.conv(planes, inplanes, 1, 1), 'bn1': pf.bn(planes),
           'w2': pf.conv(planes, planes, 3, 3), 'bn2': pf.bn(planes),
           'w3': pf.conv(planes * 4, planes, 1, 1), 'bn3': pf.bn(planes * 4)}
    if has_down:
        raw['wd'] = pf.conv(planes * 4, inplanes, 1, 1)
        raw['bnd'] = pf.bn(planes * 4)

    params, spec = {}, {'stride': stride, 'rate': rate, 'has_down': has_down}
    for name in ('w1', 'w2', 'w3') + (('wd',) if has_down else ()):
        params[name], spec[name] = _pack_conv(raw[name])
    for name in ('bn1', 'bn2', 'bn3') + (('bnd',) if has_down else ()):
        params[name + '_g'], params[name + '_b'] = raw[name]
    return params, spec, raw


# ----------------------------------------------------------------------------
# pure-XLA f32 reference (mirrors the PyTorch forward) for validation
# ----------------------------------------------------------------------------
def _ref_conv(x, w, stride=1, dilation=1, padding=0):
    return lax.conv_general_dilated(
        x, w, window_strides=(stride, stride),
        padding=[(padding, padding), (padding, padding)],
        rhs_dilation=(dilation, dilation),
        dimension_numbers=('NCHW', 'OIHW', 'NCHW'))


def _ref_bn(x, gamma, beta, eps=1e-5):
    mean = jnp.mean(x, axis=(0, 2, 3), keepdims=True)
    var = jnp.mean(jnp.square(x - mean), axis=(0, 2, 3), keepdims=True)
    return ((x - mean) * lax.rsqrt(var + eps) * gamma.reshape(1, -1, 1, 1)
            + beta.reshape(1, -1, 1, 1))


def bottleneck_reference(raw, x, stride, rate, has_down):
    out = jax.nn.relu(_ref_bn(_ref_conv(x, raw['w1']), *raw['bn1']))
    out = jax.nn.relu(_ref_bn(_ref_conv(out, raw['w2'], stride=stride,
                                        dilation=rate, padding=rate),
                              *raw['bn2']))
    out = _ref_bn(_ref_conv(out, raw['w3']), *raw['bn3'])
    residual = x
    if has_down:
        residual = _ref_bn(_ref_conv(x, raw['wd'], stride=stride), *raw['bnd'])
    return jax.nn.relu(out + residual)


# ----------------------------------------------------------------------------
if __name__ == "__main__":
    key = jax.random.PRNGKey(0)
    x = jax.random.normal(jax.random.fold_in(key, 1234),
                          (2, 64, 16, 16), jnp.float32)

    configs = [
        # (inplanes, planes, stride, rate, expected output shape)
        (64, 16, 1, 2, (2, 64, 16, 16)),    # identity residual, dilated 3x3
        (64, 32, 2, 1, (2, 128, 8, 8)),     # downsample branch (conv1x1 s2 + BN)
    ]

    for idx, (inplanes, planes, stride, rate, exp_shape) in enumerate(configs):
        params, spec, raw = make_bottleneck(jax.random.fold_in(key, 10 + idx),
                                            inplanes, planes, stride, rate)
        fwd = jax.jit(functools.partial(bottleneck_forward, spec=spec))
        out = jax.block_until_ready(fwd(params, x))
        assert out.shape == exp_shape, (out.shape, exp_shape)

        ref = bottleneck_reference(raw, x, stride, rate, spec['has_down'])
        # bf16 MXU operands / bf16 intermediate activations => loose tolerance
        err = float(jnp.max(jnp.abs(out - ref)) / (jnp.max(jnp.abs(ref)) + 1e-6))
        assert err < 5e-2, f"config {idx}: relative error too large: {err}"

    print("KERNEL_OK")
</pallas_src>

<mosaic_0001>
module attributes {stable_mosaic.version = 11 : i64} {
  func.func @_mm_bnstats_kernel(%arg0: i32, %arg1: i32, %arg2: i32, %arg3: memref<256x128xbf16, #tpu.memory_space<vmem>>, %arg4: memref<128x128xbf16, #tpu.memory_space<vmem>>, %arg5: memref<256x128xbf16, #tpu.memory_space<vmem>>, %arg6: memref<8x128xf32, #tpu.memory_space<vmem>>, %arg7: memref<8x128xf32, #tpu.memory_space<vmem>>, %arg8: memref<256x128xf32, #tpu.memory_space<vmem>>) attributes {dimension_semantics = [#tpu.dimension_semantics<parallel>, #tpu.dimension_semantics<parallel>, #tpu.dimension_semantics<arbitrary>], iteration_bounds = array<i64: 2, 1, 1>, scalar_prefetch = 0 : i64, scratch_operands = 1 : i64, tpu.core_type = #tpu.core_type<tc>, window_params = [{transform_indices = @transform_0, window_bounds = array<i64: 256, 128>}, {transform_indices = @transform_1, window_bounds = array<i64: 128, 128>}, {transform_indices = @transform_2, window_bounds = array<i64: 256, 128>}, {transform_indices = @transform_3, window_bounds = array<i64: 8, 128>}, {transform_indices = @transform_4, window_bounds = array<i64: 8, 128>}]} {
    %c0_i32 = arith.constant 0 : i32
    %0 = arith.cmpi eq, %arg2, %c0_i32 : i32
    %1 = arith.extui %0 : i1 to i32
    %c0_i32_0 = arith.constant 0 : i32
    %2 = arith.cmpi ne, %1, %c0_i32_0 : i32
    scf.if %2 {
      %cst_10 = arith.constant 0.000000e+00 : f32
      %12 = vector.broadcast %cst_10 : f32 to vector<256x128xf32>
      %c0_11 = arith.constant 0 : index
      %c0_12 = arith.constant 0 : index
      %13 = vector.load %arg8[%c0_11, %c0_12] : memref<256x128xf32, #tpu.memory_space<vmem>>, vector<256x128xf32>
      tpu.vector_store %arg8[%c0_11, %c0_12], %12 {strides = array<i32>} : memref<256x128xf32, #tpu.memory_space<vmem>>, vector<256x128xf32>,
    } else {
    }
    %c0 = arith.constant 0 : index
    %c0_1 = arith.constant 0 : index
    %3 = vector.load %arg8[%c0, %c0_1] : memref<256x128xf32, #tpu.memory_space<vmem>>, vector<256x128xf32>
    %c0_2 = arith.constant 0 : index
    %c0_3 = arith.constant 0 : index
    %4 = vector.load %arg3[%c0_2, %c0_3] : memref<256x128xbf16, #tpu.memory_space<vmem>>, vector<256x128xbf16>
    %c0_4 = arith.constant 0 : index
    %c0_5 = arith.constant 0 : index
    %5 = vector.load %arg4[%c0_4, %c0_5] : memref<128x128xbf16, #tpu.memory_space<vmem>>, vector<128x128xbf16>
    %cst = arith.constant dense<0.000000e+00> : vector<256x128xf32>
    %6 = tpu.matmul %4, %5, %cst {dimension_numbers = #tpu.dot_dimension_numbers<[1], [0], [0], [1], [0, 0, 1, 1], [], []>} : vector<256x128xbf16>, vector<128x128xbf16>, vector<256x128xf32> -> vector<256x128xf32>
    %7 = arith.addf %3, %6 : vector<256x128xf32>
    %c0_6 = arith.constant 0 : index
    %c0_7 = arith.constant 0 : index
    %8 = vector.load %arg8[%c0_6, %c0_7] : memref<256x128xf32, #tpu.memory_space<vmem>>, vector<256x128xf32>
    tpu.vector_store %arg8[%c0_6, %c0_7], %7 {strides = array<i32>} : memref<256x128xf32, #tpu.memory_space<vmem>>, vector<256x128xf32>,
    %c0_i32_8 = arith.constant 0 : i32
    %9 = arith.cmpi eq, %arg2, %c0_i32_8 : i32
    %10 = arith.extui %9 : i1 to i32
    %c0_i32_9 = arith.constant 0 : i32
    %11 = arith.cmpi ne, %10, %c0_i32_9 : i32
    scf.if %11 {
      %c0_10 = arith.constant 0 : index
      %c0_11 = arith.constant 0 : index
      %12 = vector.load %arg8[%c0_10, %c0_11] : memref<256x128xf32, #tpu.memory_space<vmem>>, vector<256x128xf32>
      %13 = arith.truncf %12 : vector<256x128xf32> to vector<256x128xbf16>
      %c0_12 = arith.constant 0 : index
      %c0_13 = arith.constant 0 : index
      %14 = vector.load %arg5[%c0_12, %c0_13] : memref<256x128xbf16, #tpu.memory_space<vmem>>, vector<256x128xbf16>
      tpu.vector_store %arg5[%c0_12, %c0_13], %13 {strides = array<i32>} : memref<256x128xbf16, #tpu.memory_space<vmem>>, vector<256x128xbf16>,
      %cst_14 = arith.constant dense<0.000000e+00> : vector<128xf32>
      %15 = vector.multi_reduction <add>, %12, %cst_14 [0] : vector<256x128xf32> to vector<128xf32>
      %16 = vector.shape_cast %15 : vector<128xf32> to vector<1x128xf32>
      %17 = vector.shape_cast %16 : vector<1x128xf32> to vector<1x128xf32>
      %18 = vector.broadcast %17 : vector<1x128xf32> to vector<8x128xf32>
      %c0_15 = arith.constant 0 : index
      %c0_16 = arith.constant 0 : index
      %19 = vector.load %arg6[%c0_15, %c0_16] : memref<8x128xf32, #tpu.memory_space<vmem>>, vector<8x128xf32>
      tpu.vector_store %arg6[%c0_15, %c0_16], %18 {strides = array<i32>} : memref<8x128xf32, #tpu.memory_space<vmem>>, vector<8x128xf32>,
      %20 = arith.mulf %12, %12 : vector<256x128xf32>
      %cst_17 = arith.constant dense<0.000000e+00> : vector<128xf32>
      %21 = vector.multi_reduction <add>, %20, %cst_17 [0] : vector<256x128xf32> to vector<128xf32>
      %22 = vector.shape_cast %21 : vector<128xf32> to vector<1x128xf32>
      %23 = vector.shape_cast %22 : vector<1x128xf32> to vector<1x128xf32>
      %24 = vector.broadcast %23 : vector<1x128xf32> to vector<8x128xf32>
      %c0_18 = arith.constant 0 : index
      %c0_19 = arith.constant 0 : index
      %25 = vector.load %arg7[%c0_18, %c0_19] : memref<8x128xf32, #tpu.memory_space<vmem>>, vector<8x128xf32>
      tpu.vector_store %arg7[%c0_18, %c0_19], %24 {strides = array<i32>} : memref<8x128xf32, #tpu.memory_space<vmem>>, vector<8x128xf32>,
    } else {
    }
    return
  }
  func.func @transform_0(%arg0: i32, %arg1: i32, %arg2: i32) -> (i32, i32) {
    %c0_i32 = arith.constant 0 : i32
    return %arg0, %arg2 : i32, i32
  }
  func.func @transform_1(%arg0: i32, %arg1: i32, %arg2: i32) -> (i32, i32) {
    %c0_i32 = arith.constant 0 : i32
    return %arg2, %arg1 : i32, i32
  }
  func.func @transform_2(%arg0: i32, %arg1: i32, %arg2: i32) -> (i32, i32) {
    %c0_i32 = arith.constant 0 : i32
    return %arg0, %arg1 : i32, i32
  }
  func.func @transform_3(%arg0: i32, %arg1: i32, %arg2: i32) -> (i32, i32) {
    %c0_i32 = arith.constant 0 : i32
    return %arg0, %arg1 : i32, i32
  }
  func.func @transform_4(%arg0: i32, %arg1: i32, %arg2: i32) -> (i32, i32) {
    %c0_i32 = arith.constant 0 : i32
    return %arg0, %arg1 : i32, i32
  }
}

module attributes {stable_mosaic.version = 11 : i64} {
  func.func @_bn_relu_kernel(%arg0: i32, %arg1: memref<256x128xbf16, #tpu.memory_space<vmem>>, %arg2: memref<1x128xf32, #tpu.memory_space<vmem>>, %arg3: memref<1x128xf32, #tpu.memory_space<vmem>>, %arg4: memref<256x128xbf16, #tpu.memory_space<vmem>>) attributes {dimension_semantics = [#tpu.dimension_semantics<parallel>], iteration_bounds = array<i64: 2>, scalar_prefetch = 0 : i64, scratch_operands = 0 : i64, tpu.core_type = #tpu.core_type<tc>, window_params = [{transform_indices = @transform_0, window_bounds = array<i64: 256, 128>}, {pipeline_mode = #tpu.pipeline_mode<synchronous>, transform_indices = @transform_1, window_bounds = array<i64: 1, 128>}, {pipeline_mode = #tpu.pipeline_mode<synchronous>, transform_indices = @transform_2, window_bounds = array<i64: 1, 128>}, {transform_indices = @transform_3, window_bounds = array<i64: 256, 128>}]} {
    %c0 = arith.constant 0 : index
    %c0_0 = arith.constant 0 : index
    %0 = vector.load %arg1[%c0, %c0_0] : memref<256x128xbf16, #tpu.memory_space<vmem>>, vector<256x128xbf16>
    %1 = arith.extf %0 : vector<256x128xbf16> to vector<256x128xf32>
    %c0_1 = arith.constant 0 : index
    %c0_2 = arith.constant 0 : index
    %2 = vector.load %arg2[%c0_1, %c0_2] : memref<1x128xf32, #tpu.memory_space<vmem>>, vector<1x128xf32>
    %3 = vector.broadcast %2 : vector<1x128xf32> to vector<256x128xf32>
    %4 = arith.mulf %1, %3 : vector<256x128xf32>
    %c0_3 = arith.constant 0 : index
    %c0_4 = arith.constant 0 : index
    %5 = vector.load %arg3[%c0_3, %c0_4] : memref<1x128xf32, #tpu.memory_space<vmem>>, vector<1x128xf32>
    %6 = vector.broadcast %5 : vector<1x128xf32> to vector<256x128xf32>
    %7 = arith.addf %4, %6 : vector<256x128xf32>
    %cst = arith.constant 0.000000e+00 : f32
    %8 = vector.broadcast %cst : f32 to vector<256x128xf32>
    %9 = arith.maximumf %7, %8 : vector<256x128xf32>
    %10 = arith.truncf %9 : vector<256x128xf32> to vector<256x128xbf16>
    %c0_5 = arith.constant 0 : index
    %c0_6 = arith.constant 0 : index
    %11 = vector.load %arg4[%c0_5, %c0_6] : memref<256x128xbf16, #tpu.memory_space<vmem>>, vector<256x128xbf16>
    tpu.vector_store %arg4[%c0_5, %c0_6], %10 {strides = array<i32>} : memref<256x128xbf16, #tpu.memory_space<vmem>>, vector<256x128xbf16>,
    return
  }
  func.func @transform_0(%arg0: i32) -> (i32, i32) {
    %c0_i32 = arith.constant 0 : i32
    %c0_i32_0 = arith.constant 0 : i32
    return %arg0, %c0_i32 : i32, i32
  }
  func.func @transform_1(%arg0: i32) -> (i32, i32) {
    %c0_i32 = arith.constant 0 : i32
    %c0_i32_0 = arith.constant 0 : i32
    %c0_i32_1 = arith.constant 0 : i32
    return %c0_i32, %c0_i32_0 : i32, i32
  }
  func.func @transform_2(%arg0: i32) -> (i32, i32) {
    %c0_i32 = arith.constant 0 : i32
    %c0_i32_0 = arith.constant 0 : i32
    %c0_i32_1 = arith.constant 0 : i32
    return %c0_i32, %c0_i32_0 : i32, i32
  }
  func.func @transform_3(%arg0: i32) -> (i32, i32) {
    %c0_i32 = arith.constant 0 : i32
    %c0_i32_0 = arith.constant 0 : i32
    return %arg0, %c0_i32 : i32, i32
  }
}

module attributes {stable_mosaic.version = 11 : i64} {
  func.func @_mm_bnstats_kernel(%arg0: i32, %arg1: i32, %arg2: i32, %arg3: memref<256x256xbf16, #tpu.memory_space<vmem>>, %arg4: memref<256x128xbf16, #tpu.memory_space<vmem>>, %arg5: memref<256x128xbf16, #tpu.memory_space<vmem>>, %arg6: memref<8x128xf32, #tpu.memory_space<vmem>>, %arg7: memref<8x128xf32, #tpu.memory_space<vmem>>, %arg8: memref<256x128xf32, #tpu.memory_space<vmem>>) attributes {dimension_semantics = [#tpu.dimension_semantics<parallel>, #tpu.dimension_semantics<parallel>, #tpu.dimension_semantics<arbitrary>], iteration_bounds = array<i64: 2, 1, 1>, scalar_prefetch = 0 : i64, scratch_operands = 1 : i64, tpu.core_type = #tpu.core_type<tc>, window_params = [{transform_indices = @transform_0, window_bounds = array<i64: 256, 256>}, {transform_indices = @transform_1, window_bounds = array<i64: 256, 128>}, {transform_indices = @transform_2, window_bounds = array<i64: 256, 128>}, {transform_indices = @transform_3, window_bounds = array<i64: 8, 128>}, {transform_indices = @transform_4, window_bounds = array<i64: 8, 128>}]} {
    %c0_i32 = arith.constant 0 : i32
    %0 = arith.cmpi eq, %arg2, %c0_i32 : i32
    %1 = arith.extui %0 : i1 to i32
    %c0_i32_0 = arith.constant 0 : i32
    %2 = arith.cmpi ne, %1, %c0_i32_0 : i32
    scf.if %2 {
      %cst_10 = arith.constant 0.000000e+00 : f32
      %12 = vector.broadcast %cst_10 : f32 to vector<256x128xf32>
      %c0_11 = arith.constant 0 : index
      %c0_12 = arith.constant 0 : index
      %13 = vector.load %arg8[%c0_11, %c0_12] : memref<256x128xf32, #tpu.memory_space<vmem>>, vector<256x128xf32>
      tpu.vector_store %arg8[%c0_11, %c0_12], %12 {strides = array<i32>} : memref<256x128xf32, #tpu.memory_space<vmem>>, vector<256x128xf32>,
    } else {
    }
    %c0 = arith.constant 0 : index
    %c0_1 = arith.constant 0 : index
    %3 = vector.load %arg8[%c0, %c0_1] : memref<256x128xf32, #tpu.memory_space<vmem>>, vector<256x128xf32>
    %c0_2 = arith.constant 0 : index
    %c0_3 = arith.constant 0 : index
    %4 = vector.load %arg3[%c0_2, %c0_3] : memref<256x256xbf16, #tpu.memory_space<vmem>>, vector<256x256xbf16>
    %c0_4 = arith.constant 0 : index
    %c0_5 = arith.constant 0 : index
    %5 = vector.load %arg4[%c0_4, %c0_5] : memref<256x128xbf16, #tpu.memory_space<vmem>>, vector<256x128xbf16>
    %cst = arith.constant dense<0.000000e+00> : vector<256x128xf32>
    %6 = tpu.matmul %4, %5, %cst {dimension_numbers = #tpu.dot_dimension_numbers<[1], [0], [0], [1], [0, 0, 1, 1], [], []>} : vector<256x256xbf16>, vector<256x128xbf16>, vector<256x128xf32> -> vector<256x128xf32>
    %7 = arith.addf %3, %6 : vector<256x128xf32>
    %c0_6 = arith.constant 0 : index
    %c0_7 = arith.constant 0 : index
    %8 = vector.load %arg8[%c0_6, %c0_7] : memref<256x128xf32, #tpu.memory_space<vmem>>, vector<256x128xf32>
    tpu.vector_store %arg8[%c0_6, %c0_7], %7 {strides = array<i32>} : memref<256x128xf32, #tpu.memory_space<vmem>>, vector<256x128xf32>,
    %c0_i32_8 = arith.constant 0 : i32
    %9 = arith.cmpi eq, %arg2, %c0_i32_8 : i32
    %10 = arith.extui %9 : i1 to i32
    %c0_i32_9 = arith.constant 0 : i32
    %11 = arith.cmpi ne, %10, %c0_i32_9 : i32
    scf.if %11 {
      %c0_10 = arith.constant 0 : index
      %c0_11 = arith.constant 0 : index
      %12 = vector.load %arg8[%c0_10, %c0_11] : memref<256x128xf32, #tpu.memory_space<vmem>>, vector<256x128xf32>
      %13 = arith.truncf %12 : vector<256x128xf32> to vector<256x128xbf16>
      %c0_12 = arith.constant 0 : index
      %c0_13 = arith.constant 0 : index
      %14 = vector.load %arg5[%c0_12, %c0_13] : memref<256x128xbf16, #tpu.memory_space<vmem>>, vector<256x128xbf16>
      tpu.vector_store %arg5[%c0_12, %c0_13], %13 {strides = array<i32>} : memref<256x128xbf16, #tpu.memory_space<vmem>>, vector<256x128xbf16>,
      %cst_14 = arith.constant dense<0.000000e+00> : vector<128xf32>
      %15 = vector.multi_reduction <add>, %12, %cst_14 [0] : vector<256x128xf32> to vector<128xf32>
      %16 = vector.shape_cast %15 : vector<128xf32> to vector<1x128xf32>
      %17 = vector.shape_cast %16 : vector<1x128xf32> to vector<1x128xf32>
      %18 = vector.broadcast %17 : vector<1x128xf32> to vector<8x128xf32>
      %c0_15 = arith.constant 0 : index
      %c0_16 = arith.constant 0 : index
      %19 = vector.load %arg6[%c0_15, %c0_16] : memref<8x128xf32, #tpu.memory_space<vmem>>, vector<8x128xf32>
      tpu.vector_store %arg6[%c0_15, %c0_16], %18 {strides = array<i32>} : memref<8x128xf32, #tpu.memory_space<vmem>>, vector<8x128xf32>,
      %20 = arith.mulf %12, %12 : vector<256x128xf32>
      %cst_17 = arith.constant dense<0.000000e+00> : vector<128xf32>
      %21 = vector.multi_reduction <add>, %20, %cst_17 [0] : vector<256x128xf32> to vector<128xf32>
      %22 = vector.shape_cast %21 : vector<128xf32> to vector<1x128xf32>
      %23 = vector.shape_cast %22 : vector<1x128xf32> to vector<1x128xf32>
      %24 = vector.broadcast %23 : vector<1x128xf32> to vector<8x128xf32>
      %c0_18 = arith.constant 0 : index
      %c0_19 = arith.constant 0 : index
      %25 = vector.load %arg7[%c0_18, %c0_19] : memref<8x128xf32, #tpu.memory_space<vmem>>, vector<8x128xf32>
      tpu.vector_store %arg7[%c0_18, %c0_19], %24 {strides = array<i32>} : memref<8x128xf32, #tpu.memory_space<vmem>>, vector<8x128xf32>,
    } else {
    }
    return
  }
  func.func @transform_0(%arg0: i32, %arg1: i32, %arg2: i32) -> (i32, i32) {
    %c0_i32 = arith.constant 0 : i32
    return %arg0, %arg2 : i32, i32
  }
  func.func @transform_1(%arg0: i32, %arg1: i32, %arg2: i32) -> (i32, i32) {
    %c0_i32 = arith.constant 0 : i32
    return %arg2, %arg1 : i32, i32
  }
  func.func @transform_2(%arg0: i32, %arg1: i32, %arg2: i32) -> (i32, i32) {
    %c0_i32 = arith.constant 0 : i32
    return %arg0, %arg1 : i32, i32
  }
  func.func @transform_3(%arg0: i32, %arg1: i32, %arg2: i32) -> (i32, i32) {
    %c0_i32 = arith.constant 0 : i32
    return %arg0, %arg1 : i32, i32
  }
  func.func @transform_4(%arg0: i32, %arg1: i32, %arg2: i32) -> (i32, i32) {
    %c0_i32 = arith.constant 0 : i32
    return %arg0, %arg1 : i32, i32
  }
}

module attributes {stable_mosaic.version = 11 : i64} {
  func.func @_mm_bnstats_kernel(%arg0: i32, %arg1: i32, %arg2: i32, %arg3: memref<256x128xbf16, #tpu.memory_space<vmem>>, %arg4: memref<128x128xbf16, #tpu.memory_space<vmem>>, %arg5: memref<256x128xbf16, #tpu.memory_space<vmem>>, %arg6: memref<8x128xf32, #tpu.memory_space<vmem>>, %arg7: memref<8x128xf32, #tpu.memory_space<vmem>>, %arg8: memref<256x128xf32, #tpu.memory_space<vmem>>) attributes {dimension_semantics = [#tpu.dimension_semantics<parallel>, #tpu.dimension_semantics<parallel>, #tpu.dimension_semantics<arbitrary>], iteration_bounds = array<i64: 2, 1, 1>, scalar_prefetch = 0 : i64, scratch_operands = 1 : i64, tpu.core_type = #tpu.core_type<tc>, window_params = [{transform_indices = @transform_0, window_bounds = array<i64: 256, 128>}, {transform_indices = @transform_1, window_bounds = array<i64: 128, 128>}, {transform_indices = @transform_2, window_bounds = array<i64: 256, 128>}, {transform_indices = @transform_3, window_bounds = array<i64: 8, 128>}, {transform_indices = @transform_4, window_bounds = array<i64: 8, 128>}]} {
    %c0_i32 = arith.constant 0 : i32
    %0 = arith.cmpi eq, %arg2, %c0_i32 : i32
    %1 = arith.extui %0 : i1 to i32
    %c0_i32_0 = arith.constant 0 : i32
    %2 = arith.cmpi ne, %1, %c0_i32_0 : i32
    scf.if %2 {
      %cst_10 = arith.constant 0.000000e+00 : f32
      %12 = vector.broadcast %cst_10 : f32 to vector<256x128xf32>
      %c0_11 = arith.constant 0 : index
      %c0_12 = arith.constant 0 : index
      %13 = vector.load %arg8[%c0_11, %c0_12] : memref<256x128xf32, #tpu.memory_space<vmem>>, vector<256x128xf32>
      tpu.vector_store %arg8[%c0_11, %c0_12], %12 {strides = array<i32>} : memref<256x128xf32, #tpu.memory_space<vmem>>, vector<256x128xf32>,
    } else {
    }
    %c0 = arith.constant 0 : index
    %c0_1 = arith.constant 0 : index
    %3 = vector.load %arg8[%c0, %c0_1] : memref<256x128xf32, #tpu.memory_space<vmem>>, vector<256x128xf32>
    %c0_2 = arith.constant 0 : index
    %c0_3 = arith.constant 0 : index
    %4 = vector.load %arg3[%c0_2, %c0_3] : memref<256x128xbf16, #tpu.memory_space<vmem>>, vector<256x128xbf16>
    %c0_4 = arith.constant 0 : index
    %c0_5 = arith.constant 0 : index
    %5 = vector.load %arg4[%c0_4, %c0_5] : memref<128x128xbf16, #tpu.memory_space<vmem>>, vector<128x128xbf16>
    %cst = arith.constant dense<0.000000e+00> : vector<256x128xf32>
    %6 = tpu.matmul %4, %5, %cst {dimension_numbers = #tpu.dot_dimension_numbers<[1], [0], [0], [1], [0, 0, 1, 1], [], []>} : vector<256x128xbf16>, vector<128x128xbf16>, vector<256x128xf32> -> vector<256x128xf32>
    %7 = arith.addf %3, %6 : vector<256x128xf32>
    %c0_6 = arith.constant 0 : index
    %c0_7 = arith.constant 0 : index
    %8 = vector.load %arg8[%c0_6, %c0_7] : memref<256x128xf32, #tpu.memory_space<vmem>>, vector<256x128xf32>
    tpu.vector_store %arg8[%c0_6, %c0_7], %7 {strides = array<i32>} : memref<256x128xf32, #tpu.memory_space<vmem>>, vector<256x128xf32>,
    %c0_i32_8 = arith.constant 0 : i32
    %9 = arith.cmpi eq, %arg2, %c0_i32_8 : i32
    %10 = arith.extui %9 : i1 to i32
    %c0_i32_9 = arith.constant 0 : i32
    %11 = arith.cmpi ne, %10, %c0_i32_9 : i32
    scf.if %11 {
      %c0_10 = arith.constant 0 : index
      %c0_11 = arith.constant 0 : index
      %12 = vector.load %arg8[%c0_10, %c0_11] : memref<256x128xf32, #tpu.memory_space<vmem>>, vector<256x128xf32>
      %13 = arith.truncf %12 : vector<256x128xf32> to vector<256x128xbf16>
      %c0_12 = arith.constant 0 : index
      %c0_13 = arith.constant 0 : index
      %14 = vector.load %arg5[%c0_12, %c0_13] : memref<256x128xbf16, #tpu.memory_space<vmem>>, vector<256x128xbf16>
      tpu.vector_store %arg5[%c0_12, %c0_13], %13 {strides = array<i32>} : memref<256x128xbf16, #tpu.memory_space<vmem>>, vector<256x128xbf16>,
      %cst_14 = arith.constant dense<0.000000e+00> : vector<128xf32>
      %15 = vector.multi_reduction <add>, %12, %cst_14 [0] : vector<256x128xf32> to vector<128xf32>
      %16 = vector.shape_cast %15 : vector<128xf32> to vector<1x128xf32>
      %17 = vector.shape_cast %16 : vector<1x128xf32> to vector<1x128xf32>
      %18 = vector.broadcast %17 : vector<1x128xf32> to vector<8x128xf32>
      %c0_15 = arith.constant 0 : index
      %c0_16 = arith.constant 0 : index
      %19 = vector.load %arg6[%c0_15, %c0_16] : memref<8x128xf32, #tpu.memory_space<vmem>>, vector<8x128xf32>
      tpu.vector_store %arg6[%c0_15, %c0_16], %18 {strides = array<i32>} : memref<8x128xf32, #tpu.memory_space<vmem>>, vector<8x128xf32>,
      %20 = arith.mulf %12, %12 : vector<256x128xf32>
      %cst_17 = arith.constant dense<0.000000e+00> : vector<128xf32>
      %21 = vector.multi_reduction <add>, %20, %cst_17 [0] : vector<256x128xf32> to vector<128xf32>
      %22 = vector.shape_cast %21 : vector<128xf32> to vector<1x128xf32>
      %23 = vector.shape_cast %22 : vector<1x128xf32> to vector<1x128xf32>
      %24 = vector.broadcast %23 : vector<1x128xf32> to vector<8x128xf32>
      %c0_18 = arith.constant 0 : index
      %c0_19 = arith.constant 0 : index
      %25 = vector.load %arg7[%c0_18, %c0_19] : memref<8x128xf32, #tpu.memory_space<vmem>>, vector<8x128xf32>
      tpu.vector_store %arg7[%c0_18, %c0_19], %24 {strides = array<i32>} : memref<8x128xf32, #tpu.memory_space<vmem>>, vector<8x128xf32>,
    } else {
    }
    return
  }
  func.func @transform_0(%arg0: i32, %arg1: i32, %arg2: i32) -> (i32, i32) {
    %c0_i32 = arith.constant 0 : i32
    return %arg0, %arg2 : i32, i32
  }
  func.func @transform_1(%arg0: i32, %arg1: i32, %arg2: i32) -> (i32, i32) {
    %c0_i32 = arith.constant 0 : i32
    return %arg2, %arg1 : i32, i32
  }
  func.func @transform_2(%arg0: i32, %arg1: i32, %arg2: i32) -> (i32, i32) {
    %c0_i32 = arith.constant 0 : i32
    return %arg0, %arg1 : i32, i32
  }
  func.func @transform_3(%arg0: i32, %arg1: i32, %arg2: i32) -> (i32, i32) {
    %c0_i32 = arith.constant 0 : i32
    return %arg0, %arg1 : i32, i32
  }
  func.func @transform_4(%arg0: i32, %arg1: i32, %arg2: i32) -> (i32, i32) {
    %c0_i32 = arith.constant 0 : i32
    return %arg0, %arg1 : i32, i32
  }
}

module attributes {stable_mosaic.version = 11 : i64} {
  func.func @_bn_add_relu_kernel(%arg0: i32, %arg1: memref<256x128xbf16, #tpu.memory_space<vmem>>, %arg2: memref<1x128xf32, #tpu.memory_space<vmem>>, %arg3: memref<1x128xf32, #tpu.memory_space<vmem>>, %arg4: memref<256x128xbf16, #tpu.memory_space<vmem>>, %arg5: memref<256x128xbf16, #tpu.memory_space<vmem>>) attributes {dimension_semantics = [#tpu.dimension_semantics<parallel>], iteration_bounds = array<i64: 2>, scalar_prefetch = 0 : i64, scratch_operands = 0 : i64, tpu.core_type = #tpu.core_type<tc>, window_params = [{transform_indices = @transform_0, window_bounds = array<i64: 256, 128>}, {pipeline_mode = #tpu.pipeline_mode<synchronous>, transform_indices = @transform_1, window_bounds = array<i64: 1, 128>}, {pipeline_mode = #tpu.pipeline_mode<synchronous>, transform_indices = @transform_2, window_bounds = array<i64: 1, 128>}, {transform_indices = @transform_3, window_bounds = array<i64: 256, 128>}, {transform_indices = @transform_4, window_bounds = array<i64: 256, 128>}]} {
    %c0 = arith.constant 0 : index
    %c0_0 = arith.constant 0 : index
    %0 = vector.load %arg1[%c0, %c0_0] : memref<256x128xbf16, #tpu.memory_space<vmem>>, vector<256x128xbf16>
    %1 = arith.extf %0 : vector<256x128xbf16> to vector<256x128xf32>
    %c0_1 = arith.constant 0 : index
    %c0_2 = arith.constant 0 : index
    %2 = vector.load %arg2[%c0_1, %c0_2] : memref<1x128xf32, #tpu.memory_space<vmem>>, vector<1x128xf32>
    %3 = vector.broadcast %2 : vector<1x128xf32> to vector<256x128xf32>
    %4 = arith.mulf %1, %3 : vector<256x128xf32>
    %c0_3 = arith.constant 0 : index
    %c0_4 = arith.constant 0 : index
    %5 = vector.load %arg3[%c0_3, %c0_4] : memref<1x128xf32, #tpu.memory_space<vmem>>, vector<1x128xf32>
    %6 = vector.broadcast %5 : vector<1x128xf32> to vector<256x128xf32>
    %7 = arith.addf %4, %6 : vector<256x128xf32>
    %c0_5 = arith.constant 0 : index
    %c0_6 = arith.constant 0 : index
    %8 = vector.load %arg4[%c0_5, %c0_6] : memref<256x128xbf16, #tpu.memory_space<vmem>>, vector<256x128xbf16>
    %9 = arith.extf %8 : vector<256x128xbf16> to vector<256x128xf32>
    %10 = arith.addf %7, %9 : vector<256x128xf32>
    %cst = arith.constant 0.000000e+00 : f32
    %11 = vector.broadcast %cst : f32 to vector<256x128xf32>
    %12 = arith.maximumf %10, %11 : vector<256x128xf32>
    %13 = arith.truncf %12 : vector<256x128xf32> to vector<256x128xbf16>
    %c0_7 = arith.constant 0 : index
    %c0_8 = arith.constant 0 : index
    %14 = vector.load %arg5[%c0_7, %c0_8] : memref<256x128xbf16, #tpu.memory_space<vmem>>, vector<256x128xbf16>
    tpu.vector_store %arg5[%c0_7, %c0_8], %13 {strides = array<i32>} : memref<256x128xbf16, #tpu.memory_space<vmem>>, vector<256x128xbf16>,
    return
  }
  func.func @transform_0(%arg0: i32) -> (i32, i32) {
    %c0_i32 = arith.constant 0 : i32
    %c0_i32_0 = arith.constant 0 : i32
    return %arg0, %c0_i32 : i32, i32
  }
  func.func @transform_1(%arg0: i32) -> (i32, i32) {
    %c0_i32 = arith.constant 0 : i32
    %c0_i32_0 = arith.constant 0 : i32
    %c0_i32_1 = arith.constant 0 : i32
    return %c0_i32, %c0_i32_0 : i32, i32
  }
  func.func @transform_2(%arg0: i32) -> (i32, i32) {
    %c0_i32 = arith.constant 0 : i32
    %c0_i32_0 = arith.constant 0 : i32
    %c0_i32_1 = arith.constant 0 : i32
    return %c0_i32, %c0_i32_0 : i32, i32
  }
  func.func @transform_3(%arg0: i32) -> (i32, i32) {
    %c0_i32 = arith.constant 0 : i32
    %c0_i32_0 = arith.constant 0 : i32
    return %arg0, %c0_i32 : i32, i32
  }
  func.func @transform_4(%arg0: i32) -> (i32, i32) {
    %c0_i32 = arith.constant 0 : i32
    %c0_i32_0 = arith.constant 0 : i32
    return %arg0, %c0_i32 : i32, i32
  }
}

</mosaic_0001>

<llo_original>
// kernel: bottleneck_forward.7
$region0: #{bottleneck_forward.7}
  #allocation0 [shape = 'u32[]', space=smem, size = 0x4, offset = 0x4, fixed_abs, tag = 'smem constant byte address 0x4 - core index']
  #allocation1 [shape = 'u32[144,128]{1,0:T(1,128)}', space=vmem, size = 0x12000, scoped, tag = 'internal scratch']
  %s0 = inlined_call_operand.vmem [shape: bf16[512,128], index: 0, kind: input, shape index: {}]
  %s1 = inlined_call_operand.vmem [shape: f32[1,128], index: 1, kind: input, shape index: {}]
  %s2 = inlined_call_operand.vmem [shape: f32[1,128], index: 2, kind: input, shape index: {}]
  %s3 = inlined_call_operand.vmem [shape: bf16[512,128], index: 3, kind: output, shape index: {}]
  %s4 = sld [smem:[#allocation0]]
  $region45: #{bottleneck_forward.7} parent=0
    _
  %s6 = ssub.s32 1, %s4
  %s7 = scalar_select 0, %s6, %s4
  loop: start=0, step=1, limit=4
  $region2: #{bottleneck_forward.7} parent=0 // loop_pre_header
    _
  $region3: #{bottleneck_forward.7} parent=0 // loop_header
    %s9 = sphi 0, %s13
    %p10 = scmp.ge.s32.totalorder %s9, 4
    %s19 = sphi 0, %s21
    %s22 = sphi 0, %s19
    %s23 = sphi 0, %s22
    %s39 = sphi 0, %s23
    %s43 = sphi 0, %s43
    %s45 = sphi 0, %s43
    %s46 = sphi 0, %s45
    %s60 = sphi 0, %s46
    %s64 = sphi 0, %s64
    %s66 = sphi 0, %s64
    %s67 = sphi 0, %s66
    %s81 = sphi 0, %s67
    %s87 = sphi 0, %s89
    %s90 = sphi 0, %s87
    %s91 = sphi 0, %s90
    %s107 = sphi 0, %s91
  $region4: #{bottleneck_forward.7} parent=0 // loop_header_branch
    %12 = sbr.rel (%p10) target = $region8
  $region5: #{bottleneck_forward.7} parent=0 // loop_body
    %s14 = ssub.s32 %s9, 1
    %s15 = ssub.s32 %s9, 2
    %s16 = sadd.s32 %s9, 1
    %s17 = ssub.s32 %s9, %s16
    %p18 = scmp.eq.s32.totalorder %s17, 0
    %s20 = sadd.s32 %s19, 1
    %s21 = scalar_select %p18, %s19, %s20
    %p24 = pneg %p18
    %p25 = scmp.eq.s32.totalorder %s9, 1
    %p26 = por %p24, %p25
    %p27 = scmp.ne.s32.totalorder %s19, %s22
    %p28 = scmp.eq.s32.totalorder %s9, 0
    %p29 = por %p27, %p28
    %p30 = scmp.ne.s32.totalorder %s19, %s22
    %p31 = scmp.eq.s32.totalorder %s14, 1
    %p32 = por %p30, %p31
    %p33 = scmp.ne.s32.totalorder %s22, %s23
    %p34 = scmp.eq.s32.totalorder %s14, 0
    %p35 = por %p33, %p34
    %p36 = scmp.ne.s32.totalorder %s22, %s23
    %p37 = scmp.eq.s32.totalorder %s15, 1
    %p38 = por %p36, %p37
    %p40 = scmp.ne.s32.totalorder %s23, %s39
    %p41 = scmp.eq.s32.totalorder %s15, 0
    %p42 = por %p40, %p41
    %s44 = sadd.s32 %s43, 1
    %p47 = scmp.eq.s32.totalorder %s9, 1
    %p48 = scmp.ne.s32.totalorder %s43, %s45
    %p49 = scmp.eq.s32.totalorder %s9, 0
    %p50 = por %p48, %p49
    %p51 = scmp.ne.s32.totalorder %s43, %s45
    %p52 = scmp.eq.s32.totalorder %s14, 1
    %p53 = por %p51, %p52
    %p54 = scmp.ne.s32.totalorder %s45, %s46
    %p55 = scmp.eq.s32.totalorder %s14, 0
    %p56 = por %p54, %p55
    %p57 = scmp.ne.s32.totalorder %s45, %s46
    %p58 = scmp.eq.s32.totalorder %s15, 1
    %p59 = por %p57, %p58
    %p61 = scmp.ne.s32.totalorder %s46, %s60
    %p62 = scmp.eq.s32.totalorder %s15, 0
    %p63 = por %p61, %p62
    %s65 = sadd.s32 %s64, 1
    %p68 = scmp.eq.s32.totalorder %s9, 1
    %p69 = scmp.ne.s32.totalorder %s64, %s66
    %p70 = scmp.eq.s32.totalorder %s9, 0
    %p71 = por %p69, %p70
    %p72 = scmp.ne.s32.totalorder %s64, %s66
    %p73 = scmp.eq.s32.totalorder %s14, 1
    %p74 = por %p72, %p73
    %p75 = scmp.ne.s32.totalorder %s66, %s67
    %p76 = scmp.eq.s32.totalorder %s14, 0
    %p77 = por %p75, %p76
    %p78 = scmp.ne.s32.totalorder %s66, %s67
    %p79 = scmp.eq.s32.totalorder %s15, 1
    %p80 = por %p78, %p79
    %p82 = scmp.ne.s32.totalorder %s67, %s81
    %p83 = scmp.eq.s32.totalorder %s15, 0
    %p84 = por %p82, %p83
    %s85 = ssub.s32 %s9, %s16
    %p86 = scmp.eq.s32.totalorder %s85, 0
    %s88 = sadd.s32 %s87, 1
    %s89 = scalar_select %p86, %s87, %s88
    %p92 = pneg %p86
    %p93 = scmp.eq.s32.totalorder %s9, 1
    %p94 = por %p92, %p93
    %p95 = scmp.ne.s32.totalorder %s87, %s90
    %p96 = scmp.eq.s32.totalorder %s9, 0
    %p97 = por %p95, %p96
    %p98 = scmp.ne.s32.totalorder %s87, %s90
    %p99 = scmp.eq.s32.totalorder %s14, 1
    %p100 = por %p98, %p99
    %p101 = scmp.ne.s32.totalorder %s90, %s91
    %p102 = scmp.eq.s32.totalorder %s14, 0
    %p103 = por %p101, %p102
    %p104 = scmp.ne.s32.totalorder %s90, %s91
    %p105 = scmp.eq.s32.totalorder %s15, 1
    %p106 = por %p104, %p105
    %p108 = scmp.ne.s32.totalorder %s91, %s107
    %p109 = scmp.eq.s32.totalorder %s15, 0
    %p110 = por %p108, %p109
    %p111 = scmp.le.s32.totalorder 1, %s9
    %p112 = scmp.lt.s32.totalorder %s9, 3
    %p113 = pnand %p111, %p112
    %p114 = pneg %p113
    // Predicated region
    $region9: #{bottleneck_forward.7} parent=5 // pred_check
      _
    $region10: #{bottleneck_forward.7} parent=5 // pred_check_branch
      %116 = sbr.rel (%p113) target = $region12
    $region11: #{bottleneck_forward.7} parent=5 // pred_region
      %s117 = ssub.s32 %s9, 1
      // Predicated region
      $region13: #{bottleneck_forward.7} parent=11 // pred_check
        %p118 = pneg %p56
      $region14: #{bottleneck_forward.7} parent=11 // pred_check_branch
        %120 = sbr.rel (%p118) target = $region16
      $region15: #{bottleneck_forward.7} parent=11 // pred_region
        _
      $region16: #{bottleneck_forward.7} parent=11 // pred_fallthru
        _
      // Predicated region
      $region17: #{bottleneck_forward.7} parent=11 // pred_check
        %p121 = pneg %p77
      $region18: #{bottleneck_forward.7} parent=11 // pred_check_branch
        %123 = sbr.rel (%p121) target = $region20
      $region19: #{bottleneck_forward.7} parent=11 // pred_region
        _
      $region20: #{bottleneck_forward.7} parent=11 // pred_fallthru
        _
    $region12: #{bottleneck_forward.7} parent=5 // pred_fallthru
      _
    %p124 = scmp.lt.s32.totalorder %s9, 2
    // Predicated region
    $region21: #{bottleneck_forward.7} parent=5 // pred_check
      %p125 = pneg %p124
    $region22: #{bottleneck_forward.7} parent=5 // pred_check_branch
      %127 = sbr.rel (%p125) target = $region24
    $region23: #{bottleneck_forward.7} parent=5 // pred_region
      // Predicated region
      $region25: #{bottleneck_forward.7} parent=23 // pred_check
        %p128 = pneg %p29
      $region26: #{bottleneck_forward.7} parent=23 // pred_check_branch
        %130 = sbr.rel (%p128) target = $region28
      $region27: #{bottleneck_forward.7} parent=23 // pred_region
        %s131 = smul.u32 32, %s9
        %p132 = scmp.lt.s32.totalorder %s131, 63
        %s133 = scalar_select %p132, %s131, 63
        %s134 = smul.addr %s133, 4
        %s135 = scalar_lea.vmem %s0, %s134
        %s136 = smul.u32 32, %s9
      $region28: #{bottleneck_forward.7} parent=23 // pred_fallthru
        _
    $region24: #{bottleneck_forward.7} parent=5 // pred_fallthru
      _
    %p137 = scmp.le.s32.totalorder 1, %s9
    %p138 = scmp.lt.s32.totalorder %s9, 3
    %p139 = pnand %p137, %p138
    %p140 = pneg %p139
    // Predicated region
    $region29: #{bottleneck_forward.7} parent=5 // pred_check
      _
    $region30: #{bottleneck_forward.7} parent=5 // pred_check_branch
      %142 = sbr.rel (%p139) target = $region32
    $region31: #{bottleneck_forward.7} parent=5 // pred_region
      %s143 = ssub.s32 %s9, 1
      %s144 = smul.u32 32, %s14
      %p145 = scmp.lt.s32.totalorder %s144, 63
      %s146 = scalar_select %p145, %s144, 63
      %s147 = smul.addr %s146, 4
      %s148 = scalar_lea.vmem %s0, %s147
      %p149 = pneg %p35
      %p150 = pneg %p32
      %p151 = pneg %p56
      %p152 = pneg %p53
      %p153 = pneg %p77
      %p154 = pneg %p74
      %p155 = pneg %p103
      %p156 = pneg %p100
      %s157 = smul.u32 32, %s14
      %p158 = scmp.lt.s32.totalorder %s157, 63
      %s159 = scalar_select %p158, %s157, 63
      %s160 = smul.addr %s159, 4
      %s161 = scalar_lea.vmem %s3, %s160
      %s162 = smul.u32 32, %s14
      %p163 = scmp.lt.s32.totalorder %s162, 63
      %s164 = scalar_select %p163, %s162, 63
      %s165 = smul.addr %s164, 4
      %s166 = scalar_lea.vmem %s0, %s165
      %s167 = smul.u32 32, %s14
      %s168 = smul.u32 32, %s14
      %p169 = scmp.lt.s32.totalorder %s168, 63
      %s170 = scalar_select %p169, %s168, 63
      %s171 = smul.addr %s170, 4
      %s172 = scalar_lea.vmem %s3, %s171
      %s173 = smul.u32 32, %s14
      %v174 = vld [vmem:[%s166] sm:$0xf]
      %v175 = vld [vmem:[%s166 + $0x4] sm:$0xf]
      %v176 = vld [vmem:[%s166 + $0x8] sm:$0xf]
      %v177 = vld [vmem:[%s166 + $0xc] sm:$0xf]
      %v178 = vld [vmem:[%s166 + $0x10] sm:$0xf]
      %v179 = vld [vmem:[%s166 + $0x14] sm:$0xf]
      %v180 = vld [vmem:[%s166 + $0x18] sm:$0xf]
      %v181 = vld [vmem:[%s166 + $0x1c] sm:$0xf]
      %v182 = vld [vmem:[%s166 + $0x20] sm:$0xf]
      %v183 = vld [vmem:[%s166 + $0x24] sm:$0xf]
      %v184 = vld [vmem:[%s166 + $0x28] sm:$0xf]
      %v185 = vld [vmem:[%s166 + $0x2c] sm:$0xf]
      %v186 = vld [vmem:[%s166 + $0x30] sm:$0xf]
      %v187 = vld [vmem:[%s166 + $0x34] sm:$0xf]
      %v188 = vld [vmem:[%s166 + $0x38] sm:$0xf]
      %v189 = vld [vmem:[%s166 + $0x3c] sm:$0xf]
      %v190 = vld [vmem:[%s166 + $0x40] sm:$0xf]
      %v191 = vld [vmem:[%s166 + $0x44] sm:$0xf]
      %v192 = vld [vmem:[%s166 + $0x48] sm:$0xf]
      %v193 = vld [vmem:[%s166 + $0x4c] sm:$0xf]
      %v194 = vld [vmem:[%s166 + $0x50] sm:$0xf]
      %v195 = vld [vmem:[%s166 + $0x54] sm:$0xf]
      %v196 = vld [vmem:[%s166 + $0x58] sm:$0xf]
      %v197 = vld [vmem:[%s166 + $0x5c] sm:$0xf]
      %v198 = vld [vmem:[%s166 + $0x60] sm:$0xf]
      %v199 = vld [vmem:[%s166 + $0x64] sm:$0xf]
      %v200 = vld [vmem:[%s166 + $0x68] sm:$0xf]
      %v201 = vld [vmem:[%s166 + $0x6c] sm:$0xf]
      %v202 = vld [vmem:[%s166 + $0x70] sm:$0xf]
      %v203 = vld [vmem:[%s166 + $0x74] sm:$0xf]
      %v204 = vld [vmem:[%s166 + $0x78] sm:$0xf]
      %v205 = vld [vmem:[%s166 + $0x7c] sm:$0xf]
      %v206 = vunpack.c.l.bf16 %v174
      %v207 = vunpack.c.l.bf16 %v175
      %v208 = vunpack.c.l.bf16 %v176
      %v209 = vunpack.c.l.bf16 %v177
      %v210 = vunpack.c.l.bf16 %v178
      %v211 = vunpack.c.l.bf16 %v179
      %v212 = vunpack.c.l.bf16 %v180
      %v213 = vunpack.c.l.bf16 %v181
      %v214 = vunpack.c.l.bf16 %v182
      %v215 = vunpack.c.l.bf16 %v183
      %v216 = vunpack.c.l.bf16 %v184
      %v217 = vunpack.c.l.bf16 %v185
      %v218 = vunpack.c.l.bf16 %v186
      %v219 = vunpack.c.l.bf16 %v187
      %v220 = vunpack.c.l.bf16 %v188
      %v221 = vunpack.c.l.bf16 %v189
      %v222 = vunpack.c.l.bf16 %v190
      %v223 = vunpack.c.l.bf16 %v191
      %v224 = vunpack.c.l.bf16 %v192
      %v225 = vunpack.c.l.bf16 %v193
      %v226 = vunpack.c.l.bf16 %v194
      %v227 = vunpack.c.l.bf16 %v195
      %v228 = vunpack.c.l.bf16 %v196
      %v229 = vunpack.c.l.bf16 %v197
      %v230 = vunpack.c.l.bf16 %v198
      %v231 = vunpack.c.l.bf16 %v199
      %v232 = vunpack.c.l.bf16 %v200
      %v233 = vunpack.c.l.bf16 %v201
      %v234 = vunpack.c.l.bf16 %v202
      %v235 = vunpack.c.l.bf16 %v203
      %v236 = vunpack.c.l.bf16 %v204
      %v237 = vunpack.c.l.bf16 %v205
      %v238 = vld [vmem:[%s1] sm:$0x1]
      %v240 = vlaneseq
      %v241 = vshrl.u32 %v240, 7
      %v242 = vsub.s32 0, %v241
      %v243 = vrot.slane %v238, %v242
      %v245 = vmul.f32 %v206, %v243
      %v246 = vmul.f32 %v207, %v243
      %v247 = vmul.f32 %v208, %v243
      %v248 = vmul.f32 %v209, %v243
      %v249 = vmul.f32 %v210, %v243
      %v250 = vmul.f32 %v211, %v243
      %v251 = vmul.f32 %v212, %v243
      %v252 = vmul.f32 %v213, %v243
      %v253 = vmul.f32 %v214, %v243
      %v254 = vmul.f32 %v215, %v243
      %v255 = vmul.f32 %v216, %v243
      %v256 = vmul.f32 %v217, %v243
      %v257 = vmul.f32 %v218, %v243
      %v258 = vmul.f32 %v219, %v243
      %v259 = vmul.f32 %v220, %v243
      %v260 = vmul.f32 %v221, %v243
      %v261 = vmul.f32 %v222, %v243
      %v262 = vmul.f32 %v223, %v243
      %v263 = vmul.f32 %v224, %v243
      %v264 = vmul.f32 %v225, %v243
      %v265 = vmul.f32 %v226, %v243
      %v266 = vmul.f32 %v227, %v243
      %v267 = vmul.f32 %v228, %v243
      %v268 = vmul.f32 %v229, %v243
      %v269 = vmul.f32 %v230, %v243
      %v270 = vmul.f32 %v231, %v243
      %v271 = vmul.f32 %v232, %v243
      %v272 = vmul.f32 %v233, %v243
      %v273 = vmul.f32 %v234, %v243
      %v274 = vmul.f32 %v235, %v243
      %v275 = vmul.f32 %v236, %v243
      %v276 = vmul.f32 %v237, %v243
      %v277 = vld [vmem:[%s2] sm:$0x1]
      %v279 = vlaneseq
      %v280 = vshrl.u32 %v279, 7
      %v281 = vsub.s32 0, %v280
      %v282 = vrot.slane %v277, %v281
      %v284 = vadd.f32 %v245, %v282
      %v285 = vadd.f32 %v246, %v282
      %v286 = vadd.f32 %v247, %v282
      %v287 = vadd.f32 %v248, %v282
      %v288 = vadd.f32 %v249, %v282
      %v289 = vadd.f32 %v250, %v282
      %v290 = vadd.f32 %v251, %v282
      %v291 = vadd.f32 %v252, %v282
      %v292 = vadd.f32 %v253, %v282
      %v293 = vadd.f32 %v254, %v282
      %v294 = vadd.f32 %v255, %v282
      %v295 = vadd.f32 %v256, %v282
      %v296 = vadd.f32 %v257, %v282
      %v297 = vadd.f32 %v258, %v282
      %v298 = vadd.f32 %v259, %v282
      %v299 = vadd.f32 %v260, %v282
      %v300 = vadd.f32 %v261, %v282
      %v301 = vadd.f32 %v262, %v282
      %v302 = vadd.f32 %v263, %v282
      %v303 = vadd.f32 %v264, %v282
      %v304 = vadd.f32 %v265, %v282
      %v305 = vadd.f32 %v266, %v282
      %v306 = vadd.f32 %v267, %v282
      %v307 = vadd.f32 %v268, %v282
      %v308 = vadd.f32 %v269, %v282
      %v309 = vadd.f32 %v270, %v282
      %v310 = vadd.f32 %v271, %v282
      %v311 = vadd.f32 %v272, %v282
      %v312 = vadd.f32 %v273, %v282
      %v313 = vadd.f32 %v274, %v282
      %v314 = vadd.f32 %v275, %v282
      %v315 = vadd.f32 %v276, %v282
      %v316 = vmax.f32 %v284, 0.0
      %v317 = vmax.f32 %v285, 0.0
      %v318 = vmax.f32 %v286, 0.0
      %v319 = vmax.f32 %v287, 0.0
      %v320 = vmax.f32 %v288, 0.0
      %v321 = vmax.f32 %v289, 0.0
      %v322 = vmax.f32 %v290, 0.0
      %v323 = vmax.f32 %v291, 0.0
      %v324 = vmax.f32 %v292, 0.0
      %v325 = vmax.f32 %v293, 0.0
      %v326 = vmax.f32 %v294, 0.0
      %v327 = vmax.f32 %v295, 0.0
      %v328 = vmax.f32 %v296, 0.0
      %v329 = vmax.f32 %v297, 0.0
      %v330 = vmax.f32 %v298, 0.0
      %v331 = vmax.f32 %v299, 0.0
      %v332 = vmax.f32 %v300, 0.0
      %v333 = vmax.f32 %v301, 0.0
      %v334 = vmax.f32 %v302, 0.0
      %v335 = vmax.f32 %v303, 0.0
      %v336 = vmax.f32 %v304, 0.0
      %v337 = vmax.f32 %v305, 0.0
      %v338 = vmax.f32 %v306, 0.0
      %v339 = vmax.f32 %v307, 0.0
      %v340 = vmax.f32 %v308, 0.0
      %v341 = vmax.f32 %v309, 0.0
      %v342 = vmax.f32 %v310, 0.0
      %v343 = vmax.f32 %v311, 0.0
      %v344 = vmax.f32 %v312, 0.0
      %v345 = vmax.f32 %v313, 0.0
      %v346 = vmax.f32 %v314, 0.0
      %v347 = vmax.f32 %v315, 0.0
      %v348 = vpack.c.bf16 %v317, %v316
      %v349 = vpack.c.bf16 %v319, %v318
      %v350 = vpack.c.bf16 %v321, %v320
      %v351 = vpack.c.bf16 %v323, %v322
      %v352 = vpack.c.bf16 %v325, %v324
      %v353 = vpack.c.bf16 %v327, %v326
      %v354 = vpack.c.bf16 %v329, %v328
      %v355 = vpack.c.bf16 %v331, %v330
      %v356 = vpack.c.bf16 %v333, %v332
      %v357 = vpack.c.bf16 %v335, %v334
      %v358 = vpack.c.bf16 %v337, %v336
      %v359 = vpack.c.bf16 %v339, %v338
      %v360 = vpack.c.bf16 %v341, %v340
      %v361 = vpack.c.bf16 %v343, %v342
      %v362 = vpack.c.bf16 %v345, %v344
      %v363 = vpack.c.bf16 %v347, %v346
      %v380 = vunpack.c.l.b16 %v348
      %v381 = vunpack.c.h.b16 %v348
      %v382 = vunpack.c.l.b16 %v349
      %v383 = vunpack.c.h.b16 %v349
      %v384 = vunpack.c.l.b16 %v350
      %v385 = vunpack.c.h.b16 %v350
      %v386 = vunpack.c.l.b16 %v351
      %v387 = vunpack.c.h.b16 %v351
      %v388 = vunpack.c.l.b16 %v352
      %v389 = vunpack.c.h.b16 %v352
      %v390 = vunpack.c.l.b16 %v353
      %v391 = vunpack.c.h.b16 %v353
      %v392 = vunpack.c.l.b16 %v354
      %v393 = vunpack.c.h.b16 %v354
      %v394 = vunpack.c.l.b16 %v355
      %v395 = vunpack.c.h.b16 %v355
      %v396 = vunpack.c.l.b16 %v356
      %v397 = vunpack.c.h.b16 %v356
      %v398 = vunpack.c.l.b16 %v357
      %v399 = vunpack.c.h.b16 %v357
      %v400 = vunpack.c.l.b16 %v358
      %v401 = vunpack.c.h.b16 %v358
      %v402 = vunpack.c.l.b16 %v359
      %v403 = vunpack.c.h.b16 %v359
      %v404 = vunpack.c.l.b16 %v360
      %v405 = vunpack.c.h.b16 %v360
      %v406 = vunpack.c.l.b16 %v361
      %v407 = vunpack.c.h.b16 %v361
      %v408 = vunpack.c.l.b16 %v362
      %v409 = vunpack.c.h.b16 %v362
      %v410 = vunpack.c.l.b16 %v363
      %v411 = vunpack.c.h.b16 %v363
      %v412 = vpack.c.b16 %v380, %v380
      %v413 = vpack.c.b16 %v381, %v381
      %v414 = vpack.c.b16 %v382, %v382
      %v415 = vpack.c.b16 %v383, %v383
      %v416 = vpack.c.b16 %v384, %v384
      %v417 = vpack.c.b16 %v385, %v385
      %v418 = vpack.c.b16 %v386, %v386
      %v419 = vpack.c.b16 %v387, %v387
      %v420 = vpack.c.b16 %v388, %v388
      %v421 = vpack.c.b16 %v389, %v389
      %v422 = vpack.c.b16 %v390, %v390
      %v423 = vpack.c.b16 %v391, %v391
      %v424 = vpack.c.b16 %v392, %v392
      %v425 = vpack.c.b16 %v393, %v393
      %v426 = vpack.c.b16 %v394, %v394
      %v427 = vpack.c.b16 %v395, %v395
      %v428 = vpack.c.b16 %v396, %v396
      %v429 = vpack.c.b16 %v397, %v397
      %v430 = vpack.c.b16 %v398, %v398
      %v431 = vpack.c.b16 %v399, %v399
      %v432 = vpack.c.b16 %v400, %v400
      %v433 = vpack.c.b16 %v401, %v401
      %v434 = vpack.c.b16 %v402, %v402
      %v435 = vpack.c.b16 %v403, %v403
      %v436 = vpack.c.b16 %v404, %v404
      %v437 = vpack.c.b16 %v405, %v405
      %v438 = vpack.c.b16 %v406, %v406
      %v439 = vpack.c.b16 %v407, %v407
      %v440 = vpack.c.b16 %v408, %v408
      %v441 = vpack.c.b16 %v409, %v409
      %v442 = vpack.c.b16 %v410, %v410
      %v443 = vpack.c.b16 %v411, %v411
      %476 = vst [vmem:[%s172] sm:$0xf] %v412
      %477 = vst [vmem:[%s172 + $0x4] sm:$0xf] %v413
      %478 = vst [vmem:[%s172 + $0x8] sm:$0xf] %v414
      %479 = vst [vmem:[%s172 + $0xc] sm:$0xf] %v415
      %480 = vst [vmem:[%s172 + $0x10] sm:$0xf] %v416
      %481 = vst [vmem:[%s172 + $0x14] sm:$0xf] %v417
      %482 = vst [vmem:[%s172 + $0x18] sm:$0xf] %v418
      %483 = vst [vmem:[%s172 + $0x1c] sm:$0xf] %v419
      %484 = vst [vmem:[%s172 + $0x20] sm:$0xf] %v420
      %485 = vst [vmem:[%s172 + $0x24] sm:$0xf] %v421
      %486 = vst [vmem:[%s172 + $0x28] sm:$0xf] %v422
      %487 = vst [vmem:[%s172 + $0x2c] sm:$0xf] %v423
      %488 = vst [vmem:[%s172 + $0x30] sm:$0xf] %v424
      %489 = vst [vmem:[%s172 + $0x34] sm:$0xf] %v425
      %490 = vst [vmem:[%s172 + $0x38] sm:$0xf] %v426
      %491 = vst [vmem:[%s172 + $0x3c] sm:$0xf] %v427
      %492 = vst [vmem:[%s172 + $0x40] sm:$0xf] %v428
      %493 = vst [vmem:[%s172 + $0x44] sm:$0xf] %v429
      %494 = vst [vmem:[%s172 + $0x48] sm:$0xf] %v430
      %495 = vst [vmem:[%s172 + $0x4c] sm:$0xf] %v431
      %496 = vst [vmem:[%s172 + $0x50] sm:$0xf] %v432
      %497 = vst [vmem:[%s172 + $0x54] sm:$0xf] %v433
      %498 = vst [vmem:[%s172 + $0x58] sm:$0xf] %v434
      %499 = vst [vmem:[%s172 + $0x5c] sm:$0xf] %v435
      %500 = vst [vmem:[%s172 + $0x60] sm:$0xf] %v436
      %501 = vst [vmem:[%s172 + $0x64] sm:$0xf] %v437
      %502 = vst [vmem:[%s172 + $0x68] sm:$0xf] %v438
      %503 = vst [vmem:[%s172 + $0x6c] sm:$0xf] %v439
      %504 = vst [vmem:[%s172 + $0x70] sm:$0xf] %v440
      %505 = vst [vmem:[%s172 + $0x74] sm:$0xf] %v441
      %506 = vst [vmem:[%s172 + $0x78] sm:$0xf] %v442
      %507 = vst [vmem:[%s172 + $0x7c] sm:$0xf] %v443
      %s508 = smul.u32 32, %s14
      %p509 = scmp.lt.s32.totalorder %s508, 63
      %s510 = scalar_select %p509, %s508, 63
      %s511 = smul.addr %s510, 4
      %s512 = scalar_lea.vmem %s3, %s511
      // Predicated region
      $region33: #{bottleneck_forward.7} parent=31 // pred_check
        %p513 = pneg %p100
      $region34: #{bottleneck_forward.7} parent=31 // pred_check_branch
        %515 = sbr.rel (%p513) target = $region36
      $region35: #{bottleneck_forward.7} parent=31 // pred_region
        %s516 = smul.u32 32, %s14
      $region36: #{bottleneck_forward.7} parent=31 // pred_fallthru
        _
    $region32: #{bottleneck_forward.7} parent=5 // pred_fallthru
      _
    %p517 = scmp.le.s32.totalorder 2, %s9
    // Predicated region
    $region37: #{bottleneck_forward.7} parent=5 // pred_check
      %p518 = pneg %p517
    $region38: #{bottleneck_forward.7} parent=5 // pred_check_branch
      %520 = sbr.rel (%p518) target = $region40
    $region39: #{bottleneck_forward.7} parent=5 // pred_region
      %s521 = ssub.s32 %s9, 2
      // Predicated region
      $region41: #{bottleneck_forward.7} parent=39 // pred_check
        %p522 = pneg %p106
      $region42: #{bottleneck_forward.7} parent=39 // pred_check_branch
        %524 = sbr.rel (%p522) target = $region44
      $region43: #{bottleneck_forward.7} parent=39 // pred_region
        %s525 = smul.u32 32, %s15
        %p526 = scmp.lt.s32.totalorder %s525, 63
        %s527 = scalar_select %p526, %s525, 63
        %s528 = smul.addr %s527, 4
        %s529 = scalar_lea.vmem %s3, %s528
      $region44: #{bottleneck_forward.7} parent=39 // pred_fallthru
        _
    $region40: #{bottleneck_forward.7} parent=5 // pred_fallthru
      _
  $region6: #{bottleneck_forward.7} parent=0 // loop_footer
    %s13 = sadd.s32 1, %s9
  $region7: #{bottleneck_forward.7} parent=0 // loop_footer_branch
    %8 = sbr.rel target = $region3
  $region8: #{bottleneck_forward.7} parent=0 // loop_exit
    _

// kernel: bottleneck_forward.6
$region0: #{bottleneck_forward.6}
  #allocation0 [shape = 'u32[]', space=smem, size = 0x4, offset = 0x4, fixed_abs, tag = 'smem constant byte address 0x4 - core index']
  #allocation1 [shape = 'u32[144,128]{1,0:T(1,128)}', space=vmem, size = 0x12000, scoped, tag = 'internal scratch']
  #allocation2 [shape = 'f32[256,128]{1,0:T(8,128)}', space=vmem, size = 0x20000, scoped, tag = 'scratch operand']
  %s0 = inlined_call_operand.vmem [shape: bf16[512,128], index: 0, kind: input, shape index: {}]
  %s1 = inlined_call_operand.hbm [shape: bf16[128,128], index: 1, kind: input, shape index: {}]
  %s2 = inlined_call_operand.vmem [shape: bf16[512,128], index: 2, kind: output, shape index: {0}]
  %s3 = inlined_call_operand.vmem [shape: f32[16,128], index: 3, kind: output, shape index: {1}]
  %s4 = inlined_call_operand.vmem [shape: f32[16,128], index: 4, kind: output, shape index: {2}]
  %5 = xla_tuple %s2, %s3, %s4
  %s6 = sld [smem:[#allocation0]]
  $region69: #{bottleneck_forward.6} parent=0
    _
  %s8 = ssub.s32 1, %s6
  %s9 = scalar_select 0, %s8, %s6
  $region1: #{bottleneck_forward.6} parent=0
    #allocation3 [shape = 'u8[32768]{0}', space=vmem, size = 0x8000, scoped, tag = 'input window, operand 1, single buffered']
    #allocation4 [shape = 's32[2]{0}', space=sflag, size = 0x8, scoped, tag = 'scoped memory for bottleneck_forward.6']
    %10 = vsyncpa [#allocation4], 0
    loop: start=0, step=1, limit=4
    $region2: #{bottleneck_forward.6} parent=1 // loop_pre_header
      _
    $region3: #{bottleneck_forward.6} parent=1 // loop_header
      %s12 = sphi 0, %s16
      %p13 = scmp.ge.s32.totalorder %s12, 4
      %s19 = sphi 0, %s38
      %s20 = sphi 0, %s34
      %s21 = sphi 0, %s30
      %s22 = sphi 0, %s19
      %s23 = sphi 0, %s20
      %s24 = sphi 0, %s21
      %s25 = sphi 0, %s22
      %s26 = sphi 0, %s23
      %s27 = sphi 0, %s24
      %s43 = sphi 0, %s45
      %s46 = sphi 0, %s43
      %s47 = sphi 0, %s46
      %s63 = sphi 0, %s47
      %s71 = sphi 0, %s73
      %s74 = sphi 0, %s71
      %s75 = sphi 0, %s74
      %s91 = sphi 0, %s75
      %s99 = sphi 0, %s101
      %s102 = sphi 0, %s99
      %s103 = sphi 0, %s102
      %s119 = sphi 0, %s103
      %s127 = sphi 0, %s129
      %s130 = sphi 0, %s127
      %s131 = sphi 0, %s130
      %s147 = sphi 0, %s131
      %s155 = sphi 0, %s157
      %s158 = sphi 0, %s155
      %s159 = sphi 0, %s158
      %s175 = sphi 0, %s159
    $region4: #{bottleneck_forward.6} parent=1 // loop_header_branch
      %15 = sbr.rel (%p13) target = $region8
    $region5: #{bottleneck_forward.6} parent=1 // loop_body
      %s17 = ssub.s32 %s12, 1
      %s18 = ssub.s32 %s12, 2
      %s28 = sadd.s32 1, %s21
      %p29 = scmp.ge.s32.totalorder %s28, 1
      %s30 = scalar_select %p29, 0, %s28
      %s31 = sadd.s32 1, %s20
      %s32 = scalar_select %p29, %s31, %s20
      %p33 = scmp.ge.s32.totalorder %s32, 1
      %s34 = scalar_select %p33, 0, %s32
      %s35 = sadd.s32 1, %s19
      %s36 = scalar_select %p33, %s35, %s19
      %p37 = scmp.ge.s32.totalorder %s36, 2
      %s38 = scalar_select %p37, 0, %s36
      %s39 = ssub.s32 %s19, %s38
      %s40 = ssub.s32 %s21, %s30
      %s41 = sor.u32 %s39, %s40
      %p42 = scmp.eq.s32.totalorder %s41, 0
      %s44 = sadd.s32 %s43, 1
      %s45 = scalar_select %p42, %s43, %s44
      %p48 = pneg %p42
      %p49 = scmp.eq.s32.totalorder %s12, 1
      %p50 = por %p48, %p49
      %p51 = scmp.ne.s32.totalorder %s43, %s46
      %p52 = scmp.eq.s32.totalorder %s12, 0
      %p53 = por %p51, %p52
      %p54 = scmp.ne.s32.totalorder %s43, %s46
      %p55 = scmp.eq.s32.totalorder %s17, 1
      %p56 = por %p54, %p55
      %p57 = scmp.ne.s32.totalorder %s46, %s47
      %p58 = scmp.eq.s32.totalorder %s17, 0
      %p59 = por %p57, %p58
      %p60 = scmp.ne.s32.totalorder %s46, %s47
      %p61 = scmp.eq.s32.totalorder %s18, 1
      %p62 = por %p60, %p61
      %p64 = scmp.ne.s32.totalorder %s47, %s63
      %p65 = scmp.eq.s32.totalorder %s18, 0
      %p66 = por %p64, %p65
      %s67 = ssub.s32 %s21, %s30
      %s68 = ssub.s32 %s20, %s34
      %s69 = sor.u32 %s67, %s68
      %p70 = scmp.eq.s32.totalorder %s69, 0
      %s72 = sadd.s32 %s71, 1
      %s73 = scalar_select %p70, %s71, %s72
      %p76 = pneg %p70
      %p77 = scmp.eq.s32.totalorder %s12, 1
      %p78 = por %p76, %p77
      %p79 = scmp.ne.s32.totalorder %s71, %s74
      %p80 = scmp.eq.s32.totalorder %s12, 0
      %p81 = por %p79, %p80
      %p82 = scmp.ne.s32.totalorder %s71, %s74
      %p83 = scmp.eq.s32.totalorder %s17, 1
      %p84 = por %p82, %p83
      %p85 = scmp.ne.s32.totalorder %s74, %s75
      %p86 = scmp.eq.s32.totalorder %s17, 0
      %p87 = por %p85, %p86
      %p88 = scmp.ne.s32.totalorder %s74, %s75
      %p89 = scmp.eq.s32.totalorder %s18, 1
      %p90 = por %p88, %p89
      %p92 = scmp.ne.s32.totalorder %s75, %s91
      %p93 = scmp.eq.s32.totalorder %s18, 0
      %p94 = por %p92, %p93
      %s95 = ssub.s32 %s19, %s38
      %s96 = ssub.s32 %s20, %s34
      %s97 = sor.u32 %s95, %s96
      %p98 = scmp.eq.s32.totalorder %s97, 0
      %s100 = sadd.s32 %s99, 1
      %s101 = scalar_select %p98, %s99, %s100
      %p104 = pneg %p98
      %p105 = scmp.eq.s32.totalorder %s12, 1
      %p106 = por %p104, %p105
      %p107 = scmp.ne.s32.totalorder %s99, %s102
      %p108 = scmp.eq.s32.totalorder %s12, 0
      %p109 = por %p107, %p108
      %p110 = scmp.ne.s32.totalorder %s99, %s102
      %p111 = scmp.eq.s32.totalorder %s17, 1
      %p112 = por %p110, %p111
      %p113 = scmp.ne.s32.totalorder %s102, %s103
      %p114 = scmp.eq.s32.totalorder %s17, 0
      %p115 = por %p113, %p114
      %p116 = scmp.ne.s32.totalorder %s102, %s103
      %p117 = scmp.eq.s32.totalorder %s18, 1
      %p118 = por %p116, %p117
      %p120 = scmp.ne.s32.totalorder %s103, %s119
      %p121 = scmp.eq.s32.totalorder %s18, 0
      %p122 = por %p120, %p121
      %s123 = ssub.s32 %s19, %s38
      %s124 = ssub.s32 %s20, %s34
      %s125 = sor.u32 %s123, %s124
      %p126 = scmp.eq.s32.totalorder %s125, 0
      %s128 = sadd.s32 %s127, 1
      %s129 = scalar_select %p126, %s127, %s128
      %p132 = pneg %p126
      %p133 = scmp.eq.s32.totalorder %s12, 1
      %p134 = por %p132, %p133
      %p135 = scmp.ne.s32.totalorder %s127, %s130
      %p136 = scmp.eq.s32.totalorder %s12, 0
      %p137 = por %p135, %p136
      %p138 = scmp.ne.s32.totalorder %s127, %s130
      %p139 = scmp.eq.s32.totalorder %s17, 1
      %p140 = por %p138, %p139
      %p141 = scmp.ne.s32.totalorder %s130, %s131
      %p142 = scmp.eq.s32.totalorder %s17, 0
      %p143 = por %p141, %p142
      %p144 = scmp.ne.s32.totalorder %s130, %s131
      %p145 = scmp.eq.s32.totalorder %s18, 1
      %p146 = por %p144, %p145
      %p148 = scmp.ne.s32.totalorder %s131, %s147
      %p149 = scmp.eq.s32.totalorder %s18, 0
      %p150 = por %p148, %p149
      %s151 = ssub.s32 %s19, %s38
      %s152 = ssub.s32 %s20, %s34
      %s153 = sor.u32 %s151, %s152
      %p154 = scmp.eq.s32.totalorder %s153, 0
      %s156 = sadd.s32 %s155, 1
      %s157 = scalar_select %p154, %s155, %s156
      %p160 = pneg %p154
      %p161 = scmp.eq.s32.totalorder %s12, 1
      %p162 = por %p160, %p161
      %p163 = scmp.ne.s32.totalorder %s155, %s158
      %p164 = scmp.eq.s32.totalorder %s12, 0
      %p165 = por %p163, %p164
      %p166 = scmp.ne.s32.totalorder %s155, %s158
      %p167 = scmp.eq.s32.totalorder %s17, 1
      %p168 = por %p166, %p167
      %p169 = scmp.ne.s32.totalorder %s158, %s159
      %p170 = scmp.eq.s32.totalorder %s17, 0
      %p171 = por %p169, %p170
      %p172 = scmp.ne.s32.totalorder %s158, %s159
      %p173 = scmp.eq.s32.totalorder %s18, 1
      %p174 = por %p172, %p173
      %p176 = scmp.ne.s32.totalorder %s159, %s175
      %p177 = scmp.eq.s32.totalorder %s18, 0
      %p178 = por %p176, %p177
      %p179 = scmp.le.s32.totalorder 1, %s12
      %p180 = scmp.lt.s32.totalorder %s12, 3
      %p181 = pnand %p179, %p180
      %p182 = pneg %p181
      // Predicated region
      $region9: #{bottleneck_forward.6} parent=5 // pred_check
        _
      $region10: #{bottleneck_forward.6} parent=5 // pred_check_branch
        %184 = sbr.rel (%p181) target = $region12
      $region11: #{bottleneck_forward.6} parent=5 // pred_region
        %s185 = ssub.s32 %s12, 1
        // Predicated region
        $region13: #{bottleneck_forward.6} parent=11 // pred_check
          %p186 = pneg %p87
        $region14: #{bottleneck_forward.6} parent=11 // pred_check_branch
          %188 = sbr.rel (%p186) target = $region16
        $region15: #{bottleneck_forward.6} parent=11 // pred_region
          %s189 = smul.u32 16, %s24
          %s191 = ssub.s32 1024, 1024
          %192 = vsyncadd [#allocation4], %s191
          %s193 = sadd.s32 %s23, %s189
          %s194 = smul.addr %s193, 64
          %s195 = scalar_lea.hbm %s1, %s194
          %s196 = sshll.u32 [#allocation3], 4
          %s197 = int_to_ptr.vmem [resolvable:$true] %s196
          %202 = dma.hbm_to_vmem [thread:$0]  %s195, 1024, %s197, [#allocation4], 64, 64, 4
        $region16: #{bottleneck_forward.6} parent=11 // pred_fallthru
          _
      $region12: #{bottleneck_forward.6} parent=5 // pred_fallthru
        _
      %p203 = scmp.lt.s32.totalorder %s12, 2
      // Predicated region
      $region17: #{bottleneck_forward.6} parent=5 // pred_check
        %p204 = pneg %p203
      $region18: #{bottleneck_forward.6} parent=5 // pred_check_branch
        %206 = sbr.rel (%p204) target = $region20
      $region19: #{bottleneck_forward.6} parent=5 // pred_region
        // Predicated region
        $region21: #{bottleneck_forward.6} parent=19 // pred_check
          %p207 = pneg %p53
        $region22: #{bottleneck_forward.6} parent=19 // pred_check_branch
          %209 = sbr.rel (%p207) target = $region24
        $region23: #{bottleneck_forward.6} parent=19 // pred_region
          %s210 = smul.u32 32, %s19
          %p211 = scmp.lt.s32.totalorder %s210, 63
          %s212 = scalar_select %p211, %s210, 63
          %p213 = scmp.lt.s32.totalorder %s21, 0
          %s214 = scalar_select %p213, %s21, 0
          %s215 = sadd.s32 %s214, %s212
          %s216 = smul.addr %s215, 4
          %s217 = scalar_lea.vmem %s0, %s216
          %s218 = smul.u32 32, %s19
        $region24: #{bottleneck_forward.6} parent=19 // pred_fallthru
          _
      $region20: #{bottleneck_forward.6} parent=5 // pred_fallthru
        _
      %p219 = scmp.le.s32.totalorder 1, %s12
      %p220 = scmp.lt.s32.totalorder %s12, 3
      %p221 = pnand %p219, %p220
      %p222 = pneg %p221
      // Predicated region
      $region25: #{bottleneck_forward.6} parent=5 // pred_check
        _
      $region26: #{bottleneck_forward.6} parent=5 // pred_check_branch
        %224 = sbr.rel (%p221) target = $region28
      $region27: #{bottleneck_forward.6} parent=5 // pred_region
        %s225 = ssub.s32 %s12, 1
        // Predicated region
        $region29: #{bottleneck_forward.6} parent=27 // pred_check
          %p226 = pneg %p87
        $region30: #{bottleneck_forward.6} parent=27 // pred_check_branch
          %228 = sbr.rel (%p226) target = $region32
        $region31: #{bottleneck_forward.6} parent=27 // pred_region
          %229 = dma.done [#allocation4], 1024
        $region32: #{bottleneck_forward.6} parent=27 // pred_fallthru
          _
        %s230 = smul.u32 32, %s22
        %p231 = scmp.lt.s32.totalorder %s230, 63
        %s232 = scalar_select %p231, %s230, 63
        %p233 = scmp.lt.s32.totalorder %s24, 0
        %s234 = scalar_select %p233, %s24, 0
        %s235 = sadd.s32 %s234, %s232
        %s236 = smul.addr %s235, 4
        %s237 = scalar_lea.vmem %s0, %s236
        %p238 = pneg %p59
        %p239 = pneg %p56
        %p240 = pneg %p87
        %p241 = pneg %p84
        %p242 = pneg %p115
        %p243 = pneg %p112
        %s244 = smul.u32 32, %s22
        %p245 = scmp.lt.s32.totalorder %s244, 63
        %s246 = scalar_select %p245, %s244, 63
        %p247 = scmp.lt.s32.totalorder %s23, 0
        %s248 = scalar_select %p247, %s23, 0
        %s249 = sadd.s32 %s248, %s246
        %s250 = smul.addr %s249, 4
        %s251 = scalar_lea.vmem %s2, %s250
        %p252 = pneg %p143
        %p253 = pneg %p140
        %p254 = scmp.lt.s32.totalorder %s22, 1
        %s255 = scalar_select %p254, %s22, 1
        %p256 = scmp.lt.s32.totalorder %s23, 0
        %s257 = scalar_select %p256, %s23, 0
        %s258 = sadd.s32 %s257, %s255
        %s259 = smul.addr %s258, 8
        %s260 = scalar_lea.vmem %s3, %s259
        %p261 = pneg %p171
        %p262 = pneg %p168
        %p263 = scmp.lt.s32.totalorder %s22, 1
        %s264 = scalar_select %p263, %s22, 1
        %p265 = scmp.lt.s32.totalorder %s23, 0
        %s266 = scalar_select %p265, %s23, 0
        %s267 = sadd.s32 %s266, %s264
        %s268 = smul.addr %s267, 8
        %s269 = scalar_lea.vmem %s4, %s268
        %s270 = smul.u32 32, %s22
        %p271 = scmp.lt.s32.totalorder %s270, 63
        %s272 = scalar_select %p271, %s270, 63
        %p273 = scmp.lt.s32.totalorder %s24, 0
        %s274 = scalar_select %p273, %s24, 0
        %s275 = sadd.s32 %s274, %s272
        %s276 = smul.addr %s275, 4
        %s277 = scalar_lea.vmem %s0, %s276
        %s278 = smul.u32 32, %s22
        %s279 = smul.u32 16, %s24
        %s280 = smul.u32 32, %s22
        %p281 = scmp.lt.s32.totalorder %s280, 63
        %s282 = scalar_select %p281, %s280, 63
        %p283 = scmp.lt.s32.totalorder %s23, 0
        %s284 = scalar_select %p283, %s23, 0
        %s285 = sadd.s32 %s284, %s282
        %s286 = smul.addr %s285, 4
        %s287 = scalar_lea.vmem %s2, %s286
        %s288 = smul.u32 32, %s22
        %p289 = scmp.lt.s32.totalorder %s22, 1
        %s290 = scalar_select %p289, %s22, 1
        %p291 = scmp.lt.s32.totalorder %s23, 0
        %s292 = scalar_select %p291, %s23, 0
        %s293 = sadd.s32 %s292, %s290
        %s294 = smul.addr %s293, 8
        %s295 = scalar_lea.vmem %s3, %s294
        %p296 = scmp.lt.s32.totalorder %s22, 1
        %s297 = scalar_select %p296, %s22, 1
        %p298 = scmp.lt.s32.totalorder %s23, 0
        %s299 = scalar_select %p298, %s23, 0
        %s300 = sadd.s32 %s299, %s297
        %s301 = smul.addr %s300, 8
        %s302 = scalar_lea.vmem %s4, %s301
        %p304 = scmp.eq.s32.totalorder %s24, 0
        // Predicated region
        $region33: #{bottleneck_forward.6} parent=27 // pred_check
          %p305 = pneg %p304
        $region34: #{bottleneck_forward.6} parent=27 // pred_check_branch
          %307 = sbr.rel (%p305) target = $region36
        $region35: #{bottleneck_forward.6} parent=27 // pred_region
          %308 = vst [vmem:[#allocation2] sm:$0xff] 0.0
          %309 = vst [vmem:[#allocation2 + $0x8] sm:$0xff] 0.0
          %310 = vst [vmem:[#allocation2 + $0x10] sm:$0xff] 0.0
          %311 = vst [vmem:[#allocation2 + $0x18] sm:$0xff] 0.0
          %312 = vst [vmem:[#allocation2 + $0x20] sm:$0xff] 0.0
          %313 = vst [vmem:[#allocation2 + $0x28] sm:$0xff] 0.0
          %314 = vst [vmem:[#allocation2 + $0x30] sm:$0xff] 0.0
          %315 = vst [vmem:[#allocation2 + $0x38] sm:$0xff] 0.0
          %316 = vst [vmem:[#allocation2 + $0x40] sm:$0xff] 0.0
          %317 = vst [vmem:[#allocation2 + $0x48] sm:$0xff] 0.0
          %318 = vst [vmem:[#allocation2 + $0x50] sm:$0xff] 0.0
          %319 = vst [vmem:[#allocation2 + $0x58] sm:$0xff] 0.0
          %320 = vst [vmem:[#allocation2 + $0x60] sm:$0xff] 0.0
          %321 = vst [vmem:[#allocation2 + $0x68] sm:$0xff] 0.0
          %322 = vst [vmem:[#allocation2 + $0x70] sm:$0xff] 0.0
          %323 = vst [vmem:[#allocation2 + $0x78] sm:$0xff] 0.0
          %324 = vst [vmem:[#allocation2 + $0x80] sm:$0xff] 0.0
          %325 = vst [vmem:[#allocation2 + $0x88] sm:$0xff] 0.0
          %326 = vst [vmem:[#allocation2 + $0x90] sm:$0xff] 0.0
          %327 = vst [vmem:[#allocation2 + $0x98] sm:$0xff] 0.0
          %328 = vst [vmem:[#allocation2 + $0xa0] sm:$0xff] 0.0
          %329 = vst [vmem:[#allocation2 + $0xa8] sm:$0xff] 0.0
          %330 = vst [vmem:[#allocation2 + $0xb0] sm:$0xff] 0.0
          %331 = vst [vmem:[#allocation2 + $0xb8] sm:$0xff] 0.0
          %332 = vst [vmem:[#allocation2 + $0xc0] sm:$0xff] 0.0
          %333 = vst [vmem:[#allocation2 + $0xc8] sm:$0xff] 0.0
          %334 = vst [vmem:[#allocation2 + $0xd0] sm:$0xff] 0.0
          %335 = vst [vmem:[#allocation2 + $0xd8] sm:$0xff] 0.0
          %336 = vst [vmem:[#allocation2 + $0xe0] sm:$0xff] 0.0
          %337 = vst [vmem:[#allocation2 + $0xe8] sm:$0xff] 0.0
          %338 = vst [vmem:[#allocation2 + $0xf0] sm:$0xff] 0.0
          %339 = vst [vmem:[#allocation2 + $0xf8] sm:$0xff] 0.0
        $region36: #{bottleneck_forward.6} parent=27 // pred_fallthru
          _
        %v340 = vld [vmem:[#allocation2] sm:$0xff]
        %v341 = vld [vmem:[#allocation2 + $0x8] sm:$0xff]
        %v342 = vld [vmem:[#allocation2 + $0x10] sm:$0xff]
        %v343 = vld [vmem:[#allocation2 + $0x18] sm:$0xff]
        %v344 = vld [vmem:[#allocation2 + $0x20] sm:$0xff]
        %v345 = vld [vmem:[#allocation2 + $0x28] sm:$0xff]
        %v346 = vld [vmem:[#allocation2 + $0x30] sm:$0xff]
        %v347 = vld [vmem:[#allocation2 + $0x38] sm:$0xff]
        %v348 = vld [vmem:[#allocation2 + $0x40] sm:$0xff]
        %v349 = vld [vmem:[#allocation2 + $0x48] sm:$0xff]
        %v350 = vld [vmem:[#allocation2 + $0x50] sm:$0xff]
        %v351 = vld [vmem:[#allocation2 + $0x58] sm:$0xff]
        %v352 = vld [vmem:[#allocation2 + $0x60] sm:$0xff]
        %v353 = vld [vmem:[#allocation2 + $0x68] sm:$0xff]
        %v354 = vld [vmem:[#allocation2 + $0x70] sm:$0xff]
        %v355 = vld [vmem:[#allocation2 + $0x78] sm:$0xff]
        %v356 = vld [vmem:[#allocation2 + $0x80] sm:$0xff]
        %v357 = vld [vmem:[#allocation2 + $0x88] sm:$0xff]
        %v358 = vld [vmem:[#allocation2 + $0x90] sm:$0xff]
        %v359 = vld [vmem:[#allocation2 + $0x98] sm:$0xff]
        %v360 = vld [vmem:[#allocation2 + $0xa0] sm:$0xff]
        %v361 = vld [vmem:[#allocation2 + $0xa8] sm:$0xff]
        %v362 = vld [vmem:[#allocation2 + $0xb0] sm:$0xff]
        %v363 = vld [vmem:[#allocation2 + $0xb8] sm:$0xff]
        %v364 = vld [vmem:[#allocation2 + $0xc0] sm:$0xff]
        %v365 = vld [vmem:[#allocation2 + $0xc8] sm:$0xff]
        %v366 = vld [vmem:[#allocation2 + $0xd0] sm:$0xff]
        %v367 = vld [vmem:[#allocation2 + $0xd8] sm:$0xff]
        %v368 = vld [vmem:[#allocation2 + $0xe0] sm:$0xff]
        %v369 = vld [vmem:[#allocation2 + $0xe8] sm:$0xff]
        %v370 = vld [vmem:[#allocation2 + $0xf0] sm:$0xff]
        %v371 = vld [vmem:[#allocation2 + $0xf8] sm:$0xff]
        %v372 = vld [vmem:[%s277] sm:$0xf]
        %v373 = vld [vmem:[%s277 + $0x4] sm:$0xf]
        %v374 = vld [vmem:[%s277 + $0x8] sm:$0xf]
        %v375 = vld [vmem:[%s277 + $0xc] sm:$0xf]
        %v376 = vld [vmem:[%s277 + $0x10] sm:$0xf]
        %v377 = vld [vmem:[%s277 + $0x14] sm:$0xf]
        %v378 = vld [vmem:[%s277 + $0x18] sm:$0xf]
        %v379 = vld [vmem:[%s277 + $0x1c] sm:$0xf]
        %v380 = vld [vmem:[%s277 + $0x20] sm:$0xf]
        %v381 = vld [vmem:[%s277 + $0x24] sm:$0xf]
        %v382 = vld [vmem:[%s277 + $0x28] sm:$0xf]
        %v383 = vld [vmem:[%s277 + $0x2c] sm:$0xf]
        %v384 = vld [vmem:[%s277 + $0x30] sm:$0xf]
        %v385 = vld [vmem:[%s277 + $0x34] sm:$0xf]
        %v386 = vld [vmem:[%s277 + $0x38] sm:$0xf]
        %v387 = vld [vmem:[%s277 + $0x3c] sm:$0xf]
        %v388 = vld [vmem:[%s277 + $0x40] sm:$0xf]
        %v389 = vld [vmem:[%s277 + $0x44] sm:$0xf]
        %v390 = vld [vmem:[%s277 + $0x48] sm:$0xf]
        %v391 = vld [vmem:[%s277 + $0x4c] sm:$0xf]
        %v392 = vld [vmem:[%s277 + $0x50] sm:$0xf]
        %v393 = vld [vmem:[%s277 + $0x54] sm:$0xf]
        %v394 = vld [vmem:[%s277 + $0x58] sm:$0xf]
        %v395 = vld [vmem:[%s277 + $0x5c] sm:$0xf]
        %v396 = vld [vmem:[%s277 + $0x60] sm:$0xf]
        %v397 = vld [vmem:[%s277 + $0x64] sm:$0xf]
        %v398 = vld [vmem:[%s277 + $0x68] sm:$0xf]
        %v399 = vld [vmem:[%s277 + $0x6c] sm:$0xf]
        %v400 = vld [vmem:[%s277 + $0x70] sm:$0xf]
        %v401 = vld [vmem:[%s277 + $0x74] sm:$0xf]
        %v402 = vld [vmem:[%s277 + $0x78] sm:$0xf]
        %v403 = vld [vmem:[%s277 + $0x7c] sm:$0xf]
        %v404 = vld [vmem:[#allocation3] sm:$0xf]
        %v405 = vld [vmem:[#allocation3 + $0x4] sm:$0xf]
        %v406 = vld [vmem:[#allocation3 + $0x8] sm:$0xf]
        %v407 = vld [vmem:[#allocation3 + $0xc] sm:$0xf]
        %v408 = vld [vmem:[#allocation3 + $0x10] sm:$0xf]
        %v409 = vld [vmem:[#allocation3 + $0x14] sm:$0xf]
        %v410 = vld [vmem:[#allocation3 + $0x18] sm:$0xf]
        %v411 = vld [vmem:[#allocation3 + $0x1c] sm:$0xf]
        %v412 = vld [vmem:[#allocation3 + $0x20] sm:$0xf]
        %v413 = vld [vmem:[#allocation3 + $0x24] sm:$0xf]
        %v414 = vld [vmem:[#allocation3 + $0x28] sm:$0xf]
        %v415 = vld [vmem:[#allocation3 + $0x2c] sm:$0xf]
        %v416 = vld [vmem:[#allocation3 + $0x30] sm:$0xf]
        %v417 = vld [vmem:[#allocation3 + $0x34] sm:$0xf]
        %v418 = vld [vmem:[#allocation3 + $0x38] sm:$0xf]
        %v419 = vld [vmem:[#allocation3 + $0x3c] sm:$0xf]
        %v452 = vunpack.c.l.b16 %v372
        %v453 = vunpack.c.l.b16 %v373
        %v454 = vunpack.c.l.b16 %v374
        %v455 = vunpack.c.l.b16 %v375
        %v456 = vunpack.c.l.b16 %v376
        %v457 = vunpack.c.l.b16 %v377
        %v458 = vunpack.c.l.b16 %v378
        %v459 = vunpack.c.l.b16 %v379
        %v460 = vunpack.c.l.b16 %v380
        %v461 = vunpack.c.l.b16 %v381
        %v462 = vunpack.c.l.b16 %v382
        %v463 = vunpack.c.l.b16 %v383
        %v464 = vunpack.c.l.b16 %v384
        %v465 = vunpack.c.l.b16 %v385
        %v466 = vunpack.c.l.b16 %v386
        %v467 = vunpack.c.l.b16 %v387
        %v468 = vunpack.c.l.b16 %v388
        %v469 = vunpack.c.l.b16 %v389
        %v470 = vunpack.c.l.b16 %v390
        %v471 = vunpack.c.l.b16 %v391
        %v472 = vunpack.c.l.b16 %v392
        %v473 = vunpack.c.l.b16 %v393
        %v474 = vunpack.c.l.b16 %v394
        %v475 = vunpack.c.l.b16 %v395
        %v476 = vunpack.c.l.b16 %v396
        %v477 = vunpack.c.l.b16 %v397
        %v478 = vunpack.c.l.b16 %v398
        %v479 = vunpack.c.l.b16 %v399
        %v480 = vunpack.c.l.b16 %v400
        %v481 = vunpack.c.l.b16 %v401
        %v482 = vunpack.c.l.b16 %v402
        %v483 = vunpack.c.l.b16 %v403
        %v484 = vpack.c.b16 %v453, %v452
        %v485 = vpack.c.b16 %v455, %v454
        %v486 = vpack.c.b16 %v457, %v456
        %v487 = vpack.c.b16 %v459, %v458
        %v488 = vpack.c.b16 %v461, %v460
        %v489 = vpack.c.b16 %v463, %v462
        %v490 = vpack.c.b16 %v465, %v464
        %v491 = vpack.c.b16 %v467, %v466
        %v492 = vpack.c.b16 %v469, %v468
        %v493 = vpack.c.b16 %v471, %v470
        %v494 = vpack.c.b16 %v473, %v472
        %v495 = vpack.c.b16 %v475, %v474
        %v496 = vpack.c.b16 %v477, %v476
        %v497 = vpack.c.b16 %v479, %v478
        %v498 = vpack.c.b16 %v481, %v480
        %v499 = vpack.c.b16 %v483, %v482
        %v532 = vunpack.c.l.b16 %v404
        %v533 = vunpack.c.l.b16 %v405
        %v534 = vunpack.c.l.b16 %v406
        %v535 = vunpack.c.l.b16 %v407
        %v536 = vunpack.c.l.b16 %v408
        %v537 = vunpack.c.l.b16 %v409
        %v538 = vunpack.c.l.b16 %v410
        %v539 = vunpack.c.l.b16 %v411
        %v540 = vunpack.c.l.b16 %v412
        %v541 = vunpack.c.l.b16 %v413
        %v542 = vunpack.c.l.b16 %v414
        %v543 = vunpack.c.l.b16 %v415
        %v544 = vunpack.c.l.b16 %v416
        %v545 = vunpack.c.l.b16 %v417
        %v546 = vunpack.c.l.b16 %v418
        %v547 = vunpack.c.l.b16 %v419
        %v548 = vpack.c.b16 %v533, %v532
        %v549 = vpack.c.b16 %v535, %v534
        %v550 = vpack.c.b16 %v537, %v536
        %v551 = vpack.c.b16 %v539, %v538
        %v552 = vpack.c.b16 %v541, %v540
        %v553 = vpack.c.b16 %v543, %v542
        %v554 = vpack.c.b16 %v545, %v544
        %v555 = vpack.c.b16 %v547, %v546
        %564 = vmatprep.subr.bf16.mxu0 0
        %565 = vmatpush1.bf16.msra.mxu0 %v548
        %566 = vmatprep.subr.bf16.mxu0 0
        %567 = vmatpush1.bf16.msra.mxu0 %v549
        %568 = vmatprep.subr.bf16.mxu0 0
        %569 = vmatpush1.bf16.msra.mxu0 %v550
        %570 = vmatprep.subr.bf16.mxu0 0
        %571 = vmatpush1.bf16.msra.mxu0 %v551
        %572 = vmatprep.subr.bf16.mxu0 0
        %573 = vmatpush1.bf16.msra.mxu0 %v552
        %574 = vmatprep.subr.bf16.mxu0 0
        %575 = vmatpush1.bf16.msra.mxu0 %v553
        %576 = vmatprep.subr.bf16.mxu0 0
        %577 = vmatpush1.bf16.msra.mxu0 %v554
        %578 = vmatprep.subr.bf16.mxu0 0
        %579 = vmatpush1.bf16.msra.mxu0 %v555
        %580 = vmatprep.subr.bf16.mxu0 0
        %581 = vmatpush1.bf16.msra.mxu0 0
        %582 = vmatprep.subr.bf16.mxu0 0
        %583 = vmatpush1.bf16.msra.mxu0 0
        %584 = vmatprep.subr.bf16.mxu0 0
        %585 = vmatpush1.bf16.msra.mxu0 0
        %586 = vmatprep.subr.bf16.mxu0 0
        %587 = vmatpush1.bf16.msra.mxu0 0
        %588 = vmatprep.subr.bf16.mxu0 0
        %589 = vmatpush1.bf16.msra.mxu0 0
        %590 = vmatprep.subr.bf16.mxu0 0
        %591 = vmatpush1.bf16.msra.mxu0 0
        %592 = vmatprep.subr.bf16.mxu0 0
        %593 = vmatpush1.bf16.msra.mxu0 0
        %594 = vmatprep.subr.bf16.mxu0 0
        %595 = vmatpush1.bf16.msra.mxu0 0
        %596 = vmatprep.mubr.bf16.mxu0 0
        %597 = vmatmul.mubr.bf16.gmra.mrb[0].mxu0 %v484
        %v598 = vpop.f32.mrb[0].mxu0
        %v599 = vadd.f32 0.0, %v598
        %v600 = vpop.f32.mrb[0].mxu0
        %v601 = vpop.f32.mrb[0].mxu0
        %v602 = vadd.f32 0.0, %v601
        %v603 = vpop.f32.mrb[0].mxu0
        %604 = vmatprep.mubr.bf16.mxu0 0
        %605 = vmatmul.mubr.bf16.gmra.mrb[0].mxu0 %v485
        %v606 = vpop.f32.mrb[0].mxu0
        %v607 = vadd.f32 0.0, %v606
        %v608 = vpop.f32.mrb[0].mxu0
        %v609 = vpop.f32.mrb[0].mxu0
        %v610 = vadd.f32 0.0, %v609
        %v611 = vpop.f32.mrb[0].mxu0
        %612 = vmatprep.mubr.bf16.mxu0 0
        %613 = vmatmul.mubr.bf16.gmra.mrb[0].mxu0 %v486
        %v614 = vpop.f32.mrb[0].mxu0
        %v615 = vadd.f32 0.0, %v614
        %v616 = vpop.f32.mrb[0].mxu0
        %v617 = vpop.f32.mrb[0].mxu0
        %v618 = vadd.f32 0.0, %v617
        %v619 = vpop.f32.mrb[0].mxu0
        %620 = vmatprep.mubr.bf16.mxu0 0
        %621 = vmatmul.mubr.bf16.gmra.mrb[0].mxu0 %v487
        %v622 = vpop.f32.mrb[0].mxu0
        %v623 = vadd.f32 0.0, %v622
        %v624 = vpop.f32.mrb[0].mxu0
        %v625 = vpop.f32.mrb[0].mxu0
        %v626 = vadd.f32 0.0, %v625
        %v627 = vpop.f32.mrb[0].mxu0
        %628 = vmatprep.mubr.bf16.mxu0 0
        %629 = vmatmul.mubr.bf16.gmra.mrb[0].mxu0 %v488
        %v630 = vpop.f32.mrb[0].mxu0
        %v631 = vadd.f32 0.0, %v630
        %v632 = vpop.f32.mrb[0].mxu0
        %v633 = vpop.f32.mrb[0].mxu0
        %v634 = vadd.f32 0.0, %v633
        %v635 = vpop.f32.mrb[0].mxu0
        %636 = vmatprep.mubr.bf16.mxu0 0
        %637 = vmatmul.mubr.bf16.gmra.mrb[0].mxu0 %v489
        %v638 = vpop.f32.mrb[0].mxu0
        %v639 = vadd.f32 0.0, %v638
        %v640 = vpop.f32.mrb[0].mxu0
        %v641 = vpop.f32.mrb[0].mxu0
        %v642 = vadd.f32 0.0, %v641
        %v643 = vpop.f32.mrb[0].mxu0
        %644 = vmatprep.mubr.bf16.mxu0 0
        %645 = vmatmul.mubr.bf16.gmra.mrb[0].mxu0 %v490
        %v646 = vpop.f32.mrb[0].mxu0
        %v647 = vadd.f32 0.0, %v646
        %v648 = vpop.f32.mrb[0].mxu0
        %v649 = vpop.f32.mrb[0].mxu0
        %v650 = vadd.f32 0.0, %v649
        %v651 = vpop.f32.mrb[0].mxu0
        %652 = vmatprep.mubr.bf16.mxu0 0
        %653 = vmatmul.mubr.bf16.gmra.mrb[0].mxu0 %v491
        %v654 = vpop.f32.mrb[0].mxu0
        %v655 = vadd.f32 0.0, %v654
        %v656 = vpop.f32.mrb[0].mxu0
        %v657 = vpop.f32.mrb[0].mxu0
        %v658 = vadd.f32 0.0, %v657
        %v659 = vpop.f32.mrb[0].mxu0
        %660 = vmatprep.mubr.bf16.mxu0 0
        %661 = vmatmul.mubr.bf16.gmra.mrb[0].mxu0 %v492
        %v662 = vpop.f32.mrb[0].mxu0
        %v663 = vadd.f32 0.0, %v662
        %v664 = vpop.f32.mrb[0].mxu0
        %v665 = vpop.f32.mrb[0].mxu0
        %v666 = vadd.f32 0.0, %v665
        %v667 = vpop.f32.mrb[0].mxu0
        %668 = vmatprep.mubr.bf16.mxu0 0
        %669 = vmatmul.mubr.bf16.gmra.mrb[0].mxu0 %v493
        %v670 = vpop.f32.mrb[0].mxu0
        %v671 = vadd.f32 0.0, %v670
        %v672 = vpop.f32.mrb[0].mxu0
        %v673 = vpop.f32.mrb[0].mxu0
        %v674 = vadd.f32 0.0, %v673
        %v675 = vpop.f32.mrb[0].mxu0
        %676 = vmatprep.mubr.bf16.mxu0 0
        %677 = vmatmul.mubr.bf16.gmra.mrb[0].mxu0 %v494
        %v678 = vpop.f32.mrb[0].mxu0
        %v679 = vadd.f32 0.0, %v678
        %v680 = vpop.f32.mrb[0].mxu0
        %v681 = vpop.f32.mrb[0].mxu0
        %v682 = vadd.f32 0.0, %v681
        %v683 = vpop.f32.mrb[0].mxu0
        %684 = vmatprep.mubr.bf16.mxu0 0
        %685 = vmatmul.mubr.bf16.gmra.mrb[0].mxu0 %v495
        %v686 = vpop.f32.mrb[0].mxu0
        %v687 = vadd.f32 0.0, %v686
        %v688 = vpop.f32.mrb[0].mxu0
        %v689 = vpop.f32.mrb[0].mxu0
        %v690 = vadd.f32 0.0, %v689
        %v691 = vpop.f32.mrb[0].mxu0
        %692 = vmatprep.mubr.bf16.mxu0 0
        %693 = vmatmul.mubr.bf16.gmra.mrb[0].mxu0 %v496
        %v694 = vpop.f32.mrb[0].mxu0
        %v695 = vadd.f32 0.0, %v694
        %v696 = vpop.f32.mrb[0].mxu0
        %v697 = vpop.f32.mrb[0].mxu0
        %v698 = vadd.f32 0.0, %v697
        %v699 = vpop.f32.mrb[0].mxu0
        %700 = vmatprep.mubr.bf16.mxu0 0
        %701 = vmatmul.mubr.bf16.gmra.mrb[0].mxu0 %v497
        %v702 = vpop.f32.mrb[0].mxu0
        %v703 = vadd.f32 0.0, %v702
        %v704 = vpop.f32.mrb[0].mxu0
        %v705 = vpop.f32.mrb[0].mxu0
        %v706 = vadd.f32 0.0, %v705
        %v707 = vpop.f32.mrb[0].mxu0
        %708 = vmatprep.mubr.bf16.mxu0 0
        %709 = vmatmul.mubr.bf16.gmra.mrb[0].mxu0 %v498
        %v710 = vpop.f32.mrb[0].mxu0
        %v711 = vadd.f32 0.0, %v710
        %v712 = vpop.f32.mrb[0].mxu0
        %v713 = vpop.f32.mrb[0].mxu0
        %v714 = vadd.f32 0.0, %v713
        %v715 = vpop.f32.mrb[0].mxu0
        %716 = vmatprep.mubr.bf16.mxu0 0
        %717 = vmatmul.mubr.bf16.gmra.mrb[0].mxu0 %v499
        %v718 = vpop.f32.mrb[0].mxu0
        %v719 = vadd.f32 0.0, %v718
        %v720 = vpop.f32.mrb[0].mxu0
        %v721 = vpop.f32.mrb[0].mxu0
        %v722 = vadd.f32 0.0, %v721
        %v723 = vpop.f32.mrb[0].mxu0
        %724 = vdwg.mxu0
        %v725 = vadd.f32 %v340, %v599
        %v726 = vadd.f32 %v341, %v602
        %v727 = vadd.f32 %v342, %v607
        %v728 = vadd.f32 %v343, %v610
        %v729 = vadd.f32 %v344, %v615
        %v730 = vadd.f32 %v345, %v618
        %v731 = vadd.f32 %v346, %v623
        %v732 = vadd.f32 %v347, %v626
        %v733 = vadd.f32 %v348, %v631
        %v734 = vadd.f32 %v349, %v634
        %v735 = vadd.f32 %v350, %v639
        %v736 = vadd.f32 %v351, %v642
        %v737 = vadd.f32 %v352, %v647
        %v738 = vadd.f32 %v353, %v650
        %v739 = vadd.f32 %v354, %v655
        %v740 = vadd.f32 %v355, %v658
        %v741 = vadd.f32 %v356, %v663
        %v742 = vadd.f32 %v357, %v666
        %v743 = vadd.f32 %v358, %v671
        %v744 = vadd.f32 %v359, %v674
        %v745 = vadd.f32 %v360, %v679
        %v746 = vadd.f32 %v361, %v682
        %v747 = vadd.f32 %v362, %v687
        %v748 = vadd.f32 %v363, %v690
        %v749 = vadd.f32 %v364, %v695
        %v750 = vadd.f32 %v365, %v698
        %v751 = vadd.f32 %v366, %v703
        %v752 = vadd.f32 %v367, %v706
        %v753 = vadd.f32 %v368, %v711
        %v754 = vadd.f32 %v369, %v714
        %v755 = vadd.f32 %v370, %v719
        %v756 = vadd.f32 %v371, %v722
        %757 = vst [vmem:[#allocation2] sm:$0xff] %v725
        %758 = vst [vmem:[#allocation2 + $0x8] sm:$0xff] %v726
        %759 = vst [vmem:[#allocation2 + $0x10] sm:$0xff] %v727
        %760 = vst [vmem:[#allocation2 + $0x18] sm:$0xff] %v728
        %761 = vst [vmem:[#allocation2 + $0x20] sm:$0xff] %v729
        %762 = vst [vmem:[#allocation2 + $0x28] sm:$0xff] %v730
        %763 = vst [vmem:[#allocation2 + $0x30] sm:$0xff] %v731
        %764 = vst [vmem:[#allocation2 + $0x38] sm:$0xff] %v732
        %765 = vst [vmem:[#allocation2 + $0x40] sm:$0xff] %v733
        %766 = vst [vmem:[#allocation2 + $0x48] sm:$0xff] %v734
        %767 = vst [vmem:[#allocation2 + $0x50] sm:$0xff] %v735
        %768 = vst [vmem:[#allocation2 + $0x58] sm:$0xff] %v736
        %769 = vst [vmem:[#allocation2 + $0x60] sm:$0xff] %v737
        %770 = vst [vmem:[#allocation2 + $0x68] sm:$0xff] %v738
        %771 = vst [vmem:[#allocation2 + $0x70] sm:$0xff] %v739
        %772 = vst [vmem:[#allocation2 + $0x78] sm:$0xff] %v740
        %773 = vst [vmem:[#allocation2 + $0x80] sm:$0xff] %v741
        %774 = vst [vmem:[#allocation2 + $0x88] sm:$0xff] %v742
        %775 = vst [vmem:[#allocation2 + $0x90] sm:$0xff] %v743
        %776 = vst [vmem:[#allocation2 + $0x98] sm:$0xff] %v744
        %777 = vst [vmem:[#allocation2 + $0xa0] sm:$0xff] %v745
        %778 = vst [vmem:[#allocation2 + $0xa8] sm:$0xff] %v746
        %779 = vst [vmem:[#allocation2 + $0xb0] sm:$0xff] %v747
        %780 = vst [vmem:[#allocation2 + $0xb8] sm:$0xff] %v748
        %781 = vst [vmem:[#allocation2 + $0xc0] sm:$0xff] %v749
        %782 = vst [vmem:[#allocation2 + $0xc8] sm:$0xff] %v750
        %783 = vst [vmem:[#allocation2 + $0xd0] sm:$0xff] %v751
        %784 = vst [vmem:[#allocation2 + $0xd8] sm:$0xff] %v752
        %785 = vst [vmem:[#allocation2 + $0xe0] sm:$0xff] %v753
        %786 = vst [vmem:[#allocation2 + $0xe8] sm:$0xff] %v754
        %787 = vst [vmem:[#allocation2 + $0xf0] sm:$0xff] %v755
        %788 = vst [vmem:[#allocation2 + $0xf8] sm:$0xff] %v756
        // Predicated region
        $region37: #{bottleneck_forward.6} parent=27 // pred_check
          %p789 = pneg %p304
        $region38: #{bottleneck_forward.6} parent=27 // pred_check_branch
          %791 = sbr.rel (%p789) target = $region40
        $region39: #{bottleneck_forward.6} parent=27 // pred_region
          %v792 = vld [vmem:[#allocation2] sm:$0xff]
          %v793 = vld [vmem:[#allocation2 + $0x8] sm:$0xff]
          %v794 = vld [vmem:[#allocation2 + $0x10] sm:$0xff]
          %v795 = vld [vmem:[#allocation2 + $0x18] sm:$0xff]
          %v796 = vld [vmem:[#allocation2 + $0x20] sm:$0xff]
          %v797 = vld [vmem:[#allocation2 + $0x28] sm:$0xff]
          %v798 = vld [vmem:[#allocation2 + $0x30] sm:$0xff]
          %v799 = vld [vmem:[#allocation2 + $0x38] sm:$0xff]
          %v800 = vld [vmem:[#allocation2 + $0x40] sm:$0xff]
          %v801 = vld [vmem:[#allocation2 + $0x48] sm:$0xff]
          %v802 = vld [vmem:[#allocation2 + $0x50] sm:$0xff]
          %v803 = vld [vmem:[#allocation2 + $0x58] sm:$0xff]
          %v804 = vld [vmem:[#allocation2 + $0x60] sm:$0xff]
          %v805 = vld [vmem:[#allocation2 + $0x68] sm:$0xff]
          %v806 = vld [vmem:[#allocation2 + $0x70] sm:$0xff]
          %v807 = vld [vmem:[#allocation2 + $0x78] sm:$0xff]
          %v808 = vld [vmem:[#allocation2 + $0x80] sm:$0xff]
          %v809 = vld [vmem:[#allocation2 + $0x88] sm:$0xff]
          %v810 = vld [vmem:[#allocation2 + $0x90] sm:$0xff]
          %v811 = vld [vmem:[#allocation2 + $0x98] sm:$0xff]
          %v812 = vld [vmem:[#allocation2 + $0xa0] sm:$0xff]
          %v813 = vld [vmem:[#allocation2 + $0xa8] sm:$0xff]
          %v814 = vld [vmem:[#allocation2 + $0xb0] sm:$0xff]
          %v815 = vld [vmem:[#allocation2 + $0xb8] sm:$0xff]
          %v816 = vld [vmem:[#allocation2 + $0xc0] sm:$0xff]
          %v817 = vld [vmem:[#allocation2 + $0xc8] sm:$0xff]
          %v818 = vld [vmem:[#allocation2 + $0xd0] sm:$0xff]
          %v819 = vld [vmem:[#allocation2 + $0xd8] sm:$0xff]
          %v820 = vld [vmem:[#allocation2 + $0xe0] sm:$0xff]
          %v821 = vld [vmem:[#allocation2 + $0xe8] sm:$0xff]
          %v822 = vld [vmem:[#allocation2 + $0xf0] sm:$0xff]
          %v823 = vld [vmem:[#allocation2 + $0xf8] sm:$0xff]
          %v824 = vpack.c.bf16 %v793, %v792
          %v825 = vpack.c.bf16 %v795, %v794
          %v826 = vpack.c.bf16 %v797, %v796
          %v827 = vpack.c.bf16 %v799, %v798
          %v828 = vpack.c.bf16 %v801, %v800
          %v829 = vpack.c.bf16 %v803, %v802
          %v830 = vpack.c.bf16 %v805, %v804
          %v831 = vpack.c.bf16 %v807, %v806
          %v832 = vpack.c.bf16 %v809, %v808
          %v833 = vpack.c.bf16 %v811, %v810
          %v834 = vpack.c.bf16 %v813, %v812
          %v835 = vpack.c.bf16 %v815, %v814
          %v836 = vpack.c.bf16 %v817, %v816
          %v837 = vpack.c.bf16 %v819, %v818
          %v838 = vpack.c.bf16 %v821, %v820
          %v839 = vpack.c.bf16 %v823, %v822
          %v856 = vunpack.c.l.b16 %v824
          %v857 = vunpack.c.h.b16 %v824
          %v858 = vunpack.c.l.b16 %v825
          %v859 = vunpack.c.h.b16 %v825
          %v860 = vunpack.c.l.b16 %v826
          %v861 = vunpack.c.h.b16 %v826
          %v862 = vunpack.c.l.b16 %v827
          %v863 = vunpack.c.h.b16 %v827
          %v864 = vunpack.c.l.b16 %v828
          %v865 = vunpack.c.h.b16 %v828
          %v866 = vunpack.c.l.b16 %v829
          %v867 = vunpack.c.h.b16 %v829
          %v868 = vunpack.c.l.b16 %v830
          %v869 = vunpack.c.h.b16 %v830
          %v870 = vunpack.c.l.b16 %v831
          %v871 = vunpack.c.h.b16 %v831
          %v872 = vunpack.c.l.b16 %v832
          %v873 = vunpack.c.h.b16 %v832
          %v874 = vunpack.c.l.b16 %v833
          %v875 = vunpack.c.h.b16 %v833
          %v876 = vunpack.c.l.b16 %v834
          %v877 = vunpack.c.h.b16 %v834
          %v878 = vunpack.c.l.b16 %v835
          %v879 = vunpack.c.h.b16 %v835
          %v880 = vunpack.c.l.b16 %v836
          %v881 = vunpack.c.h.b16 %v836
          %v882 = vunpack.c.l.b16 %v837
          %v883 = vunpack.c.h.b16 %v837
          %v884 = vunpack.c.l.b16 %v838
          %v885 = vunpack.c.h.b16 %v838
          %v886 = vunpack.c.l.b16 %v839
          %v887 = vunpack.c.h.b16 %v839
          %v888 = vpack.c.b16 %v856, %v856
          %v889 = vpack.c.b16 %v857, %v857
          %v890 = vpack.c.b16 %v858, %v858
          %v891 = vpack.c.b16 %v859, %v859
          %v892 = vpack.c.b16 %v860, %v860
          %v893 = vpack.c.b16 %v861, %v861
          %v894 = vpack.c.b16 %v862, %v862
          %v895 = vpack.c.b16 %v863, %v863
          %v896 = vpack.c.b16 %v864, %v864
          %v897 = vpack.c.b16 %v865, %v865
          %v898 = vpack.c.b16 %v866, %v866
          %v899 = vpack.c.b16 %v867, %v867
          %v900 = vpack.c.b16 %v868, %v868
          %v901 = vpack.c.b16 %v869, %v869
          %v902 = vpack.c.b16 %v870, %v870
          %v903 = vpack.c.b16 %v871, %v871
          %v904 = vpack.c.b16 %v872, %v872
          %v905 = vpack.c.b16 %v873, %v873
          %v906 = vpack.c.b16 %v874, %v874
          %v907 = vpack.c.b16 %v875, %v875
          %v908 = vpack.c.b16 %v876, %v876
          %v909 = vpack.c.b16 %v877, %v877
          %v910 = vpack.c.b16 %v878, %v878
          %v911 = vpack.c.b16 %v879, %v879
          %v912 = vpack.c.b16 %v880, %v880
          %v913 = vpack.c.b16 %v881, %v881
          %v914 = vpack.c.b16 %v882, %v882
          %v915 = vpack.c.b16 %v883, %v883
          %v916 = vpack.c.b16 %v884, %v884
          %v917 = vpack.c.b16 %v885, %v885
          %v918 = vpack.c.b16 %v886, %v886
          %v919 = vpack.c.b16 %v887, %v887
          %952 = vst [vmem:[%s287] sm:$0xf] %v888
          %953 = vst [vmem:[%s287 + $0x4] sm:$0xf] %v889
          %954 = vst [vmem:[%s287 + $0x8] sm:$0xf] %v890
          %955 = vst [vmem:[%s287 + $0xc] sm:$0xf] %v891
          %956 = vst [vmem:[%s287 + $0x10] sm:$0xf] %v892
          %957 = vst [vmem:[%s287 + $0x14] sm:$0xf] %v893
          %958 = vst [vmem:[%s287 + $0x18] sm:$0xf] %v894
          %959 = vst [vmem:[%s287 + $0x1c] sm:$0xf] %v895
          %960 = vst [vmem:[%s287 + $0x20] sm:$0xf] %v896
          %961 = vst [vmem:[%s287 + $0x24] sm:$0xf] %v897
          %962 = vst [vmem:[%s287 + $0x28] sm:$0xf] %v898
          %963 = vst [vmem:[%s287 + $0x2c] sm:$0xf] %v899
          %964 = vst [vmem:[%s287 + $0x30] sm:$0xf] %v900
          %965 = vst [vmem:[%s287 + $0x34] sm:$0xf] %v901
          %966 = vst [vmem:[%s287 + $0x38] sm:$0xf] %v902
          %967 = vst [vmem:[%s287 + $0x3c] sm:$0xf] %v903
          %968 = vst [vmem:[%s287 + $0x40] sm:$0xf] %v904
          %969 = vst [vmem:[%s287 + $0x44] sm:$0xf] %v905
          %970 = vst [vmem:[%s287 + $0x48] sm:$0xf] %v906
          %971 = vst [vmem:[%s287 + $0x4c] sm:$0xf] %v907
          %972 = vst [vmem:[%s287 + $0x50] sm:$0xf] %v908
          %973 = vst [vmem:[%s287 + $0x54] sm:$0xf] %v909
          %974 = vst [vmem:[%s287 + $0x58] sm:$0xf] %v910
          %975 = vst [vmem:[%s287 + $0x5c] sm:$0xf] %v911
          %976 = vst [vmem:[%s287 + $0x60] sm:$0xf] %v912
          %977 = vst [vmem:[%s287 + $0x64] sm:$0xf] %v913
          %978 = vst [vmem:[%s287 + $0x68] sm:$0xf] %v914
          %979 = vst [vmem:[%s287 + $0x6c] sm:$0xf] %v915
          %980 = vst [vmem:[%s287 + $0x70] sm:$0xf] %v916
          %981 = vst [vmem:[%s287 + $0x74] sm:$0xf] %v917
          %982 = vst [vmem:[%s287 + $0x78] sm:$0xf] %v918
          %983 = vst [vmem:[%s287 + $0x7c] sm:$0xf] %v919
          %v984 = vadd.f32 %v792, %v793
          %v985 = vadd.f32 %v984, %v794
          %v986 = vadd.f32 %v985, %v795
          %v987 = vadd.f32 %v986, %v796
          %v988 = vadd.f32 %v987, %v797
          %v989 = vadd.f32 %v988, %v798
          %v990 = vadd.f32 %v989, %v799
          %v991 = vadd.f32 %v990, %v800
          %v992 = vadd.f32 %v991, %v801
          %v993 = vadd.f32 %v992, %v802
          %v994 = vadd.f32 %v993, %v803
          %v995 = vadd.f32 %v994, %v804
          %v996 = vadd.f32 %v995, %v805
          %v997 = vadd.f32 %v996, %v806
          %v998 = vadd.f32 %v997, %v807
          %v999 = vadd.f32 %v998, %v808
          %v1000 = vadd.f32 %v999, %v809
          %v1001 = vadd.f32 %v1000, %v810
          %v1002 = vadd.f32 %v1001, %v811
          %v1003 = vadd.f32 %v1002, %v812
          %v1004 = vadd.f32 %v1003, %v813
          %v1005 = vadd.f32 %v1004, %v814
          %v1006 = vadd.f32 %v1005, %v815
          %v1007 = vadd.f32 %v1006, %v816
          %v1008 = vadd.f32 %v1007, %v817
          %v1009 = vadd.f32 %v1008, %v818
          %v1010 = vadd.f32 %v1009, %v819
          %v1011 = vadd.f32 %v1010, %v820
          %v1012 = vadd.f32 %v1011, %v821
          %v1013 = vadd.f32 %v1012, %v822
          %v1014 = vadd.f32 %v1013, %v823
          %v1015 = vrot.slane %v1014, 4
          %v1016 = vadd.f32 %v1014, %v1015
          %v1017 = vrot.slane %v1016, 2
          %v1018 = vadd.f32 %v1016, %v1017
          %v1019 = vrot.slane %v1018, 1
          %v1020 = vadd.f32 %v1018, %v1019
          %1021 = vst [vmem:[%s295] sm:$0xff] %v1020
          %v1022 = vmul.f32 %v792, %v792
          %v1023 = vmul.f32 %v793, %v793
          %v1024 = vmul.f32 %v794, %v794
          %v1025 = vmul.f32 %v795, %v795
          %v1026 = vmul.f32 %v796, %v796
          %v1027 = vmul.f32 %v797, %v797
          %v1028 = vmul.f32 %v798, %v798
          %v1029 = vmul.f32 %v799, %v799
          %v1030 = vmul.f32 %v800, %v800
          %v1031 = vmul.f32 %v801, %v801
          %v1032 = vmul.f32 %v802, %v802
          %v1033 = vmul.f32 %v803, %v803
          %v1034 = vmul.f32 %v804, %v804
          %v1035 = vmul.f32 %v805, %v805
          %v1036 = vmul.f32 %v806, %v806
          %v1037 = vmul.f32 %v807, %v807
          %v1038 = vmul.f32 %v808, %v808
          %v1039 = vmul.f32 %v809, %v809
          %v1040 = vmul.f32 %v810, %v810
          %v1041 = vmul.f32 %v811, %v811
          %v1042 = vmul.f32 %v812, %v812
          %v1043 = vmul.f32 %v813, %v813
          %v1044 = vmul.f32 %v814, %v814
          %v1045 = vmul.f32 %v815, %v815
          %v1046 = vmul.f32 %v816, %v816
          %v1047 = vmul.f32 %v817, %v817
          %v1048 = vmul.f32 %v818, %v818
          %v1049 = vmul.f32 %v819, %v819
          %v1050 = vmul.f32 %v820, %v820
          %v1051 = vmul.f32 %v821, %v821
          %v1052 = vmul.f32 %v822, %v822
          %v1053 = vmul.f32 %v823, %v823
          %v1054 = vadd.f32 %v1022, %v1023
          %v1055 = vadd.f32 %v1054, %v1024
          %v1056 = vadd.f32 %v1055, %v1025
          %v1057 = vadd.f32 %v1056, %v1026
          %v1058 = vadd.f32 %v1057, %v1027
          %v1059 = vadd.f32 %v1058, %v1028
          %v1060 = vadd.f32 %v1059, %v1029
          %v1061 = vadd.f32 %v1060, %v1030
          %v1062 = vadd.f32 %v1061, %v1031
          %v1063 = vadd.f32 %v1062, %v1032
          %v1064 = vadd.f32 %v1063, %v1033
          %v1065 = vadd.f32 %v1064, %v1034
          %v1066 = vadd.f32 %v1065, %v1035
          %v1067 = vadd.f32 %v1066, %v1036
          %v1068 = vadd.f32 %v1067, %v1037
          %v1069 = vadd.f32 %v1068, %v1038
          %v1070 = vadd.f32 %v1069, %v1039
          %v1071 = vadd.f32 %v1070, %v1040
          %v1072 = vadd.f32 %v1071, %v1041
          %v1073 = vadd.f32 %v1072, %v1042
          %v1074 = vadd.f32 %v1073, %v1043
          %v1075 = vadd.f32 %v1074, %v1044
          %v1076 = vadd.f32 %v1075, %v1045
          %v1077 = vadd.f32 %v1076, %v1046
          %v1078 = vadd.f32 %v1077, %v1047
          %v1079 = vadd.f32 %v1078, %v1048
          %v1080 = vadd.f32 %v1079, %v1049
          %v1081 = vadd.f32 %v1080, %v1050
          %v1082 = vadd.f32 %v1081, %v1051
          %v1083 = vadd.f32 %v1082, %v1052
          %v1084 = vadd.f32 %v1083, %v1053
          %v1085 = vrot.slane %v1084, 4
          %v1086 = vadd.f32 %v1084, %v1085
          %v1087 = vrot.slane %v1086, 2
          %v1088 = vadd.f32 %v1086, %v1087
          %v1089 = vrot.slane %v1088, 1
          %v1090 = vadd.f32 %v1088, %v1089
          %1091 = vst [vmem:[%s302] sm:$0xff] %v1090
        $region40: #{bottleneck_forward.6} parent=27 // pred_fallthru
          _
        %s1092 = smul.u32 32, %s22
        %p1093 = scmp.lt.s32.totalorder %s1092, 63
        %s1094 = scalar_select %p1093, %s1092, 63
        %p1095 = scmp.lt.s32.totalorder %s23, 0
        %s1096 = scalar_select %p1095, %s23, 0
        %s1097 = sadd.s32 %s1096, %s1094
        %s1098 = smul.addr %s1097, 4
        %s1099 = scalar_lea.vmem %s2, %s1098
        %p1100 = scmp.lt.s32.totalorder %s22, 1
        %s1101 = scalar_select %p1100, %s22, 1
        %p1102 = scmp.lt.s32.totalorder %s23, 0
        %s1103 = scalar_select %p1102, %s23, 0
        %s1104 = sadd.s32 %s1103, %s1101
        %s1105 = smul.addr %s1104, 8
        %s1106 = scalar_lea.vmem %s3, %s1105
        %p1107 = scmp.lt.s32.totalorder %s22, 1
        %s1108 = scalar_select %p1107, %s22, 1
        %p1109 = scmp.lt.s32.totalorder %s23, 0
        %s1110 = scalar_select %p1109, %s23, 0
        %s1111 = sadd.s32 %s1110, %s1108
        %s1112 = smul.addr %s1111, 8
        %s1113 = scalar_lea.vmem %s4, %s1112
        // Predicated region
        $region41: #{bottleneck_forward.6} parent=27 // pred_check
          %p1114 = pneg %p112
        $region42: #{bottleneck_forward.6} parent=27 // pred_check_branch
          %1116 = sbr.rel (%p1114) target = $region44
        $region43: #{bottleneck_forward.6} parent=27 // pred_region
          %s1117 = smul.u32 32, %s22
        $region44: #{bottleneck_forward.6} parent=27 // pred_fallthru
          _
        // Predicated region
        $region45: #{bottleneck_forward.6} parent=27 // pred_check
          %p1118 = pneg %p140
        $region46: #{bottleneck_forward.6} parent=27 // pred_check_branch
          %1120 = sbr.rel (%p1118) target = $region48
        $region47: #{bottleneck_forward.6} parent=27 // pred_region
          _
        $region48: #{bottleneck_forward.6} parent=27 // pred_fallthru
          _
        // Predicated region
        $region49: #{bottleneck_forward.6} parent=27 // pred_check
          %p1121 = pneg %p168
        $region50: #{bottleneck_forward.6} parent=27 // pred_check_branch
          %1123 = sbr.rel (%p1121) target = $region52
        $region51: #{bottleneck_forward.6} parent=27 // pred_region
          _
        $region52: #{bottleneck_forward.6} parent=27 // pred_fallthru
          _
      $region28: #{bottleneck_forward.6} parent=5 // pred_fallthru
        _
      %p1124 = scmp.le.s32.totalorder 2, %s12
      // Predicated region
      $region53: #{bottleneck_forward.6} parent=5 // pred_check
        %p1125 = pneg %p1124
      $region54: #{bottleneck_forward.6} parent=5 // pred_check_branch
        %1127 = sbr.rel (%p1125) target = $region56
      $region55: #{bottleneck_forward.6} parent=5 // pred_region
        %s1128 = ssub.s32 %s12, 2
        // Predicated region
        $region57: #{bottleneck_forward.6} parent=55 // pred_check
          %p1129 = pneg %p118
        $region58: #{bottleneck_forward.6} parent=55 // pred_check_branch
          %1131 = sbr.rel (%p1129) target = $region60
        $region59: #{bottleneck_forward.6} parent=55 // pred_region
          %s1132 = smul.u32 32, %s25
          %p1133 = scmp.lt.s32.totalorder %s1132, 63
          %s1134 = scalar_select %p1133, %s1132, 63
          %p1135 = scmp.lt.s32.totalorder %s26, 0
          %s1136 = scalar_select %p1135, %s26, 0
          %s1137 = sadd.s32 %s1136, %s1134
          %s1138 = smul.addr %s1137, 4
          %s1139 = scalar_lea.vmem %s2, %s1138
        $region60: #{bottleneck_forward.6} parent=55 // pred_fallthru
          _
        // Predicated region
        $region61: #{bottleneck_forward.6} parent=55 // pred_check
          %p1140 = pneg %p146
        $region62: #{bottleneck_forward.6} parent=55 // pred_check_branch
          %1142 = sbr.rel (%p1140) target = $region64
        $region63: #{bottleneck_forward.6} parent=55 // pred_region
          %p1143 = scmp.lt.s32.totalorder %s25, 1
          %s1144 = scalar_select %p1143, %s25, 1
          %p1145 = scmp.lt.s32.totalorder %s26, 0
          %s1146 = scalar_select %p1145, %s26, 0
          %s1147 = sadd.s32 %s1146, %s1144
          %s1148 = smul.addr %s1147, 8
          %s1149 = scalar_lea.vmem %s3, %s1148
        $region64: #{bottleneck_forward.6} parent=55 // pred_fallthru
          _
        // Predicated region
        $region65: #{bottleneck_forward.6} parent=55 // pred_check
          %p1150 = pneg %p174
        $region66: #{bottleneck_forward.6} parent=55 // pred_check_branch
          %1152 = sbr.rel (%p1150) target = $region68
        $region67: #{bottleneck_forward.6} parent=55 // pred_region
          %p1153 = scmp.lt.s32.totalorder %s25, 1
          %s1154 = scalar_select %p1153, %s25, 1
          %p1155 = scmp.lt.s32.totalorder %s26, 0
          %s1156 = scalar_select %p1155, %s26, 0
          %s1157 = sadd.s32 %s1156, %s1154
          %s1158 = smul.addr %s1157, 8
          %s1159 = scalar_lea.vmem %s4, %s1158
        $region68: #{bottleneck_forward.6} parent=55 // pred_fallthru
          _
      $region56: #{bottleneck_forward.6} parent=5 // pred_fallthru
        _
    $region6: #{bottleneck_forward.6} parent=1 // loop_footer
      %s16 = sadd.s32 1, %s12
    $region7: #{bottleneck_forward.6} parent=1 // loop_footer_branch
      %11 = sbr.rel target = $region3
    $region8: #{bottleneck_forward.6} parent=1 // loop_exit
      _
    %1160 = vsyncpa [#allocation4], 1
    %s1161 = scalar_lea.sflag [#allocation4], 1
    %1162 = vsyncpa %s1161, 1

// kernel: bottleneck_forward.10
$region0: #{bottleneck_forward.10}
  #allocation0 [shape = 'u32[]', space=smem, size = 0x4, offset = 0x4, fixed_abs, tag = 'smem constant byte address 0x4 - core index']
  #allocation1 [shape = 'u32[144,128]{1,0:T(1,128)}', space=vmem, size = 0x12000, scoped, tag = 'internal scratch']
  #allocation2 [shape = 'f32[256,128]{1,0:T(8,128)}', space=vmem, size = 0x20000, scoped, tag = 'scratch operand']
  %s0 = inlined_call_operand.vmem [shape: bf16[512,128], index: 0, kind: input, shape index: {}]
  %s1 = inlined_call_operand.vmem [shape: bf16[128,128], index: 1, kind: input, shape index: {}]
  %s2 = inlined_call_operand.vmem [shape: bf16[512,128], index: 2, kind: output, shape index: {0}]
  %s3 = inlined_call_operand.vmem [shape: f32[16,128], index: 3, kind: output, shape index: {1}]
  %s4 = inlined_call_operand.vmem [shape: f32[16,128], index: 4, kind: output, shape index: {2}]
  %5 = xla_tuple %s2, %s3, %s4
  %s6 = sld [smem:[#allocation0]]
  $region65: #{bottleneck_forward.10} parent=0
    _
  %s8 = ssub.s32 1, %s6
  %s9 = scalar_select 0, %s8, %s6
  loop: start=0, step=1, limit=4
  $region2: #{bottleneck_forward.10} parent=0 // loop_pre_header
    _
  $region3: #{bottleneck_forward.10} parent=0 // loop_header
    %s11 = sphi 0, %s15
    %p12 = scmp.ge.s32.totalorder %s11, 4
    %s18 = sphi 0, %s37
    %s19 = sphi 0, %s33
    %s20 = sphi 0, %s29
    %s21 = sphi 0, %s18
    %s22 = sphi 0, %s19
    %s23 = sphi 0, %s20
    %s24 = sphi 0, %s21
    %s25 = sphi 0, %s22
    %s26 = sphi 0, %s23
    %s42 = sphi 0, %s44
    %s45 = sphi 0, %s42
    %s46 = sphi 0, %s45
    %s62 = sphi 0, %s46
    %s70 = sphi 0, %s72
    %s73 = sphi 0, %s70
    %s74 = sphi 0, %s73
    %s90 = sphi 0, %s74
    %s98 = sphi 0, %s100
    %s101 = sphi 0, %s98
    %s102 = sphi 0, %s101
    %s118 = sphi 0, %s102
    %s126 = sphi 0, %s128
    %s129 = sphi 0, %s126
    %s130 = sphi 0, %s129
    %s146 = sphi 0, %s130
    %s154 = sphi 0, %s156
    %s157 = sphi 0, %s154
    %s158 = sphi 0, %s157
    %s174 = sphi 0, %s158
  $region4: #{bottleneck_forward.10} parent=0 // loop_header_branch
    %14 = sbr.rel (%p12) target = $region8
  $region5: #{bottleneck_forward.10} parent=0 // loop_body
    %s16 = ssub.s32 %s11, 1
    %s17 = ssub.s32 %s11, 2
    %s27 = sadd.s32 1, %s20
    %p28 = scmp.ge.s32.totalorder %s27, 1
    %s29 = scalar_select %p28, 0, %s27
    %s30 = sadd.s32 1, %s19
    %s31 = scalar_select %p28, %s30, %s19
    %p32 = scmp.ge.s32.totalorder %s31, 1
    %s33 = scalar_select %p32, 0, %s31
    %s34 = sadd.s32 1, %s18
    %s35 = scalar_select %p32, %s34, %s18
    %p36 = scmp.ge.s32.totalorder %s35, 2
    %s37 = scalar_select %p36, 0, %s35
    %s38 = ssub.s32 %s18, %s37
    %s39 = ssub.s32 %s20, %s29
    %s40 = sor.u32 %s38, %s39
    %p41 = scmp.eq.s32.totalorder %s40, 0
    %s43 = sadd.s32 %s42, 1
    %s44 = scalar_select %p41, %s42, %s43
    %p47 = pneg %p41
    %p48 = scmp.eq.s32.totalorder %s11, 1
    %p49 = por %p47, %p48
    %p50 = scmp.ne.s32.totalorder %s42, %s45
    %p51 = scmp.eq.s32.totalorder %s11, 0
    %p52 = por %p50, %p51
    %p53 = scmp.ne.s32.totalorder %s42, %s45
    %p54 = scmp.eq.s32.totalorder %s16, 1
    %p55 = por %p53, %p54
    %p56 = scmp.ne.s32.totalorder %s45, %s46
    %p57 = scmp.eq.s32.totalorder %s16, 0
    %p58 = por %p56, %p57
    %p59 = scmp.ne.s32.totalorder %s45, %s46
    %p60 = scmp.eq.s32.totalorder %s17, 1
    %p61 = por %p59, %p60
    %p63 = scmp.ne.s32.totalorder %s46, %s62
    %p64 = scmp.eq.s32.totalorder %s17, 0
    %p65 = por %p63, %p64
    %s66 = ssub.s32 %s20, %s29
    %s67 = ssub.s32 %s19, %s33
    %s68 = sor.u32 %s66, %s67
    %p69 = scmp.eq.s32.totalorder %s68, 0
    %s71 = sadd.s32 %s70, 1
    %s72 = scalar_select %p69, %s70, %s71
    %p75 = pneg %p69
    %p76 = scmp.eq.s32.totalorder %s11, 1
    %p77 = por %p75, %p76
    %p78 = scmp.ne.s32.totalorder %s70, %s73
    %p79 = scmp.eq.s32.totalorder %s11, 0
    %p80 = por %p78, %p79
    %p81 = scmp.ne.s32.totalorder %s70, %s73
    %p82 = scmp.eq.s32.totalorder %s16, 1
    %p83 = por %p81, %p82
    %p84 = scmp.ne.s32.totalorder %s73, %s74
    %p85 = scmp.eq.s32.totalorder %s16, 0
    %p86 = por %p84, %p85
    %p87 = scmp.ne.s32.totalorder %s73, %s74
    %p88 = scmp.eq.s32.totalorder %s17, 1
    %p89 = por %p87, %p88
    %p91 = scmp.ne.s32.totalorder %s74, %s90
    %p92 = scmp.eq.s32.totalorder %s17, 0
    %p93 = por %p91, %p92
    %s94 = ssub.s32 %s18, %s37
    %s95 = ssub.s32 %s19, %s33
    %s96 = sor.u32 %s94, %s95
    %p97 = scmp.eq.s32.totalorder %s96, 0
    %s99 = sadd.s32 %s98, 1
    %s100 = scalar_select %p97, %s98, %s99
    %p103 = pneg %p97
    %p104 = scmp.eq.s32.totalorder %s11, 1
    %p105 = por %p103, %p104
    %p106 = scmp.ne.s32.totalorder %s98, %s101
    %p107 = scmp.eq.s32.totalorder %s11, 0
    %p108 = por %p106, %p107
    %p109 = scmp.ne.s32.totalorder %s98, %s101
    %p110 = scmp.eq.s32.totalorder %s16, 1
    %p111 = por %p109, %p110
    %p112 = scmp.ne.s32.totalorder %s101, %s102
    %p113 = scmp.eq.s32.totalorder %s16, 0
    %p114 = por %p112, %p113
    %p115 = scmp.ne.s32.totalorder %s101, %s102
    %p116 = scmp.eq.s32.totalorder %s17, 1
    %p117 = por %p115, %p116
    %p119 = scmp.ne.s32.totalorder %s102, %s118
    %p120 = scmp.eq.s32.totalorder %s17, 0
    %p121 = por %p119, %p120
    %s122 = ssub.s32 %s18, %s37
    %s123 = ssub.s32 %s19, %s33
    %s124 = sor.u32 %s122, %s123
    %p125 = scmp.eq.s32.totalorder %s124, 0
    %s127 = sadd.s32 %s126, 1
    %s128 = scalar_select %p125, %s126, %s127
    %p131 = pneg %p125
    %p132 = scmp.eq.s32.totalorder %s11, 1
    %p133 = por %p131, %p132
    %p134 = scmp.ne.s32.totalorder %s126, %s129
    %p135 = scmp.eq.s32.totalorder %s11, 0
    %p136 = por %p134, %p135
    %p137 = scmp.ne.s32.totalorder %s126, %s129
    %p138 = scmp.eq.s32.totalorder %s16, 1
    %p139 = por %p137, %p138
    %p140 = scmp.ne.s32.totalorder %s129, %s130
    %p141 = scmp.eq.s32.totalorder %s16, 0
    %p142 = por %p140, %p141
    %p143 = scmp.ne.s32.totalorder %s129, %s130
    %p144 = scmp.eq.s32.totalorder %s17, 1
    %p145 = por %p143, %p144
    %p147 = scmp.ne.s32.totalorder %s130, %s146
    %p148 = scmp.eq.s32.totalorder %s17, 0
    %p149 = por %p147, %p148
    %s150 = ssub.s32 %s18, %s37
    %s151 = ssub.s32 %s19, %s33
    %s152 = sor.u32 %s150, %s151
    %p153 = scmp.eq.s32.totalorder %s152, 0
    %s155 = sadd.s32 %s154, 1
    %s156 = scalar_select %p153, %s154, %s155
    %p159 = pneg %p153
    %p160 = scmp.eq.s32.totalorder %s11, 1
    %p161 = por %p159, %p160
    %p162 = scmp.ne.s32.totalorder %s154, %s157
    %p163 = scmp.eq.s32.totalorder %s11, 0
    %p164 = por %p162, %p163
    %p165 = scmp.ne.s32.totalorder %s154, %s157
    %p166 = scmp.eq.s32.totalorder %s16, 1
    %p167 = por %p165, %p166
    %p168 = scmp.ne.s32.totalorder %s157, %s158
    %p169 = scmp.eq.s32.totalorder %s16, 0
    %p170 = por %p168, %p169
    %p171 = scmp.ne.s32.totalorder %s157, %s158
    %p172 = scmp.eq.s32.totalorder %s17, 1
    %p173 = por %p171, %p172
    %p175 = scmp.ne.s32.totalorder %s158, %s174
    %p176 = scmp.eq.s32.totalorder %s17, 0
    %p177 = por %p175, %p176
    %p178 = scmp.le.s32.totalorder 1, %s11
    %p179 = scmp.lt.s32.totalorder %s11, 3
    %p180 = pnand %p178, %p179
    %p181 = pneg %p180
    // Predicated region
    $region9: #{bottleneck_forward.10} parent=5 // pred_check
      _
    $region10: #{bottleneck_forward.10} parent=5 // pred_check_branch
      %183 = sbr.rel (%p180) target = $region12
    $region11: #{bottleneck_forward.10} parent=5 // pred_region
      %s184 = ssub.s32 %s11, 1
      // Predicated region
      $region13: #{bottleneck_forward.10} parent=11 // pred_check
        %p185 = pneg %p86
      $region14: #{bottleneck_forward.10} parent=11 // pred_check_branch
        %187 = sbr.rel (%p185) target = $region16
      $region15: #{bottleneck_forward.10} parent=11 // pred_region
        %s188 = smul.u32 16, %s23
        %p189 = scmp.lt.s32.totalorder %s188, 15
        %s190 = scalar_select %p189, %s188, 15
        %p191 = scmp.lt.s32.totalorder %s22, 0
        %s192 = scalar_select %p191, %s22, 0
        %s193 = sadd.s32 %s192, %s190
        %s194 = smul.addr %s193, 4
        %s195 = scalar_lea.vmem %s1, %s194
        %s196 = smul.u32 16, %s23
      $region16: #{bottleneck_forward.10} parent=11 // pred_fallthru
        _
    $region12: #{bottleneck_forward.10} parent=5 // pred_fallthru
      _
    %p197 = scmp.lt.s32.totalorder %s11, 2
    // Predicated region
    $region17: #{bottleneck_forward.10} parent=5 // pred_check
      %p198 = pneg %p197
    $region18: #{bottleneck_forward.10} parent=5 // pred_check_branch
      %200 = sbr.rel (%p198) target = $region20
    $region19: #{bottleneck_forward.10} parent=5 // pred_region
      // Predicated region
      $region21: #{bottleneck_forward.10} parent=19 // pred_check
        %p201 = pneg %p52
      $region22: #{bottleneck_forward.10} parent=19 // pred_check_branch
        %203 = sbr.rel (%p201) target = $region24
      $region23: #{bottleneck_forward.10} parent=19 // pred_region
        %s204 = smul.u32 32, %s18
        %p205 = scmp.lt.s32.totalorder %s204, 63
        %s206 = scalar_select %p205, %s204, 63
        %p207 = scmp.lt.s32.totalorder %s20, 0
        %s208 = scalar_select %p207, %s20, 0
        %s209 = sadd.s32 %s208, %s206
        %s210 = smul.addr %s209, 4
        %s211 = scalar_lea.vmem %s0, %s210
        %s212 = smul.u32 32, %s18
      $region24: #{bottleneck_forward.10} parent=19 // pred_fallthru
        _
    $region20: #{bottleneck_forward.10} parent=5 // pred_fallthru
      _
    %p213 = scmp.le.s32.totalorder 1, %s11
    %p214 = scmp.lt.s32.totalorder %s11, 3
    %p215 = pnand %p213, %p214
    %p216 = pneg %p215
    // Predicated region
    $region25: #{bottleneck_forward.10} parent=5 // pred_check
      _
    $region26: #{bottleneck_forward.10} parent=5 // pred_check_branch
      %218 = sbr.rel (%p215) target = $region28
    $region27: #{bottleneck_forward.10} parent=5 // pred_region
      %s219 = ssub.s32 %s11, 1
      %s220 = smul.u32 32, %s21
      %p221 = scmp.lt.s32.totalorder %s220, 63
      %s222 = scalar_select %p221, %s220, 63
      %p223 = scmp.lt.s32.totalorder %s23, 0
      %s224 = scalar_select %p223, %s23, 0
      %s225 = sadd.s32 %s224, %s222
      %s226 = smul.addr %s225, 4
      %s227 = scalar_lea.vmem %s0, %s226
      %p228 = pneg %p58
      %p229 = pneg %p55
      %s230 = smul.u32 16, %s23
      %p231 = scmp.lt.s32.totalorder %s230, 15
      %s232 = scalar_select %p231, %s230, 15
      %p233 = scmp.lt.s32.totalorder %s22, 0
      %s234 = scalar_select %p233, %s22, 0
      %s235 = sadd.s32 %s234, %s232
      %s236 = smul.addr %s235, 4
      %s237 = scalar_lea.vmem %s1, %s236
      %p238 = pneg %p86
      %p239 = pneg %p83
      %p240 = pneg %p114
      %p241 = pneg %p111
      %s242 = smul.u32 32, %s21
      %p243 = scmp.lt.s32.totalorder %s242, 63
      %s244 = scalar_select %p243, %s242, 63
      %p245 = scmp.lt.s32.totalorder %s22, 0
      %s246 = scalar_select %p245, %s22, 0
      %s247 = sadd.s32 %s246, %s244
      %s248 = smul.addr %s247, 4
      %s249 = scalar_lea.vmem %s2, %s248
      %p250 = pneg %p142
      %p251 = pneg %p139
      %p252 = scmp.lt.s32.totalorder %s21, 1
      %s253 = scalar_select %p252, %s21, 1
      %p254 = scmp.lt.s32.totalorder %s22, 0
      %s255 = scalar_select %p254, %s22, 0
      %s256 = sadd.s32 %s255, %s253
      %s257 = smul.addr %s256, 8
      %s258 = scalar_lea.vmem %s3, %s257
      %p259 = pneg %p170
      %p260 = pneg %p167
      %p261 = scmp.lt.s32.totalorder %s21, 1
      %s262 = scalar_select %p261, %s21, 1
      %p263 = scmp.lt.s32.totalorder %s22, 0
      %s264 = scalar_select %p263, %s22, 0
      %s265 = sadd.s32 %s264, %s262
      %s266 = smul.addr %s265, 8
      %s267 = scalar_lea.vmem %s4, %s266
      %s268 = smul.u32 32, %s21
      %p269 = scmp.lt.s32.totalorder %s268, 63
      %s270 = scalar_select %p269, %s268, 63
      %p271 = scmp.lt.s32.totalorder %s23, 0
      %s272 = scalar_select %p271, %s23, 0
      %s273 = sadd.s32 %s272, %s270
      %s274 = smul.addr %s273, 4
      %s275 = scalar_lea.vmem %s0, %s274
      %s276 = smul.u32 32, %s21
      %s277 = smul.u32 16, %s23
      %p278 = scmp.lt.s32.totalorder %s277, 15
      %s279 = scalar_select %p278, %s277, 15
      %p280 = scmp.lt.s32.totalorder %s22, 0
      %s281 = scalar_select %p280, %s22, 0
      %s282 = sadd.s32 %s281, %s279
      %s283 = smul.addr %s282, 4
      %s284 = scalar_lea.vmem %s1, %s283
      %s285 = smul.u32 16, %s23
      %s286 = smul.u32 32, %s21
      %p287 = scmp.lt.s32.totalorder %s286, 63
      %s288 = scalar_select %p287, %s286, 63
      %p289 = scmp.lt.s32.totalorder %s22, 0
      %s290 = scalar_select %p289, %s22, 0
      %s291 = sadd.s32 %s290, %s288
      %s292 = smul.addr %s291, 4
      %s293 = scalar_lea.vmem %s2, %s292
      %s294 = smul.u32 32, %s21
      %p295 = scmp.lt.s32.totalorder %s21, 1
      %s296 = scalar_select %p295, %s21, 1
      %p297 = scmp.lt.s32.totalorder %s22, 0
      %s298 = scalar_select %p297, %s22, 0
      %s299 = sadd.s32 %s298, %s296
      %s300 = smul.addr %s299, 8
      %s301 = scalar_lea.vmem %s3, %s300
      %p302 = scmp.lt.s32.totalorder %s21, 1
      %s303 = scalar_select %p302, %s21, 1
      %p304 = scmp.lt.s32.totalorder %s22, 0
      %s305 = scalar_select %p304, %s22, 0
      %s306 = sadd.s32 %s305, %s303
      %s307 = smul.addr %s306, 8
      %s308 = scalar_lea.vmem %s4, %s307
      %p310 = scmp.eq.s32.totalorder %s23, 0
      // Predicated region
      $region29: #{bottleneck_forward.10} parent=27 // pred_check
        %p311 = pneg %p310
      $region30: #{bottleneck_forward.10} parent=27 // pred_check_branch
        %313 = sbr.rel (%p311) target = $region32
      $region31: #{bottleneck_forward.10} parent=27 // pred_region
        %314 = vst [vmem:[#allocation2] sm:$0xff] 0.0
        %315 = vst [vmem:[#allocation2 + $0x8] sm:$0xff] 0.0
        %316 = vst [vmem:[#allocation2 + $0x10] sm:$0xff] 0.0
        %317 = vst [vmem:[#allocation2 + $0x18] sm:$0xff] 0.0
        %318 = vst [vmem:[#allocation2 + $0x20] sm:$0xff] 0.0
        %319 = vst [vmem:[#allocation2 + $0x28] sm:$0xff] 0.0
        %320 = vst [vmem:[#allocation2 + $0x30] sm:$0xff] 0.0
        %321 = vst [vmem:[#allocation2 + $0x38] sm:$0xff] 0.0
        %322 = vst [vmem:[#allocation2 + $0x40] sm:$0xff] 0.0
        %323 = vst [vmem:[#allocation2 + $0x48] sm:$0xff] 0.0
        %324 = vst [vmem:[#allocation2 + $0x50] sm:$0xff] 0.0
        %325 = vst [vmem:[#allocation2 + $0x58] sm:$0xff] 0.0
        %326 = vst [vmem:[#allocation2 + $0x60] sm:$0xff] 0.0
        %327 = vst [vmem:[#allocation2 + $0x68] sm:$0xff] 0.0
        %328 = vst [vmem:[#allocation2 + $0x70] sm:$0xff] 0.0
        %329 = vst [vmem:[#allocation2 + $0x78] sm:$0xff] 0.0
        %330 = vst [vmem:[#allocation2 + $0x80] sm:$0xff] 0.0
        %331 = vst [vmem:[#allocation2 + $0x88] sm:$0xff] 0.0
        %332 = vst [vmem:[#allocation2 + $0x90] sm:$0xff] 0.0
        %333 = vst [vmem:[#allocation2 + $0x98] sm:$0xff] 0.0
        %334 = vst [vmem:[#allocation2 + $0xa0] sm:$0xff] 0.0
        %335 = vst [vmem:[#allocation2 + $0xa8] sm:$0xff] 0.0
        %336 = vst [vmem:[#allocation2 + $0xb0] sm:$0xff] 0.0
        %337 = vst [vmem:[#allocation2 + $0xb8] sm:$0xff] 0.0
        %338 = vst [vmem:[#allocation2 + $0xc0] sm:$0xff] 0.0
        %339 = vst [vmem:[#allocation2 + $0xc8] sm:$0xff] 0.0
        %340 = vst [vmem:[#allocation2 + $0xd0] sm:$0xff] 0.0
        %341 = vst [vmem:[#allocation2 + $0xd8] sm:$0xff] 0.0
        %342 = vst [vmem:[#allocation2 + $0xe0] sm:$0xff] 0.0
        %343 = vst [vmem:[#allocation2 + $0xe8] sm:$0xff] 0.0
        %344 = vst [vmem:[#allocation2 + $0xf0] sm:$0xff] 0.0
        %345 = vst [vmem:[#allocation2 + $0xf8] sm:$0xff] 0.0
      $region32: #{bottleneck_forward.10} parent=27 // pred_fallthru
        _
      %v346 = vld [vmem:[#allocation2] sm:$0xff]
      %v347 = vld [vmem:[#allocation2 + $0x8] sm:$0xff]
      %v348 = vld [vmem:[#allocation2 + $0x10] sm:$0xff]
      %v349 = vld [vmem:[#allocation2 + $0x18] sm:$0xff]
      %v350 = vld [vmem:[#allocation2 + $0x20] sm:$0xff]
      %v351 = vld [vmem:[#allocation2 + $0x28] sm:$0xff]
      %v352 = vld [vmem:[#allocation2 + $0x30] sm:$0xff]
      %v353 = vld [vmem:[#allocation2 + $0x38] sm:$0xff]
      %v354 = vld [vmem:[#allocation2 + $0x40] sm:$0xff]
      %v355 = vld [vmem:[#allocation2 + $0x48] sm:$0xff]
      %v356 = vld [vmem:[#allocation2 + $0x50] sm:$0xff]
      %v357 = vld [vmem:[#allocation2 + $0x58] sm:$0xff]
      %v358 = vld [vmem:[#allocation2 + $0x60] sm:$0xff]
      %v359 = vld [vmem:[#allocation2 + $0x68] sm:$0xff]
      %v360 = vld [vmem:[#allocation2 + $0x70] sm:$0xff]
      %v361 = vld [vmem:[#allocation2 + $0x78] sm:$0xff]
      %v362 = vld [vmem:[#allocation2 + $0x80] sm:$0xff]
      %v363 = vld [vmem:[#allocation2 + $0x88] sm:$0xff]
      %v364 = vld [vmem:[#allocation2 + $0x90] sm:$0xff]
      %v365 = vld [vmem:[#allocation2 + $0x98] sm:$0xff]
      %v366 = vld [vmem:[#allocation2 + $0xa0] sm:$0xff]
      %v367 = vld [vmem:[#allocation2 + $0xa8] sm:$0xff]
      %v368 = vld [vmem:[#allocation2 + $0xb0] sm:$0xff]
      %v369 = vld [vmem:[#allocation2 + $0xb8] sm:$0xff]
      %v370 = vld [vmem:[#allocation2 + $0xc0] sm:$0xff]
      %v371 = vld [vmem:[#allocation2 + $0xc8] sm:$0xff]
      %v372 = vld [vmem:[#allocation2 + $0xd0] sm:$0xff]
      %v373 = vld [vmem:[#allocation2 + $0xd8] sm:$0xff]
      %v374 = vld [vmem:[#allocation2 + $0xe0] sm:$0xff]
      %v375 = vld [vmem:[#allocation2 + $0xe8] sm:$0xff]
      %v376 = vld [vmem:[#allocation2 + $0xf0] sm:$0xff]
      %v377 = vld [vmem:[#allocation2 + $0xf8] sm:$0xff]
      %v378 = vld [vmem:[%s275] sm:$0xf]
      %v379 = vld [vmem:[%s275 + $0x4] sm:$0xf]
      %v380 = vld [vmem:[%s275 + $0x8] sm:$0xf]
      %v381 = vld [vmem:[%s275 + $0xc] sm:$0xf]
      %v382 = vld [vmem:[%s275 + $0x10] sm:$0xf]
      %v383 = vld [vmem:[%s275 + $0x14] sm:$0xf]
      %v384 = vld [vmem:[%s275 + $0x18] sm:$0xf]
      %v385 = vld [vmem:[%s275 + $0x1c] sm:$0xf]
      %v386 = vld [vmem:[%s275 + $0x20] sm:$0xf]
      %v387 = vld [vmem:[%s275 + $0x24] sm:$0xf]
      %v388 = vld [vmem:[%s275 + $0x28] sm:$0xf]
      %v389 = vld [vmem:[%s275 + $0x2c] sm:$0xf]
      %v390 = vld [vmem:[%s275 + $0x30] sm:$0xf]
      %v391 = vld [vmem:[%s275 + $0x34] sm:$0xf]
      %v392 = vld [vmem:[%s275 + $0x38] sm:$0xf]
      %v393 = vld [vmem:[%s275 + $0x3c] sm:$0xf]
      %v394 = vld [vmem:[%s275 + $0x40] sm:$0xf]
      %v395 = vld [vmem:[%s275 + $0x44] sm:$0xf]
      %v396 = vld [vmem:[%s275 + $0x48] sm:$0xf]
      %v397 = vld [vmem:[%s275 + $0x4c] sm:$0xf]
      %v398 = vld [vmem:[%s275 + $0x50] sm:$0xf]
      %v399 = vld [vmem:[%s275 + $0x54] sm:$0xf]
      %v400 = vld [vmem:[%s275 + $0x58] sm:$0xf]
      %v401 = vld [vmem:[%s275 + $0x5c] sm:$0xf]
      %v402 = vld [vmem:[%s275 + $0x60] sm:$0xf]
      %v403 = vld [vmem:[%s275 + $0x64] sm:$0xf]
      %v404 = vld [vmem:[%s275 + $0x68] sm:$0xf]
      %v405 = vld [vmem:[%s275 + $0x6c] sm:$0xf]
      %v406 = vld [vmem:[%s275 + $0x70] sm:$0xf]
      %v407 = vld [vmem:[%s275 + $0x74] sm:$0xf]
      %v408 = vld [vmem:[%s275 + $0x78] sm:$0xf]
      %v409 = vld [vmem:[%s275 + $0x7c] sm:$0xf]
      %v410 = vld [vmem:[%s284] sm:$0xf]
      %v411 = vld [vmem:[%s284 + $0x4] sm:$0xf]
      %v412 = vld [vmem:[%s284 + $0x8] sm:$0xf]
      %v413 = vld [vmem:[%s284 + $0xc] sm:$0xf]
      %v414 = vld [vmem:[%s284 + $0x10] sm:$0xf]
      %v415 = vld [vmem:[%s284 + $0x14] sm:$0xf]
      %v416 = vld [vmem:[%s284 + $0x18] sm:$0xf]
      %v417 = vld [vmem:[%s284 + $0x1c] sm:$0xf]
      %v418 = vld [vmem:[%s284 + $0x20] sm:$0xf]
      %v419 = vld [vmem:[%s284 + $0x24] sm:$0xf]
      %v420 = vld [vmem:[%s284 + $0x28] sm:$0xf]
      %v421 = vld [vmem:[%s284 + $0x2c] sm:$0xf]
      %v422 = vld [vmem:[%s284 + $0x30] sm:$0xf]
      %v423 = vld [vmem:[%s284 + $0x34] sm:$0xf]
      %v424 = vld [vmem:[%s284 + $0x38] sm:$0xf]
      %v425 = vld [vmem:[%s284 + $0x3c] sm:$0xf]
      %v458 = vunpack.c.l.b16 %v378
      %v459 = vunpack.c.l.b16 %v379
      %v460 = vunpack.c.l.b16 %v380
      %v461 = vunpack.c.l.b16 %v381
      %v462 = vunpack.c.l.b16 %v382
      %v463 = vunpack.c.l.b16 %v383
      %v464 = vunpack.c.l.b16 %v384
      %v465 = vunpack.c.l.b16 %v385
      %v466 = vunpack.c.l.b16 %v386
      %v467 = vunpack.c.l.b16 %v387
      %v468 = vunpack.c.l.b16 %v388
      %v469 = vunpack.c.l.b16 %v389
      %v470 = vunpack.c.l.b16 %v390
      %v471 = vunpack.c.l.b16 %v391
      %v472 = vunpack.c.l.b16 %v392
      %v473 = vunpack.c.l.b16 %v393
      %v474 = vunpack.c.l.b16 %v394
      %v475 = vunpack.c.l.b16 %v395
      %v476 = vunpack.c.l.b16 %v396
      %v477 = vunpack.c.l.b16 %v397
      %v478 = vunpack.c.l.b16 %v398
      %v479 = vunpack.c.l.b16 %v399
      %v480 = vunpack.c.l.b16 %v400
      %v481 = vunpack.c.l.b16 %v401
      %v482 = vunpack.c.l.b16 %v402
      %v483 = vunpack.c.l.b16 %v403
      %v484 = vunpack.c.l.b16 %v404
      %v485 = vunpack.c.l.b16 %v405
      %v486 = vunpack.c.l.b16 %v406
      %v487 = vunpack.c.l.b16 %v407
      %v488 = vunpack.c.l.b16 %v408
      %v489 = vunpack.c.l.b16 %v409
      %v490 = vpack.c.b16 %v459, %v458
      %v491 = vpack.c.b16 %v461, %v460
      %v492 = vpack.c.b16 %v463, %v462
      %v493 = vpack.c.b16 %v465, %v464
      %v494 = vpack.c.b16 %v467, %v466
      %v495 = vpack.c.b16 %v469, %v468
      %v496 = vpack.c.b16 %v471, %v470
      %v497 = vpack.c.b16 %v473, %v472
      %v498 = vpack.c.b16 %v475, %v474
      %v499 = vpack.c.b16 %v477, %v476
      %v500 = vpack.c.b16 %v479, %v478
      %v501 = vpack.c.b16 %v481, %v480
      %v502 = vpack.c.b16 %v483, %v482
      %v503 = vpack.c.b16 %v485, %v484
      %v504 = vpack.c.b16 %v487, %v486
      %v505 = vpack.c.b16 %v489, %v488
      %v538 = vunpack.c.l.b16 %v410
      %v539 = vunpack.c.l.b16 %v411
      %v540 = vunpack.c.l.b16 %v412
      %v541 = vunpack.c.l.b16 %v413
      %v542 = vunpack.c.l.b16 %v414
      %v543 = vunpack.c.l.b16 %v415
      %v544 = vunpack.c.l.b16 %v416
      %v545 = vunpack.c.l.b16 %v417
      %v546 = vunpack.c.l.b16 %v418
      %v547 = vunpack.c.l.b16 %v419
      %v548 = vunpack.c.l.b16 %v420
      %v549 = vunpack.c.l.b16 %v421
      %v550 = vunpack.c.l.b16 %v422
      %v551 = vunpack.c.l.b16 %v423
      %v552 = vunpack.c.l.b16 %v424
      %v553 = vunpack.c.l.b16 %v425
      %v554 = vpack.c.b16 %v539, %v538
      %v555 = vpack.c.b16 %v541, %v540
      %v556 = vpack.c.b16 %v543, %v542
      %v557 = vpack.c.b16 %v545, %v544
      %v558 = vpack.c.b16 %v547, %v546
      %v559 = vpack.c.b16 %v549, %v548
      %v560 = vpack.c.b16 %v551, %v550
      %v561 = vpack.c.b16 %v553, %v552
      %570 = vmatprep.subr.bf16.mxu0 0
      %571 = vmatpush1.bf16.msra.mxu0 %v554
      %572 = vmatprep.subr.bf16.mxu0 0
      %573 = vmatpush1.bf16.msra.mxu0 %v555
      %574 = vmatprep.subr.bf16.mxu0 0
      %575 = vmatpush1.bf16.msra.mxu0 %v556
      %576 = vmatprep.subr.bf16.mxu0 0
      %577 = vmatpush1.bf16.msra.mxu0 %v557
      %578 = vmatprep.subr.bf16.mxu0 0
      %579 = vmatpush1.bf16.msra.mxu0 %v558
      %580 = vmatprep.subr.bf16.mxu0 0
      %581 = vmatpush1.bf16.msra.mxu0 %v559
      %582 = vmatprep.subr.bf16.mxu0 0
      %583 = vmatpush1.bf16.msra.mxu0 %v560
      %584 = vmatprep.subr.bf16.mxu0 0
      %585 = vmatpush1.bf16.msra.mxu0 %v561
      %586 = vmatprep.subr.bf16.mxu0 0
      %587 = vmatpush1.bf16.msra.mxu0 0
      %588 = vmatprep.subr.bf16.mxu0 0
      %589 = vmatpush1.bf16.msra.mxu0 0
      %590 = vmatprep.subr.bf16.mxu0 0
      %591 = vmatpush1.bf16.msra.mxu0 0
      %592 = vmatprep.subr.bf16.mxu0 0
      %593 = vmatpush1.bf16.msra.mxu0 0
      %594 = vmatprep.subr.bf16.mxu0 0
      %595 = vmatpush1.bf16.msra.mxu0 0
      %596 = vmatprep.subr.bf16.mxu0 0
      %597 = vmatpush1.bf16.msra.mxu0 0
      %598 = vmatprep.subr.bf16.mxu0 0
      %599 = vmatpush1.bf16.msra.mxu0 0
      %600 = vmatprep.subr.bf16.mxu0 0
      %601 = vmatpush1.bf16.msra.mxu0 0
      %602 = vmatprep.mubr.bf16.mxu0 0
      %603 = vmatmul.mubr.bf16.gmra.mrb[0].mxu0 %v490
      %v604 = vpop.f32.mrb[0].mxu0
      %v605 = vadd.f32 0.0, %v604
      %v606 = vpop.f32.mrb[0].mxu0
      %v607 = vpop.f32.mrb[0].mxu0
      %v608 = vadd.f32 0.0, %v607
      %v609 = vpop.f32.mrb[0].mxu0
      %610 = vmatprep.mubr.bf16.mxu0 0
      %611 = vmatmul.mubr.bf16.gmra.mrb[0].mxu0 %v491
      %v612 = vpop.f32.mrb[0].mxu0
      %v613 = vadd.f32 0.0, %v612
      %v614 = vpop.f32.mrb[0].mxu0
      %v615 = vpop.f32.mrb[0].mxu0
      %v616 = vadd.f32 0.0, %v615
      %v617 = vpop.f32.mrb[0].mxu0
      %618 = vmatprep.mubr.bf16.mxu0 0
      %619 = vmatmul.mubr.bf16.gmra.mrb[0].mxu0 %v492
      %v620 = vpop.f32.mrb[0].mxu0
      %v621 = vadd.f32 0.0, %v620
      %v622 = vpop.f32.mrb[0].mxu0
      %v623 = vpop.f32.mrb[0].mxu0
      %v624 = vadd.f32 0.0, %v623
      %v625 = vpop.f32.mrb[0].mxu0
      %626 = vmatprep.mubr.bf16.mxu0 0
      %627 = vmatmul.mubr.bf16.gmra.mrb[0].mxu0 %v493
      %v628 = vpop.f32.mrb[0].mxu0
      %v629 = vadd.f32 0.0, %v628
      %v630 = vpop.f32.mrb[0].mxu0
      %v631 = vpop.f32.mrb[0].mxu0
      %v632 = vadd.f32 0.0, %v631
      %v633 = vpop.f32.mrb[0].mxu0
      %634 = vmatprep.mubr.bf16.mxu0 0
      %635 = vmatmul.mubr.bf16.gmra.mrb[0].mxu0 %v494
      %v636 = vpop.f32.mrb[0].mxu0
      %v637 = vadd.f32 0.0, %v636
      %v638 = vpop.f32.mrb[0].mxu0
      %v639 = vpop.f32.mrb[0].mxu0
      %v640 = vadd.f32 0.0, %v639
      %v641 = vpop.f32.mrb[0].mxu0
      %642 = vmatprep.mubr.bf16.mxu0 0
      %643 = vmatmul.mubr.bf16.gmra.mrb[0].mxu0 %v495
      %v644 = vpop.f32.mrb[0].mxu0
      %v645 = vadd.f32 0.0, %v644
      %v646 = vpop.f32.mrb[0].mxu0
      %v647 = vpop.f32.mrb[0].mxu0
      %v648 = vadd.f32 0.0, %v647
      %v649 = vpop.f32.mrb[0].mxu0
      %650 = vmatprep.mubr.bf16.mxu0 0
      %651 = vmatmul.mubr.bf16.gmra.mrb[0].mxu0 %v496
      %v652 = vpop.f32.mrb[0].mxu0
      %v653 = vadd.f32 0.0, %v652
      %v654 = vpop.f32.mrb[0].mxu0
      %v655 = vpop.f32.mrb[0].mxu0
      %v656 = vadd.f32 0.0, %v655
      %v657 = vpop.f32.mrb[0].mxu0
      %658 = vmatprep.mubr.bf16.mxu0 0
      %659 = vmatmul.mubr.bf16.gmra.mrb[0].mxu0 %v497
      %v660 = vpop.f32.mrb[0].mxu0
      %v661 = vadd.f32 0.0, %v660
      %v662 = vpop.f32.mrb[0].mxu0
      %v663 = vpop.f32.mrb[0].mxu0
      %v664 = vadd.f32 0.0, %v663
      %v665 = vpop.f32.mrb[0].mxu0
      %666 = vmatprep.mubr.bf16.mxu0 0
      %667 = vmatmul.mubr.bf16.gmra.mrb[0].mxu0 %v498
      %v668 = vpop.f32.mrb[0].mxu0
      %v669 = vadd.f32 0.0, %v668
      %v670 = vpop.f32.mrb[0].mxu0
      %v671 = vpop.f32.mrb[0].mxu0
      %v672 = vadd.f32 0.0, %v671
      %v673 = vpop.f32.mrb[0].mxu0
      %674 = vmatprep.mubr.bf16.mxu0 0
      %675 = vmatmul.mubr.bf16.gmra.mrb[0].mxu0 %v499
      %v676 = vpop.f32.mrb[0].mxu0
      %v677 = vadd.f32 0.0, %v676
      %v678 = vpop.f32.mrb[0].mxu0
      %v679 = vpop.f32.mrb[0].mxu0
      %v680 = vadd.f32 0.0, %v679
      %v681 = vpop.f32.mrb[0].mxu0
      %682 = vmatprep.mubr.bf16.mxu0 0
      %683 = vmatmul.mubr.bf16.gmra.mrb[0].mxu0 %v500
      %v684 = vpop.f32.mrb[0].mxu0
      %v685 = vadd.f32 0.0, %v684
      %v686 = vpop.f32.mrb[0].mxu0
      %v687 = vpop.f32.mrb[0].mxu0
      %v688 = vadd.f32 0.0, %v687
      %v689 = vpop.f32.mrb[0].mxu0
      %690 = vmatprep.mubr.bf16.mxu0 0
      %691 = vmatmul.mubr.bf16.gmra.mrb[0].mxu0 %v501
      %v692 = vpop.f32.mrb[0].mxu0
      %v693 = vadd.f32 0.0, %v692
      %v694 = vpop.f32.mrb[0].mxu0
      %v695 = vpop.f32.mrb[0].mxu0
      %v696 = vadd.f32 0.0, %v695
      %v697 = vpop.f32.mrb[0].mxu0
      %698 = vmatprep.mubr.bf16.mxu0 0
      %699 = vmatmul.mubr.bf16.gmra.mrb[0].mxu0 %v502
      %v700 = vpop.f32.mrb[0].mxu0
      %v701 = vadd.f32 0.0, %v700
      %v702 = vpop.f32.mrb[0].mxu0
      %v703 = vpop.f32.mrb[0].mxu0
      %v704 = vadd.f32 0.0, %v703
      %v705 = vpop.f32.mrb[0].mxu0
      %706 = vmatprep.mubr.bf16.mxu0 0
      %707 = vmatmul.mubr.bf16.gmra.mrb[0].mxu0 %v503
      %v708 = vpop.f32.mrb[0].mxu0
      %v709 = vadd.f32 0.0, %v708
      %v710 = vpop.f32.mrb[0].mxu0
      %v711 = vpop.f32.mrb[0].mxu0
      %v712 = vadd.f32 0.0, %v711
      %v713 = vpop.f32.mrb[0].mxu0
      %714 = vmatprep.mubr.bf16.mxu0 0
      %715 = vmatmul.mubr.bf16.gmra.mrb[0].mxu0 %v504
      %v716 = vpop.f32.mrb[0].mxu0
      %v717 = vadd.f32 0.0, %v716
      %v718 = vpop.f32.mrb[0].mxu0
      %v719 = vpop.f32.mrb[0].mxu0
      %v720 = vadd.f32 0.0, %v719
      %v721 = vpop.f32.mrb[0].mxu0
      %722 = vmatprep.mubr.bf16.mxu0 0
      %723 = vmatmul.mubr.bf16.gmra.mrb[0].mxu0 %v505
      %v724 = vpop.f32.mrb[0].mxu0
      %v725 = vadd.f32 0.0, %v724
      %v726 = vpop.f32.mrb[0].mxu0
      %v727 = vpop.f32.mrb[0].mxu0
      %v728 = vadd.f32 0.0, %v727
      %v729 = vpop.f32.mrb[0].mxu0
      %730 = vdwg.mxu0
      %v731 = vadd.f32 %v346, %v605
      %v732 = vadd.f32 %v347, %v608
      %v733 = vadd.f32 %v348, %v613
      %v734 = vadd.f32 %v349, %v616
      %v735 = vadd.f32 %v350, %v621
      %v736 = vadd.f32 %v351, %v624
      %v737 = vadd.f32 %v352, %v629
      %v738 = vadd.f32 %v353, %v632
      %v739 = vadd.f32 %v354, %v637
      %v740 = vadd.f32 %v355, %v640
      %v741 = vadd.f32 %v356, %v645
      %v742 = vadd.f32 %v357, %v648
      %v743 = vadd.f32 %v358, %v653
      %v744 = vadd.f32 %v359, %v656
      %v745 = vadd.f32 %v360, %v661
      %v746 = vadd.f32 %v361, %v664
      %v747 = vadd.f32 %v362, %v669
      %v748 = vadd.f32 %v363, %v672
      %v749 = vadd.f32 %v364, %v677
      %v750 = vadd.f32 %v365, %v680
      %v751 = vadd.f32 %v366, %v685
      %v752 = vadd.f32 %v367, %v688
      %v753 = vadd.f32 %v368, %v693
      %v754 = vadd.f32 %v369, %v696
      %v755 = vadd.f32 %v370, %v701
      %v756 = vadd.f32 %v371, %v704
      %v757 = vadd.f32 %v372, %v709
      %v758 = vadd.f32 %v373, %v712
      %v759 = vadd.f32 %v374, %v717
      %v760 = vadd.f32 %v375, %v720
      %v761 = vadd.f32 %v376, %v725
      %v762 = vadd.f32 %v377, %v728
      %763 = vst [vmem:[#allocation2] sm:$0xff] %v731
      %764 = vst [vmem:[#allocation2 + $0x8] sm:$0xff] %v732
      %765 = vst [vmem:[#allocation2 + $0x10] sm:$0xff] %v733
      %766 = vst [vmem:[#allocation2 + $0x18] sm:$0xff] %v734
      %767 = vst [vmem:[#allocation2 + $0x20] sm:$0xff] %v735
      %768 = vst [vmem:[#allocation2 + $0x28] sm:$0xff] %v736
      %769 = vst [vmem:[#allocation2 + $0x30] sm:$0xff] %v737
      %770 = vst [vmem:[#allocation2 + $0x38] sm:$0xff] %v738
      %771 = vst [vmem:[#allocation2 + $0x40] sm:$0xff] %v739
      %772 = vst [vmem:[#allocation2 + $0x48] sm:$0xff] %v740
      %773 = vst [vmem:[#allocation2 + $0x50] sm:$0xff] %v741
      %774 = vst [vmem:[#allocation2 + $0x58] sm:$0xff] %v742
      %775 = vst [vmem:[#allocation2 + $0x60] sm:$0xff] %v743
      %776 = vst [vmem:[#allocation2 + $0x68] sm:$0xff] %v744
      %777 = vst [vmem:[#allocation2 + $0x70] sm:$0xff] %v745
      %778 = vst [vmem:[#allocation2 + $0x78] sm:$0xff] %v746
      %779 = vst [vmem:[#allocation2 + $0x80] sm:$0xff] %v747
      %780 = vst [vmem:[#allocation2 + $0x88] sm:$0xff] %v748
      %781 = vst [vmem:[#allocation2 + $0x90] sm:$0xff] %v749
      %782 = vst [vmem:[#allocation2 + $0x98] sm:$0xff] %v750
      %783 = vst [vmem:[#allocation2 + $0xa0] sm:$0xff] %v751
      %784 = vst [vmem:[#allocation2 + $0xa8] sm:$0xff] %v752
      %785 = vst [vmem:[#allocation2 + $0xb0] sm:$0xff] %v753
      %786 = vst [vmem:[#allocation2 + $0xb8] sm:$0xff] %v754
      %787 = vst [vmem:[#allocation2 + $0xc0] sm:$0xff] %v755
      %788 = vst [vmem:[#allocation2 + $0xc8] sm:$0xff] %v756
      %789 = vst [vmem:[#allocation2 + $0xd0] sm:$0xff] %v757
      %790 = vst [vmem:[#allocation2 + $0xd8] sm:$0xff] %v758
      %791 = vst [vmem:[#allocation2 + $0xe0] sm:$0xff] %v759
      %792 = vst [vmem:[#allocation2 + $0xe8] sm:$0xff] %v760
      %793 = vst [vmem:[#allocation2 + $0xf0] sm:$0xff] %v761
      %794 = vst [vmem:[#allocation2 + $0xf8] sm:$0xff] %v762
      // Predicated region
      $region33: #{bottleneck_forward.10} parent=27 // pred_check
        %p795 = pneg %p310
      $region34: #{bottleneck_forward.10} parent=27 // pred_check_branch
        %797 = sbr.rel (%p795) target = $region36
      $region35: #{bottleneck_forward.10} parent=27 // pred_region
        %v798 = vld [vmem:[#allocation2] sm:$0xff]
        %v799 = vld [vmem:[#allocation2 + $0x8] sm:$0xff]
        %v800 = vld [vmem:[#allocation2 + $0x10] sm:$0xff]
        %v801 = vld [vmem:[#allocation2 + $0x18] sm:$0xff]
        %v802 = vld [vmem:[#allocation2 + $0x20] sm:$0xff]
        %v803 = vld [vmem:[#allocation2 + $0x28] sm:$0xff]
        %v804 = vld [vmem:[#allocation2 + $0x30] sm:$0xff]
        %v805 = vld [vmem:[#allocation2 + $0x38] sm:$0xff]
        %v806 = vld [vmem:[#allocation2 + $0x40] sm:$0xff]
        %v807 = vld [vmem:[#allocation2 + $0x48] sm:$0xff]
        %v808 = vld [vmem:[#allocation2 + $0x50] sm:$0xff]
        %v809 = vld [vmem:[#allocation2 + $0x58] sm:$0xff]
        %v810 = vld [vmem:[#allocation2 + $0x60] sm:$0xff]
        %v811 = vld [vmem:[#allocation2 + $0x68] sm:$0xff]
        %v812 = vld [vmem:[#allocation2 + $0x70] sm:$0xff]
        %v813 = vld [vmem:[#allocation2 + $0x78] sm:$0xff]
        %v814 = vld [vmem:[#allocation2 + $0x80] sm:$0xff]
        %v815 = vld [vmem:[#allocation2 + $0x88] sm:$0xff]
        %v816 = vld [vmem:[#allocation2 + $0x90] sm:$0xff]
        %v817 = vld [vmem:[#allocation2 + $0x98] sm:$0xff]
        %v818 = vld [vmem:[#allocation2 + $0xa0] sm:$0xff]
        %v819 = vld [vmem:[#allocation2 + $0xa8] sm:$0xff]
        %v820 = vld [vmem:[#allocation2 + $0xb0] sm:$0xff]
        %v821 = vld [vmem:[#allocation2 + $0xb8] sm:$0xff]
        %v822 = vld [vmem:[#allocation2 + $0xc0] sm:$0xff]
        %v823 = vld [vmem:[#allocation2 + $0xc8] sm:$0xff]
        %v824 = vld [vmem:[#allocation2 + $0xd0] sm:$0xff]
        %v825 = vld [vmem:[#allocation2 + $0xd8] sm:$0xff]
        %v826 = vld [vmem:[#allocation2 + $0xe0] sm:$0xff]
        %v827 = vld [vmem:[#allocation2 + $0xe8] sm:$0xff]
        %v828 = vld [vmem:[#allocation2 + $0xf0] sm:$0xff]
        %v829 = vld [vmem:[#allocation2 + $0xf8] sm:$0xff]
        %v830 = vpack.c.bf16 %v799, %v798
        %v831 = vpack.c.bf16 %v801, %v800
        %v832 = vpack.c.bf16 %v803, %v802
        %v833 = vpack.c.bf16 %v805, %v804
        %v834 = vpack.c.bf16 %v807, %v806
        %v835 = vpack.c.bf16 %v809, %v808
        %v836 = vpack.c.bf16 %v811, %v810
        %v837 = vpack.c.bf16 %v813, %v812
        %v838 = vpack.c.bf16 %v815, %v814
        %v839 = vpack.c.bf16 %v817, %v816
        %v840 = vpack.c.bf16 %v819, %v818
        %v841 = vpack.c.bf16 %v821, %v820
        %v842 = vpack.c.bf16 %v823, %v822
        %v843 = vpack.c.bf16 %v825, %v824
        %v844 = vpack.c.bf16 %v827, %v826
        %v845 = vpack.c.bf16 %v829, %v828
        %v862 = vunpack.c.l.b16 %v830
        %v863 = vunpack.c.h.b16 %v830
        %v864 = vunpack.c.l.b16 %v831
        %v865 = vunpack.c.h.b16 %v831
        %v866 = vunpack.c.l.b16 %v832
        %v867 = vunpack.c.h.b16 %v832
        %v868 = vunpack.c.l.b16 %v833
        %v869 = vunpack.c.h.b16 %v833
        %v870 = vunpack.c.l.b16 %v834
        %v871 = vunpack.c.h.b16 %v834
        %v872 = vunpack.c.l.b16 %v835
        %v873 = vunpack.c.h.b16 %v835
        %v874 = vunpack.c.l.b16 %v836
        %v875 = vunpack.c.h.b16 %v836
        %v876 = vunpack.c.l.b16 %v837
        %v877 = vunpack.c.h.b16 %v837
        %v878 = vunpack.c.l.b16 %v838
        %v879 = vunpack.c.h.b16 %v838
        %v880 = vunpack.c.l.b16 %v839
        %v881 = vunpack.c.h.b16 %v839
        %v882 = vunpack.c.l.b16 %v840
        %v883 = vunpack.c.h.b16 %v840
        %v884 = vunpack.c.l.b16 %v841
        %v885 = vunpack.c.h.b16 %v841
        %v886 = vunpack.c.l.b16 %v842
        %v887 = vunpack.c.h.b16 %v842
        %v888 = vunpack.c.l.b16 %v843
        %v889 = vunpack.c.h.b16 %v843
        %v890 = vunpack.c.l.b16 %v844
        %v891 = vunpack.c.h.b16 %v844
        %v892 = vunpack.c.l.b16 %v845
        %v893 = vunpack.c.h.b16 %v845
        %v894 = vpack.c.b16 %v862, %v862
        %v895 = vpack.c.b16 %v863, %v863
        %v896 = vpack.c.b16 %v864, %v864
        %v897 = vpack.c.b16 %v865, %v865
        %v898 = vpack.c.b16 %v866, %v866
        %v899 = vpack.c.b16 %v867, %v867
        %v900 = vpack.c.b16 %v868, %v868
        %v901 = vpack.c.b16 %v869, %v869
        %v902 = vpack.c.b16 %v870, %v870
        %v903 = vpack.c.b16 %v871, %v871
        %v904 = vpack.c.b16 %v872, %v872
        %v905 = vpack.c.b16 %v873, %v873
        %v906 = vpack.c.b16 %v874, %v874
        %v907 = vpack.c.b16 %v875, %v875
        %v908 = vpack.c.b16 %v876, %v876
        %v909 = vpack.c.b16 %v877, %v877
        %v910 = vpack.c.b16 %v878, %v878
        %v911 = vpack.c.b16 %v879, %v879
        %v912 = vpack.c.b16 %v880, %v880
        %v913 = vpack.c.b16 %v881, %v881
        %v914 = vpack.c.b16 %v882, %v882
        %v915 = vpack.c.b16 %v883, %v883
        %v916 = vpack.c.b16 %v884, %v884
        %v917 = vpack.c.b16 %v885, %v885
        %v918 = vpack.c.b16 %v886, %v886
        %v919 = vpack.c.b16 %v887, %v887
        %v920 = vpack.c.b16 %v888, %v888
        %v921 = vpack.c.b16 %v889, %v889
        %v922 = vpack.c.b16 %v890, %v890
        %v923 = vpack.c.b16 %v891, %v891
        %v924 = vpack.c.b16 %v892, %v892
        %v925 = vpack.c.b16 %v893, %v893
        %958 = vst [vmem:[%s293] sm:$0xf] %v894
        %959 = vst [vmem:[%s293 + $0x4] sm:$0xf] %v895
        %960 = vst [vmem:[%s293 + $0x8] sm:$0xf] %v896
        %961 = vst [vmem:[%s293 + $0xc] sm:$0xf] %v897
        %962 = vst [vmem:[%s293 + $0x10] sm:$0xf] %v898
        %963 = vst [vmem:[%s293 + $0x14] sm:$0xf] %v899
        %964 = vst [vmem:[%s293 + $0x18] sm:$0xf] %v900
        %965 = vst [vmem:[%s293 + $0x1c] sm:$0xf] %v901
        %966 = vst [vmem:[%s293 + $0x20] sm:$0xf] %v902
        %967 = vst [vmem:[%s293 + $0x24] sm:$0xf] %v903
        %968 = vst [vmem:[%s293 + $0x28] sm:$0xf] %v904
        %969 = vst [vmem:[%s293 + $0x2c] sm:$0xf] %v905
        %970 = vst [vmem:[%s293 + $0x30] sm:$0xf] %v906
        %971 = vst [vmem:[%s293 + $0x34] sm:$0xf] %v907
        %972 = vst [vmem:[%s293 + $0x38] sm:$0xf] %v908
        %973 = vst [vmem:[%s293 + $0x3c] sm:$0xf] %v909
        %974 = vst [vmem:[%s293 + $0x40] sm:$0xf] %v910
        %975 = vst [vmem:[%s293 + $0x44] sm:$0xf] %v911
        %976 = vst [vmem:[%s293 + $0x48] sm:$0xf] %v912
        %977 = vst [vmem:[%s293 + $0x4c] sm:$0xf] %v913
        %978 = vst [vmem:[%s293 + $0x50] sm:$0xf] %v914
        %979 = vst [vmem:[%s293 + $0x54] sm:$0xf] %v915
        %980 = vst [vmem:[%s293 + $0x58] sm:$0xf] %v916
        %981 = vst [vmem:[%s293 + $0x5c] sm:$0xf] %v917
        %982 = vst [vmem:[%s293 + $0x60] sm:$0xf] %v918
        %983 = vst [vmem:[%s293 + $0x64] sm:$0xf] %v919
        %984 = vst [vmem:[%s293 + $0x68] sm:$0xf] %v920
        %985 = vst [vmem:[%s293 + $0x6c] sm:$0xf] %v921
        %986 = vst [vmem:[%s293 + $0x70] sm:$0xf] %v922
        %987 = vst [vmem:[%s293 + $0x74] sm:$0xf] %v923
        %988 = vst [vmem:[%s293 + $0x78] sm:$0xf] %v924
        %989 = vst [vmem:[%s293 + $0x7c] sm:$0xf] %v925
        %v990 = vadd.f32 %v798, %v799
        %v991 = vadd.f32 %v990, %v800
        %v992 = vadd.f32 %v991, %v801
        %v993 = vadd.f32 %v992, %v802
        %v994 = vadd.f32 %v993, %v803
        %v995 = vadd.f32 %v994, %v804
        %v996 = vadd.f32 %v995, %v805
        %v997 = vadd.f32 %v996, %v806
        %v998 = vadd.f32 %v997, %v807
        %v999 = vadd.f32 %v998, %v808
        %v1000 = vadd.f32 %v999, %v809
        %v1001 = vadd.f32 %v1000, %v810
        %v1002 = vadd.f32 %v1001, %v811
        %v1003 = vadd.f32 %v1002, %v812
        %v1004 = vadd.f32 %v1003, %v813
        %v1005 = vadd.f32 %v1004, %v814
        %v1006 = vadd.f32 %v1005, %v815
        %v1007 = vadd.f32 %v1006, %v816
        %v1008 = vadd.f32 %v1007, %v817
        %v1009 = vadd.f32 %v1008, %v818
        %v1010 = vadd.f32 %v1009, %v819
        %v1011 = vadd.f32 %v1010, %v820
        %v1012 = vadd.f32 %v1011, %v821
        %v1013 = vadd.f32 %v1012, %v822
        %v1014 = vadd.f32 %v1013, %v823
        %v1015 = vadd.f32 %v1014, %v824
        %v1016 = vadd.f32 %v1015, %v825
        %v1017 = vadd.f32 %v1016, %v826
        %v1018 = vadd.f32 %v1017, %v827
        %v1019 = vadd.f32 %v1018, %v828
        %v1020 = vadd.f32 %v1019, %v829
        %v1021 = vrot.slane %v1020, 4
        %v1022 = vadd.f32 %v1020, %v1021
        %v1023 = vrot.slane %v1022, 2
        %v1024 = vadd.f32 %v1022, %v1023
        %v1025 = vrot.slane %v1024, 1
        %v1026 = vadd.f32 %v1024, %v1025
        %1027 = vst [vmem:[%s301] sm:$0xff] %v1026
        %v1028 = vmul.f32 %v798, %v798
        %v1029 = vmul.f32 %v799, %v799
        %v1030 = vmul.f32 %v800, %v800
        %v1031 = vmul.f32 %v801, %v801
        %v1032 = vmul.f32 %v802, %v802
        %v1033 = vmul.f32 %v803, %v803
        %v1034 = vmul.f32 %v804, %v804
        %v1035 = vmul.f32 %v805, %v805
        %v1036 = vmul.f32 %v806, %v806
        %v1037 = vmul.f32 %v807, %v807
        %v1038 = vmul.f32 %v808, %v808
        %v1039 = vmul.f32 %v809, %v809
        %v1040 = vmul.f32 %v810, %v810
        %v1041 = vmul.f32 %v811, %v811
        %v1042 = vmul.f32 %v812, %v812
        %v1043 = vmul.f32 %v813, %v813
        %v1044 = vmul.f32 %v814, %v814
        %v1045 = vmul.f32 %v815, %v815
        %v1046 = vmul.f32 %v816, %v816
        %v1047 = vmul.f32 %v817, %v817
        %v1048 = vmul.f32 %v818, %v818
        %v1049 = vmul.f32 %v819, %v819
        %v1050 = vmul.f32 %v820, %v820
        %v1051 = vmul.f32 %v821, %v821
        %v1052 = vmul.f32 %v822, %v822
        %v1053 = vmul.f32 %v823, %v823
        %v1054 = vmul.f32 %v824, %v824
        %v1055 = vmul.f32 %v825, %v825
        %v1056 = vmul.f32 %v826, %v826
        %v1057 = vmul.f32 %v827, %v827
        %v1058 = vmul.f32 %v828, %v828
        %v1059 = vmul.f32 %v829, %v829
        %v1060 = vadd.f32 %v1028, %v1029
        %v1061 = vadd.f32 %v1060, %v1030
        %v1062 = vadd.f32 %v1061, %v1031
        %v1063 = vadd.f32 %v1062, %v1032
        %v1064 = vadd.f32 %v1063, %v1033
        %v1065 = vadd.f32 %v1064, %v1034
        %v1066 = vadd.f32 %v1065, %v1035
        %v1067 = vadd.f32 %v1066, %v1036
        %v1068 = vadd.f32 %v1067, %v1037
        %v1069 = vadd.f32 %v1068, %v1038
        %v1070 = vadd.f32 %v1069, %v1039
        %v1071 = vadd.f32 %v1070, %v1040
        %v1072 = vadd.f32 %v1071, %v1041
        %v1073 = vadd.f32 %v1072, %v1042
        %v1074 = vadd.f32 %v1073, %v1043
        %v1075 = vadd.f32 %v1074, %v1044
        %v1076 = vadd.f32 %v1075, %v1045
        %v1077 = vadd.f32 %v1076, %v1046
        %v1078 = vadd.f32 %v1077, %v1047
        %v1079 = vadd.f32 %v1078, %v1048
        %v1080 = vadd.f32 %v1079, %v1049
        %v1081 = vadd.f32 %v1080, %v1050
        %v1082 = vadd.f32 %v1081, %v1051
        %v1083 = vadd.f32 %v1082, %v1052
        %v1084 = vadd.f32 %v1083, %v1053
        %v1085 = vadd.f32 %v1084, %v1054
        %v1086 = vadd.f32 %v1085, %v1055
        %v1087 = vadd.f32 %v1086, %v1056
        %v1088 = vadd.f32 %v1087, %v1057
        %v1089 = vadd.f32 %v1088, %v1058
        %v1090 = vadd.f32 %v1089, %v1059
        %v1091 = vrot.slane %v1090, 4
        %v1092 = vadd.f32 %v1090, %v1091
        %v1093 = vrot.slane %v1092, 2
        %v1094 = vadd.f32 %v1092, %v1093
        %v1095 = vrot.slane %v1094, 1
        %v1096 = vadd.f32 %v1094, %v1095
        %1097 = vst [vmem:[%s308] sm:$0xff] %v1096
      $region36: #{bottleneck_forward.10} parent=27 // pred_fallthru
        _
      %s1098 = smul.u32 32, %s21
      %p1099 = scmp.lt.s32.totalorder %s1098, 63
      %s1100 = scalar_select %p1099, %s1098, 63
      %p1101 = scmp.lt.s32.totalorder %s22, 0
      %s1102 = scalar_select %p1101, %s22, 0
      %s1103 = sadd.s32 %s1102, %s1100
      %s1104 = smul.addr %s1103, 4
      %s1105 = scalar_lea.vmem %s2, %s1104
      %p1106 = scmp.lt.s32.totalorder %s21, 1
      %s1107 = scalar_select %p1106, %s21, 1
      %p1108 = scmp.lt.s32.totalorder %s22, 0
      %s1109 = scalar_select %p1108, %s22, 0
      %s1110 = sadd.s32 %s1109, %s1107
      %s1111 = smul.addr %s1110, 8
      %s1112 = scalar_lea.vmem %s3, %s1111
      %p1113 = scmp.lt.s32.totalorder %s21, 1
      %s1114 = scalar_select %p1113, %s21, 1
      %p1115 = scmp.lt.s32.totalorder %s22, 0
      %s1116 = scalar_select %p1115, %s22, 0
      %s1117 = sadd.s32 %s1116, %s1114
      %s1118 = smul.addr %s1117, 8
      %s1119 = scalar_lea.vmem %s4, %s1118
      // Predicated region
      $region37: #{bottleneck_forward.10} parent=27 // pred_check
        %p1120 = pneg %p111
      $region38: #{bottleneck_forward.10} parent=27 // pred_check_branch
        %1122 = sbr.rel (%p1120) target = $region40
      $region39: #{bottleneck_forward.10} parent=27 // pred_region
        %s1123 = smul.u32 32, %s21
      $region40: #{bottleneck_forward.10} parent=27 // pred_fallthru
        _
      // Predicated region
      $region41: #{bottleneck_forward.10} parent=27 // pred_check
        %p1124 = pneg %p139
      $region42: #{bottleneck_forward.10} parent=27 // pred_check_branch
        %1126 = sbr.rel (%p1124) target = $region44
      $region43: #{bottleneck_forward.10} parent=27 // pred_region
        _
      $region44: #{bottleneck_forward.10} parent=27 // pred_fallthru
        _
      // Predicated region
      $region45: #{bottleneck_forward.10} parent=27 // pred_check
        %p1127 = pneg %p167
      $region46: #{bottleneck_forward.10} parent=27 // pred_check_branch
        %1129 = sbr.rel (%p1127) target = $region48
      $region47: #{bottleneck_forward.10} parent=27 // pred_region
        _
      $region48: #{bottleneck_forward.10} parent=27 // pred_fallthru
        _
    $region28: #{bottleneck_forward.10} parent=5 // pred_fallthru
      _
    %p1130 = scmp.le.s32.totalorder 2, %s11
    // Predicated region
    $region49: #{bottleneck_forward.10} parent=5 // pred_check
      %p1131 = pneg %p1130
    $region50: #{bottleneck_forward.10} parent=5 // pred_check_branch
      %1133 = sbr.rel (%p1131) target = $region52
    $region51: #{bottleneck_forward.10} parent=5 // pred_region
      %s1134 = ssub.s32 %s11, 2
      // Predicated region
      $region53: #{bottleneck_forward.10} parent=51 // pred_check
        %p1135 = pneg %p117
      $region54: #{bottleneck_forward.10} parent=51 // pred_check_branch
        %1137 = sbr.rel (%p1135) target = $region56
      $region55: #{bottleneck_forward.10} parent=51 // pred_region
        %s1138 = smul.u32 32, %s24
        %p1139 = scmp.lt.s32.totalorder %s1138, 63
        %s1140 = scalar_select %p1139, %s1138, 63
        %p1141 = scmp.lt.s32.totalorder %s25, 0
        %s1142 = scalar_select %p1141, %s25, 0
        %s1143 = sadd.s32 %s1142, %s1140
        %s1144 = smul.addr %s1143, 4
        %s1145 = scalar_lea.vmem %s2, %s1144
      $region56: #{bottleneck_forward.10} parent=51 // pred_fallthru
        _
      // Predicated region
      $region57: #{bottleneck_forward.10} parent=51 // pred_check
        %p1146 = pneg %p145
      $region58: #{bottleneck_forward.10} parent=51 // pred_check_branch
        %1148 = sbr.rel (%p1146) target = $region60
      $region59: #{bottleneck_forward.10} parent=51 // pred_region
        %p1149 = scmp.lt.s32.totalorder %s24, 1
        %s1150 = scalar_select %p1149, %s24, 1
        %p1151 = scmp.lt.s32.totalorder %s25, 0
        %s1152 = scalar_select %p1151, %s25, 0
        %s1153 = sadd.s32 %s1152, %s1150
        %s1154 = smul.addr %s1153, 8
        %s1155 = scalar_lea.vmem %s3, %s1154
      $region60: #{bottleneck_forward.10} parent=51 // pred_fallthru
        _
      // Predicated region
      $region61: #{bottleneck_forward.10} parent=51 // pred_check
        %p1156 = pneg %p173
      $region62: #{bottleneck_forward.10} parent=51 // pred_check_branch
        %1158 = sbr.rel (%p1156) target = $region64
      $region63: #{bottleneck_forward.10} parent=51 // pred_region
        %p1159 = scmp.lt.s32.totalorder %s24, 1
        %s1160 = scalar_select %p1159, %s24, 1
        %p1161 = scmp.lt.s32.totalorder %s25, 0
        %s1162 = scalar_select %p1161, %s25, 0
        %s1163 = sadd.s32 %s1162, %s1160
        %s1164 = smul.addr %s1163, 8
        %s1165 = scalar_lea.vmem %s4, %s1164
      $region64: #{bottleneck_forward.10} parent=51 // pred_fallthru
        _
    $region52: #{bottleneck_forward.10} parent=5 // pred_fallthru
      _
  $region6: #{bottleneck_forward.10} parent=0 // loop_footer
    %s15 = sadd.s32 1, %s11
  $region7: #{bottleneck_forward.10} parent=0 // loop_footer_branch
    %10 = sbr.rel target = $region3
  $region8: #{bottleneck_forward.10} parent=0 // loop_exit
    _

// kernel: bottleneck_forward.8
$region0: #{bottleneck_forward.8}
  #allocation0 [shape = 'u32[]', space=smem, size = 0x4, offset = 0x4, fixed_abs, tag = 'smem constant byte address 0x4 - core index']
  #allocation1 [shape = 'u32[144,128]{1,0:T(1,128)}', space=vmem, size = 0x12000, scoped, tag = 'internal scratch']
  #allocation2 [shape = 'f32[256,128]{1,0:T(8,128)}', space=vmem, size = 0x20000, scoped, tag = 'scratch operand']
  %s0 = inlined_call_operand.vmem [shape: bf16[512,256], index: 0, kind: input, shape index: {}]
  %s1 = inlined_call_operand.vmem [shape: bf16[256,128], index: 1, kind: input, shape index: {}]
  %s2 = inlined_call_operand.vmem [shape: bf16[512,128], index: 2, kind: output, shape index: {0}]
  %s3 = inlined_call_operand.vmem [shape: f32[16,128], index: 3, kind: output, shape index: {1}]
  %s4 = inlined_call_operand.vmem [shape: f32[16,128], index: 4, kind: output, shape index: {2}]
  %5 = xla_tuple %s2, %s3, %s4
  %s6 = sld [smem:[#allocation0]]
  $region65: #{bottleneck_forward.8} parent=0
    _
  %s8 = ssub.s32 1, %s6
  %s9 = scalar_select 0, %s8, %s6
  loop: start=0, step=1, limit=4
  $region2: #{bottleneck_forward.8} parent=0 // loop_pre_header
    _
  $region3: #{bottleneck_forward.8} parent=0 // loop_header
    %s11 = sphi 0, %s15
    %p12 = scmp.ge.s32.totalorder %s11, 4
    %s18 = sphi 0, %s37
    %s19 = sphi 0, %s33
    %s20 = sphi 0, %s29
    %s21 = sphi 0, %s18
    %s22 = sphi 0, %s19
    %s23 = sphi 0, %s20
    %s24 = sphi 0, %s21
    %s25 = sphi 0, %s22
    %s26 = sphi 0, %s23
    %s42 = sphi 0, %s44
    %s45 = sphi 0, %s42
    %s46 = sphi 0, %s45
    %s62 = sphi 0, %s46
    %s70 = sphi 0, %s72
    %s73 = sphi 0, %s70
    %s74 = sphi 0, %s73
    %s90 = sphi 0, %s74
    %s98 = sphi 0, %s100
    %s101 = sphi 0, %s98
    %s102 = sphi 0, %s101
    %s118 = sphi 0, %s102
    %s126 = sphi 0, %s128
    %s129 = sphi 0, %s126
    %s130 = sphi 0, %s129
    %s146 = sphi 0, %s130
    %s154 = sphi 0, %s156
    %s157 = sphi 0, %s154
    %s158 = sphi 0, %s157
    %s174 = sphi 0, %s158
  $region4: #{bottleneck_forward.8} parent=0 // loop_header_branch
    %14 = sbr.rel (%p12) target = $region8
  $region5: #{bottleneck_forward.8} parent=0 // loop_body
    %s16 = ssub.s32 %s11, 1
    %s17 = ssub.s32 %s11, 2
    %s27 = sadd.s32 1, %s20
    %p28 = scmp.ge.s32.totalorder %s27, 1
    %s29 = scalar_select %p28, 0, %s27
    %s30 = sadd.s32 1, %s19
    %s31 = scalar_select %p28, %s30, %s19
    %p32 = scmp.ge.s32.totalorder %s31, 1
    %s33 = scalar_select %p32, 0, %s31
    %s34 = sadd.s32 1, %s18
    %s35 = scalar_select %p32, %s34, %s18
    %p36 = scmp.ge.s32.totalorder %s35, 2
    %s37 = scalar_select %p36, 0, %s35
    %s38 = ssub.s32 %s18, %s37
    %s39 = ssub.s32 %s20, %s29
    %s40 = sor.u32 %s38, %s39
    %p41 = scmp.eq.s32.totalorder %s40, 0
    %s43 = sadd.s32 %s42, 1
    %s44 = scalar_select %p41, %s42, %s43
    %p47 = pneg %p41
    %p48 = scmp.eq.s32.totalorder %s11, 1
    %p49 = por %p47, %p48
    %p50 = scmp.ne.s32.totalorder %s42, %s45
    %p51 = scmp.eq.s32.totalorder %s11, 0
    %p52 = por %p50, %p51
    %p53 = scmp.ne.s32.totalorder %s42, %s45
    %p54 = scmp.eq.s32.totalorder %s16, 1
    %p55 = por %p53, %p54
    %p56 = scmp.ne.s32.totalorder %s45, %s46
    %p57 = scmp.eq.s32.totalorder %s16, 0
    %p58 = por %p56, %p57
    %p59 = scmp.ne.s32.totalorder %s45, %s46
    %p60 = scmp.eq.s32.totalorder %s17, 1
    %p61 = por %p59, %p60
    %p63 = scmp.ne.s32.totalorder %s46, %s62
    %p64 = scmp.eq.s32.totalorder %s17, 0
    %p65 = por %p63, %p64
    %s66 = ssub.s32 %s20, %s29
    %s67 = ssub.s32 %s19, %s33
    %s68 = sor.u32 %s66, %s67
    %p69 = scmp.eq.s32.totalorder %s68, 0
    %s71 = sadd.s32 %s70, 1
    %s72 = scalar_select %p69, %s70, %s71
    %p75 = pneg %p69
    %p76 = scmp.eq.s32.totalorder %s11, 1
    %p77 = por %p75, %p76
    %p78 = scmp.ne.s32.totalorder %s70, %s73
    %p79 = scmp.eq.s32.totalorder %s11, 0
    %p80 = por %p78, %p79
    %p81 = scmp.ne.s32.totalorder %s70, %s73
    %p82 = scmp.eq.s32.totalorder %s16, 1
    %p83 = por %p81, %p82
    %p84 = scmp.ne.s32.totalorder %s73, %s74
    %p85 = scmp.eq.s32.totalorder %s16, 0
    %p86 = por %p84, %p85
    %p87 = scmp.ne.s32.totalorder %s73, %s74
    %p88 = scmp.eq.s32.totalorder %s17, 1
    %p89 = por %p87, %p88
    %p91 = scmp.ne.s32.totalorder %s74, %s90
    %p92 = scmp.eq.s32.totalorder %s17, 0
    %p93 = por %p91, %p92
    %s94 = ssub.s32 %s18, %s37
    %s95 = ssub.s32 %s19, %s33
    %s96 = sor.u32 %s94, %s95
    %p97 = scmp.eq.s32.totalorder %s96, 0
    %s99 = sadd.s32 %s98, 1
    %s100 = scalar_select %p97, %s98, %s99
    %p103 = pneg %p97
    %p104 = scmp.eq.s32.totalorder %s11, 1
    %p105 = por %p103, %p104
    %p106 = scmp.ne.s32.totalorder %s98, %s101
    %p107 = scmp.eq.s32.totalorder %s11, 0
    %p108 = por %p106, %p107
    %p109 = scmp.ne.s32.totalorder %s98, %s101
    %p110 = scmp.eq.s32.totalorder %s16, 1
    %p111 = por %p109, %p110
    %p112 = scmp.ne.s32.totalorder %s101, %s102
    %p113 = scmp.eq.s32.totalorder %s16, 0
    %p114 = por %p112, %p113
    %p115 = scmp.ne.s32.totalorder %s101, %s102
    %p116 = scmp.eq.s32.totalorder %s17, 1
    %p117 = por %p115, %p116
    %p119 = scmp.ne.s32.totalorder %s102, %s118
    %p120 = scmp.eq.s32.totalorder %s17, 0
    %p121 = por %p119, %p120
    %s122 = ssub.s32 %s18, %s37
    %s123 = ssub.s32 %s19, %s33
    %s124 = sor.u32 %s122, %s123
    %p125 = scmp.eq.s32.totalorder %s124, 0
    %s127 = sadd.s32 %s126, 1
    %s128 = scalar_select %p125, %s126, %s127
    %p131 = pneg %p125
    %p132 = scmp.eq.s32.totalorder %s11, 1
    %p133 = por %p131, %p132
    %p134 = scmp.ne.s32.totalorder %s126, %s129
    %p135 = scmp.eq.s32.totalorder %s11, 0
    %p136 = por %p134, %p135
    %p137 = scmp.ne.s32.totalorder %s126, %s129
    %p138 = scmp.eq.s32.totalorder %s16, 1
    %p139 = por %p137, %p138
    %p140 = scmp.ne.s32.totalorder %s129, %s130
    %p141 = scmp.eq.s32.totalorder %s16, 0
    %p142 = por %p140, %p141
    %p143 = scmp.ne.s32.totalorder %s129, %s130
    %p144 = scmp.eq.s32.totalorder %s17, 1
    %p145 = por %p143, %p144
    %p147 = scmp.ne.s32.totalorder %s130, %s146
    %p148 = scmp.eq.s32.totalorder %s17, 0
    %p149 = por %p147, %p148
    %s150 = ssub.s32 %s18, %s37
    %s151 = ssub.s32 %s19, %s33
    %s152 = sor.u32 %s150, %s151
    %p153 = scmp.eq.s32.totalorder %s152, 0
    %s155 = sadd.s32 %s154, 1
    %s156 = scalar_select %p153, %s154, %s155
    %p159 = pneg %p153
    %p160 = scmp.eq.s32.totalorder %s11, 1
    %p161 = por %p159, %p160
    %p162 = scmp.ne.s32.totalorder %s154, %s157
    %p163 = scmp.eq.s32.totalorder %s11, 0
    %p164 = por %p162, %p163
    %p165 = scmp.ne.s32.totalorder %s154, %s157
    %p166 = scmp.eq.s32.totalorder %s16, 1
    %p167 = por %p165, %p166
    %p168 = scmp.ne.s32.totalorder %s157, %s158
    %p169 = scmp.eq.s32.totalorder %s16, 0
    %p170 = por %p168, %p169
    %p171 = scmp.ne.s32.totalorder %s157, %s158
    %p172 = scmp.eq.s32.totalorder %s17, 1
    %p173 = por %p171, %p172
    %p175 = scmp.ne.s32.totalorder %s158, %s174
    %p176 = scmp.eq.s32.totalorder %s17, 0
    %p177 = por %p175, %p176
    %p178 = scmp.le.s32.totalorder 1, %s11
    %p179 = scmp.lt.s32.totalorder %s11, 3
    %p180 = pnand %p178, %p179
    %p181 = pneg %p180
    // Predicated region
    $region9: #{bottleneck_forward.8} parent=5 // pred_check
      _
    $region10: #{bottleneck_forward.8} parent=5 // pred_check_branch
      %183 = sbr.rel (%p180) target = $region12
    $region11: #{bottleneck_forward.8} parent=5 // pred_region
      %s184 = ssub.s32 %s11, 1
      // Predicated region
      $region13: #{bottleneck_forward.8} parent=11 // pred_check
        %p185 = pneg %p86
      $region14: #{bottleneck_forward.8} parent=11 // pred_check_branch
        %187 = sbr.rel (%p185) target = $region16
      $region15: #{bottleneck_forward.8} parent=11 // pred_region
        %s188 = smul.u32 32, %s23
        %p189 = scmp.lt.s32.totalorder %s188, 31
        %s190 = scalar_select %p189, %s188, 31
        %p191 = scmp.lt.s32.totalorder %s22, 0
        %s192 = scalar_select %p191, %s22, 0
        %s193 = sadd.s32 %s192, %s190
        %s194 = smul.addr %s193, 4
        %s195 = scalar_lea.vmem %s1, %s194
        %s196 = smul.u32 32, %s23
      $region16: #{bottleneck_forward.8} parent=11 // pred_fallthru
        _
    $region12: #{bottleneck_forward.8} parent=5 // pred_fallthru
      _
    %p197 = scmp.lt.s32.totalorder %s11, 2
    // Predicated region
    $region17: #{bottleneck_forward.8} parent=5 // pred_check
      %p198 = pneg %p197
    $region18: #{bottleneck_forward.8} parent=5 // pred_check_branch
      %200 = sbr.rel (%p198) target = $region20
    $region19: #{bottleneck_forward.8} parent=5 // pred_region
      // Predicated region
      $region21: #{bottleneck_forward.8} parent=19 // pred_check
        %p201 = pneg %p52
      $region22: #{bottleneck_forward.8} parent=19 // pred_check_branch
        %203 = sbr.rel (%p201) target = $region24
      $region23: #{bottleneck_forward.8} parent=19 // pred_region
        %s204 = smul.u32 32, %s18
        %s205 = smul.u32 2, %s20
        %p206 = scmp.lt.s32.totalorder %s204, 63
        %s207 = scalar_select %p206, %s204, 63
        %p208 = scmp.lt.s32.totalorder %s205, 1
        %s209 = scalar_select %p208, %s205, 1
        %s210 = smul.addr %s207, 2
        %s211 = sadd.s32 %s209, %s210
        %s212 = smul.addr %s211, 4
        %s213 = scalar_lea.vmem %s0, %s212
        %s214 = smul.u32 32, %s18
        %s215 = smul.u32 2, %s20
      $region24: #{bottleneck_forward.8} parent=19 // pred_fallthru
        _
    $region20: #{bottleneck_forward.8} parent=5 // pred_fallthru
      _
    %p216 = scmp.le.s32.totalorder 1, %s11
    %p217 = scmp.lt.s32.totalorder %s11, 3
    %p218 = pnand %p216, %p217
    %p219 = pneg %p218
    // Predicated region
    $region25: #{bottleneck_forward.8} parent=5 // pred_check
      _
    $region26: #{bottleneck_forward.8} parent=5 // pred_check_branch
      %221 = sbr.rel (%p218) target = $region28
    $region27: #{bottleneck_forward.8} parent=5 // pred_region
      %s222 = ssub.s32 %s11, 1
      %s223 = smul.u32 32, %s21
      %s224 = smul.u32 2, %s23
      %p225 = scmp.lt.s32.totalorder %s223, 63
      %s226 = scalar_select %p225, %s223, 63
      %p227 = scmp.lt.s32.totalorder %s224, 1
      %s228 = scalar_select %p227, %s224, 1
      %s229 = smul.addr %s226, 2
      %s230 = sadd.s32 %s228, %s229
      %s231 = smul.addr %s230, 4
      %s232 = scalar_lea.vmem %s0, %s231
      %p233 = pneg %p58
      %p234 = pneg %p55
      %s235 = smul.u32 32, %s23
      %p236 = scmp.lt.s32.totalorder %s235, 31
      %s237 = scalar_select %p236, %s235, 31
      %p238 = scmp.lt.s32.totalorder %s22, 0
      %s239 = scalar_select %p238, %s22, 0
      %s240 = sadd.s32 %s239, %s237
      %s241 = smul.addr %s240, 4
      %s242 = scalar_lea.vmem %s1, %s241
      %p243 = pneg %p86
      %p244 = pneg %p83
      %p245 = pneg %p114
      %p246 = pneg %p111
      %s247 = smul.u32 32, %s21
      %p248 = scmp.lt.s32.totalorder %s247, 63
      %s249 = scalar_select %p248, %s247, 63
      %p250 = scmp.lt.s32.totalorder %s22, 0
      %s251 = scalar_select %p250, %s22, 0
      %s252 = sadd.s32 %s251, %s249
      %s253 = smul.addr %s252, 4
      %s254 = scalar_lea.vmem %s2, %s253
      %p255 = pneg %p142
      %p256 = pneg %p139
      %p257 = scmp.lt.s32.totalorder %s21, 1
      %s258 = scalar_select %p257, %s21, 1
      %p259 = scmp.lt.s32.totalorder %s22, 0
      %s260 = scalar_select %p259, %s22, 0
      %s261 = sadd.s32 %s260, %s258
      %s262 = smul.addr %s261, 8
      %s263 = scalar_lea.vmem %s3, %s262
      %p264 = pneg %p170
      %p265 = pneg %p167
      %p266 = scmp.lt.s32.totalorder %s21, 1
      %s267 = scalar_select %p266, %s21, 1
      %p268 = scmp.lt.s32.totalorder %s22, 0
      %s269 = scalar_select %p268, %s22, 0
      %s270 = sadd.s32 %s269, %s267
      %s271 = smul.addr %s270, 8
      %s272 = scalar_lea.vmem %s4, %s271
      %s273 = smul.u32 32, %s21
      %s274 = smul.u32 2, %s23
      %p275 = scmp.lt.s32.totalorder %s273, 63
      %s276 = scalar_select %p275, %s273, 63
      %p277 = scmp.lt.s32.totalorder %s274, 1
      %s278 = scalar_select %p277, %s274, 1
      %s279 = smul.addr %s276, 2
      %s280 = sadd.s32 %s278, %s279
      %s281 = smul.addr %s280, 4
      %s282 = scalar_lea.vmem %s0, %s281
      %s283 = smul.u32 32, %s21
      %s284 = smul.u32 2, %s23
      %s285 = smul.u32 32, %s23
      %p286 = scmp.lt.s32.totalorder %s285, 31
      %s287 = scalar_select %p286, %s285, 31
      %p288 = scmp.lt.s32.totalorder %s22, 0
      %s289 = scalar_select %p288, %s22, 0
      %s290 = sadd.s32 %s289, %s287
      %s291 = smul.addr %s290, 4
      %s292 = scalar_lea.vmem %s1, %s291
      %s293 = smul.u32 32, %s23
      %s294 = smul.u32 32, %s21
      %p295 = scmp.lt.s32.totalorder %s294, 63
      %s296 = scalar_select %p295, %s294, 63
      %p297 = scmp.lt.s32.totalorder %s22, 0
      %s298 = scalar_select %p297, %s22, 0
      %s299 = sadd.s32 %s298, %s296
      %s300 = smul.addr %s299, 4
      %s301 = scalar_lea.vmem %s2, %s300
      %s302 = smul.u32 32, %s21
      %p303 = scmp.lt.s32.totalorder %s21, 1
      %s304 = scalar_select %p303, %s21, 1
      %p305 = scmp.lt.s32.totalorder %s22, 0
      %s306 = scalar_select %p305, %s22, 0
      %s307 = sadd.s32 %s306, %s304
      %s308 = smul.addr %s307, 8
      %s309 = scalar_lea.vmem %s3, %s308
      %p310 = scmp.lt.s32.totalorder %s21, 1
      %s311 = scalar_select %p310, %s21, 1
      %p312 = scmp.lt.s32.totalorder %s22, 0
      %s313 = scalar_select %p312, %s22, 0
      %s314 = sadd.s32 %s313, %s311
      %s315 = smul.addr %s314, 8
      %s316 = scalar_lea.vmem %s4, %s315
      %p318 = scmp.eq.s32.totalorder %s23, 0
      // Predicated region
      $region29: #{bottleneck_forward.8} parent=27 // pred_check
        %p319 = pneg %p318
      $region30: #{bottleneck_forward.8} parent=27 // pred_check_branch
        %321 = sbr.rel (%p319) target = $region32
      $region31: #{bottleneck_forward.8} parent=27 // pred_region
        %322 = vst [vmem:[#allocation2] sm:$0xff] 0.0
        %323 = vst [vmem:[#allocation2 + $0x8] sm:$0xff] 0.0
        %324 = vst [vmem:[#allocation2 + $0x10] sm:$0xff] 0.0
        %325 = vst [vmem:[#allocation2 + $0x18] sm:$0xff] 0.0
        %326 = vst [vmem:[#allocation2 + $0x20] sm:$0xff] 0.0
        %327 = vst [vmem:[#allocation2 + $0x28] sm:$0xff] 0.0
        %328 = vst [vmem:[#allocation2 + $0x30] sm:$0xff] 0.0
        %329 = vst [vmem:[#allocation2 + $0x38] sm:$0xff] 0.0
        %330 = vst [vmem:[#allocation2 + $0x40] sm:$0xff] 0.0
        %331 = vst [vmem:[#allocation2 + $0x48] sm:$0xff] 0.0
        %332 = vst [vmem:[#allocation2 + $0x50] sm:$0xff] 0.0
        %333 = vst [vmem:[#allocation2 + $0x58] sm:$0xff] 0.0
        %334 = vst [vmem:[#allocation2 + $0x60] sm:$0xff] 0.0
        %335 = vst [vmem:[#allocation2 + $0x68] sm:$0xff] 0.0
        %336 = vst [vmem:[#allocation2 + $0x70] sm:$0xff] 0.0
        %337 = vst [vmem:[#allocation2 + $0x78] sm:$0xff] 0.0
        %338 = vst [vmem:[#allocation2 + $0x80] sm:$0xff] 0.0
        %339 = vst [vmem:[#allocation2 + $0x88] sm:$0xff] 0.0
        %340 = vst [vmem:[#allocation2 + $0x90] sm:$0xff] 0.0
        %341 = vst [vmem:[#allocation2 + $0x98] sm:$0xff] 0.0
        %342 = vst [vmem:[#allocation2 + $0xa0] sm:$0xff] 0.0
        %343 = vst [vmem:[#allocation2 + $0xa8] sm:$0xff] 0.0
        %344 = vst [vmem:[#allocation2 + $0xb0] sm:$0xff] 0.0
        %345 = vst [vmem:[#allocation2 + $0xb8] sm:$0xff] 0.0
        %346 = vst [vmem:[#allocation2 + $0xc0] sm:$0xff] 0.0
        %347 = vst [vmem:[#allocation2 + $0xc8] sm:$0xff] 0.0
        %348 = vst [vmem:[#allocation2 + $0xd0] sm:$0xff] 0.0
        %349 = vst [vmem:[#allocation2 + $0xd8] sm:$0xff] 0.0
        %350 = vst [vmem:[#allocation2 + $0xe0] sm:$0xff] 0.0
        %351 = vst [vmem:[#allocation2 + $0xe8] sm:$0xff] 0.0
        %352 = vst [vmem:[#allocation2 + $0xf0] sm:$0xff] 0.0
        %353 = vst [vmem:[#allocation2 + $0xf8] sm:$0xff] 0.0
      $region32: #{bottleneck_forward.8} parent=27 // pred_fallthru
        _
      %v354 = vld [vmem:[#allocation2] sm:$0xff]
      %v355 = vld [vmem:[#allocation2 + $0x8] sm:$0xff]
      %v356 = vld [vmem:[#allocation2 + $0x10] sm:$0xff]
      %v357 = vld [vmem:[#allocation2 + $0x18] sm:$0xff]
      %v358 = vld [vmem:[#allocation2 + $0x20] sm:$0xff]
      %v359 = vld [vmem:[#allocation2 + $0x28] sm:$0xff]
      %v360 = vld [vmem:[#allocation2 + $0x30] sm:$0xff]
      %v361 = vld [vmem:[#allocation2 + $0x38] sm:$0xff]
      %v362 = vld [vmem:[#allocation2 + $0x40] sm:$0xff]
      %v363 = vld [vmem:[#allocation2 + $0x48] sm:$0xff]
      %v364 = vld [vmem:[#allocation2 + $0x50] sm:$0xff]
      %v365 = vld [vmem:[#allocation2 + $0x58] sm:$0xff]
      %v366 = vld [vmem:[#allocation2 + $0x60] sm:$0xff]
      %v367 = vld [vmem:[#allocation2 + $0x68] sm:$0xff]
      %v368 = vld [vmem:[#allocation2 + $0x70] sm:$0xff]
      %v369 = vld [vmem:[#allocation2 + $0x78] sm:$0xff]
      %v370 = vld [vmem:[#allocation2 + $0x80] sm:$0xff]
      %v371 = vld [vmem:[#allocation2 + $0x88] sm:$0xff]
      %v372 = vld [vmem:[#allocation2 + $0x90] sm:$0xff]
      %v373 = vld [vmem:[#allocation2 + $0x98] sm:$0xff]
      %v374 = vld [vmem:[#allocation2 + $0xa0] sm:$0xff]
      %v375 = vld [vmem:[#allocation2 + $0xa8] sm:$0xff]
      %v376 = vld [vmem:[#allocation2 + $0xb0] sm:$0xff]
      %v377 = vld [vmem:[#allocation2 + $0xb8] sm:$0xff]
      %v378 = vld [vmem:[#allocation2 + $0xc0] sm:$0xff]
      %v379 = vld [vmem:[#allocation2 + $0xc8] sm:$0xff]
      %v380 = vld [vmem:[#allocation2 + $0xd0] sm:$0xff]
      %v381 = vld [vmem:[#allocation2 + $0xd8] sm:$0xff]
      %v382 = vld [vmem:[#allocation2 + $0xe0] sm:$0xff]
      %v383 = vld [vmem:[#allocation2 + $0xe8] sm:$0xff]
      %v384 = vld [vmem:[#allocation2 + $0xf0] sm:$0xff]
      %v385 = vld [vmem:[#allocation2 + $0xf8] sm:$0xff]
      %v386 = vld [vmem:[%s282] sm:$0xff]
      %v387 = vld [vmem:[%s282 + $0x8] sm:$0xff]
      %v388 = vld [vmem:[%s282 + $0x10] sm:$0xff]
      %v389 = vld [vmem:[%s282 + $0x18] sm:$0xff]
      %v390 = vld [vmem:[%s282 + $0x20] sm:$0xff]
      %v391 = vld [vmem:[%s282 + $0x28] sm:$0xff]
      %v392 = vld [vmem:[%s282 + $0x30] sm:$0xff]
      %v393 = vld [vmem:[%s282 + $0x38] sm:$0xff]
      %v394 = vld [vmem:[%s282 + $0x40] sm:$0xff]
      %v395 = vld [vmem:[%s282 + $0x48] sm:$0xff]
      %v396 = vld [vmem:[%s282 + $0x50] sm:$0xff]
      %v397 = vld [vmem:[%s282 + $0x58] sm:$0xff]
      %v398 = vld [vmem:[%s282 + $0x60] sm:$0xff]
      %v399 = vld [vmem:[%s282 + $0x68] sm:$0xff]
      %v400 = vld [vmem:[%s282 + $0x70] sm:$0xff]
      %v401 = vld [vmem:[%s282 + $0x78] sm:$0xff]
      %v402 = vld [vmem:[%s282 + $0x80] sm:$0xff]
      %v403 = vld [vmem:[%s282 + $0x88] sm:$0xff]
      %v404 = vld [vmem:[%s282 + $0x90] sm:$0xff]
      %v405 = vld [vmem:[%s282 + $0x98] sm:$0xff]
      %v406 = vld [vmem:[%s282 + $0xa0] sm:$0xff]
      %v407 = vld [vmem:[%s282 + $0xa8] sm:$0xff]
      %v408 = vld [vmem:[%s282 + $0xb0] sm:$0xff]
      %v409 = vld [vmem:[%s282 + $0xb8] sm:$0xff]
      %v410 = vld [vmem:[%s282 + $0xc0] sm:$0xff]
      %v411 = vld [vmem:[%s282 + $0xc8] sm:$0xff]
      %v412 = vld [vmem:[%s282 + $0xd0] sm:$0xff]
      %v413 = vld [vmem:[%s282 + $0xd8] sm:$0xff]
      %v414 = vld [vmem:[%s282 + $0xe0] sm:$0xff]
      %v415 = vld [vmem:[%s282 + $0xe8] sm:$0xff]
      %v416 = vld [vmem:[%s282 + $0xf0] sm:$0xff]
      %v417 = vld [vmem:[%s282 + $0xf8] sm:$0xff]
      %v418 = vld [vmem:[%s292] sm:$0xf]
      %v419 = vld [vmem:[%s292 + $0x4] sm:$0xf]
      %v420 = vld [vmem:[%s292 + $0x8] sm:$0xf]
      %v421 = vld [vmem:[%s292 + $0xc] sm:$0xf]
      %v422 = vld [vmem:[%s292 + $0x10] sm:$0xf]
      %v423 = vld [vmem:[%s292 + $0x14] sm:$0xf]
      %v424 = vld [vmem:[%s292 + $0x18] sm:$0xf]
      %v425 = vld [vmem:[%s292 + $0x1c] sm:$0xf]
      %v426 = vld [vmem:[%s292 + $0x20] sm:$0xf]
      %v427 = vld [vmem:[%s292 + $0x24] sm:$0xf]
      %v428 = vld [vmem:[%s292 + $0x28] sm:$0xf]
      %v429 = vld [vmem:[%s292 + $0x2c] sm:$0xf]
      %v430 = vld [vmem:[%s292 + $0x30] sm:$0xf]
      %v431 = vld [vmem:[%s292 + $0x34] sm:$0xf]
      %v432 = vld [vmem:[%s292 + $0x38] sm:$0xf]
      %v433 = vld [vmem:[%s292 + $0x3c] sm:$0xf]
      %v434 = vld [vmem:[%s292 + $0x40] sm:$0xf]
      %v435 = vld [vmem:[%s292 + $0x44] sm:$0xf]
      %v436 = vld [vmem:[%s292 + $0x48] sm:$0xf]
      %v437 = vld [vmem:[%s292 + $0x4c] sm:$0xf]
      %v438 = vld [vmem:[%s292 + $0x50] sm:$0xf]
      %v439 = vld [vmem:[%s292 + $0x54] sm:$0xf]
      %v440 = vld [vmem:[%s292 + $0x58] sm:$0xf]
      %v441 = vld [vmem:[%s292 + $0x5c] sm:$0xf]
      %v442 = vld [vmem:[%s292 + $0x60] sm:$0xf]
      %v443 = vld [vmem:[%s292 + $0x64] sm:$0xf]
      %v444 = vld [vmem:[%s292 + $0x68] sm:$0xf]
      %v445 = vld [vmem:[%s292 + $0x6c] sm:$0xf]
      %v446 = vld [vmem:[%s292 + $0x70] sm:$0xf]
      %v447 = vld [vmem:[%s292 + $0x74] sm:$0xf]
      %v448 = vld [vmem:[%s292 + $0x78] sm:$0xf]
      %v449 = vld [vmem:[%s292 + $0x7c] sm:$0xf]
      %v482 = vunpack.c.l.b16 %v386
      %v483 = vunpack.c.h.b16 %v386
      %v484 = vunpack.c.l.b16 %v387
      %v485 = vunpack.c.h.b16 %v387
      %v486 = vunpack.c.l.b16 %v388
      %v487 = vunpack.c.h.b16 %v388
      %v488 = vunpack.c.l.b16 %v389
      %v489 = vunpack.c.h.b16 %v389
      %v490 = vunpack.c.l.b16 %v390
      %v491 = vunpack.c.h.b16 %v390
      %v492 = vunpack.c.l.b16 %v391
      %v493 = vunpack.c.h.b16 %v391
      %v494 = vunpack.c.l.b16 %v392
      %v495 = vunpack.c.h.b16 %v392
      %v496 = vunpack.c.l.b16 %v393
      %v497 = vunpack.c.h.b16 %v393
      %v498 = vunpack.c.l.b16 %v394
      %v499 = vunpack.c.h.b16 %v394
      %v500 = vunpack.c.l.b16 %v395
      %v501 = vunpack.c.h.b16 %v395
      %v502 = vunpack.c.l.b16 %v396
      %v503 = vunpack.c.h.b16 %v396
      %v504 = vunpack.c.l.b16 %v397
      %v505 = vunpack.c.h.b16 %v397
      %v506 = vunpack.c.l.b16 %v398
      %v507 = vunpack.c.h.b16 %v398
      %v508 = vunpack.c.l.b16 %v399
      %v509 = vunpack.c.h.b16 %v399
      %v510 = vunpack.c.l.b16 %v400
      %v511 = vunpack.c.h.b16 %v400
      %v512 = vunpack.c.l.b16 %v401
      %v513 = vunpack.c.h.b16 %v401
      %v514 = vunpack.c.l.b16 %v402
      %v515 = vunpack.c.h.b16 %v402
      %v516 = vunpack.c.l.b16 %v403
      %v517 = vunpack.c.h.b16 %v403
      %v518 = vunpack.c.l.b16 %v404
      %v519 = vunpack.c.h.b16 %v404
      %v520 = vunpack.c.l.b16 %v405
      %v521 = vunpack.c.h.b16 %v405
      %v522 = vunpack.c.l.b16 %v406
      %v523 = vunpack.c.h.b16 %v406
      %v524 = vunpack.c.l.b16 %v407
      %v525 = vunpack.c.h.b16 %v407
      %v526 = vunpack.c.l.b16 %v408
      %v527 = vunpack.c.h.b16 %v408
      %v528 = vunpack.c.l.b16 %v409
      %v529 = vunpack.c.h.b16 %v409
      %v530 = vunpack.c.l.b16 %v410
      %v531 = vunpack.c.h.b16 %v410
      %v532 = vunpack.c.l.b16 %v411
      %v533 = vunpack.c.h.b16 %v411
      %v534 = vunpack.c.l.b16 %v412
      %v535 = vunpack.c.h.b16 %v412
      %v536 = vunpack.c.l.b16 %v413
      %v537 = vunpack.c.h.b16 %v413
      %v538 = vunpack.c.l.b16 %v414
      %v539 = vunpack.c.h.b16 %v414
      %v540 = vunpack.c.l.b16 %v415
      %v541 = vunpack.c.h.b16 %v415
      %v542 = vunpack.c.l.b16 %v416
      %v543 = vunpack.c.h.b16 %v416
      %v544 = vunpack.c.l.b16 %v417
      %v545 = vunpack.c.h.b16 %v417
      %v546 = vpack.c.b16 %v484, %v482
      %v547 = vpack.c.b16 %v485, %v483
      %v548 = vpack.c.b16 %v488, %v486
      %v549 = vpack.c.b16 %v489, %v487
      %v550 = vpack.c.b16 %v492, %v490
      %v551 = vpack.c.b16 %v493, %v491
      %v552 = vpack.c.b16 %v496, %v494
      %v553 = vpack.c.b16 %v497, %v495
      %v554 = vpack.c.b16 %v500, %v498
      %v555 = vpack.c.b16 %v501, %v499
      %v556 = vpack.c.b16 %v504, %v502
      %v557 = vpack.c.b16 %v505, %v503
      %v558 = vpack.c.b16 %v508, %v506
      %v559 = vpack.c.b16 %v509, %v507
      %v560 = vpack.c.b16 %v512, %v510
      %v561 = vpack.c.b16 %v513, %v511
      %v562 = vpack.c.b16 %v516, %v514
      %v563 = vpack.c.b16 %v517, %v515
      %v564 = vpack.c.b16 %v520, %v518
      %v565 = vpack.c.b16 %v521, %v519
      %v566 = vpack.c.b16 %v524, %v522
      %v567 = vpack.c.b16 %v525, %v523
      %v568 = vpack.c.b16 %v528, %v526
      %v569 = vpack.c.b16 %v529, %v527
      %v570 = vpack.c.b16 %v532, %v530
      %v571 = vpack.c.b16 %v533, %v531
      %v572 = vpack.c.b16 %v536, %v534
      %v573 = vpack.c.b16 %v537, %v535
      %v574 = vpack.c.b16 %v540, %v538
      %v575 = vpack.c.b16 %v541, %v539
      %v576 = vpack.c.b16 %v544, %v542
      %v577 = vpack.c.b16 %v545, %v543
      %v642 = vunpack.c.l.b16 %v418
      %v643 = vunpack.c.l.b16 %v419
      %v644 = vunpack.c.l.b16 %v420
      %v645 = vunpack.c.l.b16 %v421
      %v646 = vunpack.c.l.b16 %v422
      %v647 = vunpack.c.l.b16 %v423
      %v648 = vunpack.c.l.b16 %v424
      %v649 = vunpack.c.l.b16 %v425
      %v650 = vunpack.c.l.b16 %v426
      %v651 = vunpack.c.l.b16 %v427
      %v652 = vunpack.c.l.b16 %v428
      %v653 = vunpack.c.l.b16 %v429
      %v654 = vunpack.c.l.b16 %v430
      %v655 = vunpack.c.l.b16 %v431
      %v656 = vunpack.c.l.b16 %v432
      %v657 = vunpack.c.l.b16 %v433
      %v658 = vunpack.c.l.b16 %v434
      %v659 = vunpack.c.l.b16 %v435
      %v660 = vunpack.c.l.b16 %v436
      %v661 = vunpack.c.l.b16 %v437
      %v662 = vunpack.c.l.b16 %v438
      %v663 = vunpack.c.l.b16 %v439
      %v664 = vunpack.c.l.b16 %v440
      %v665 = vunpack.c.l.b16 %v441
      %v666 = vunpack.c.l.b16 %v442
      %v667 = vunpack.c.l.b16 %v443
      %v668 = vunpack.c.l.b16 %v444
      %v669 = vunpack.c.l.b16 %v445
      %v670 = vunpack.c.l.b16 %v446
      %v671 = vunpack.c.l.b16 %v447
      %v672 = vunpack.c.l.b16 %v448
      %v673 = vunpack.c.l.b16 %v449
      %v674 = vpack.c.b16 %v643, %v642
      %v675 = vpack.c.b16 %v645, %v644
      %v676 = vpack.c.b16 %v647, %v646
      %v677 = vpack.c.b16 %v649, %v648
      %v678 = vpack.c.b16 %v651, %v650
      %v679 = vpack.c.b16 %v653, %v652
      %v680 = vpack.c.b16 %v655, %v654
      %v681 = vpack.c.b16 %v657, %v656
      %v682 = vpack.c.b16 %v659, %v658
      %v683 = vpack.c.b16 %v661, %v660
      %v684 = vpack.c.b16 %v663, %v662
      %v685 = vpack.c.b16 %v665, %v664
      %v686 = vpack.c.b16 %v667, %v666
      %v687 = vpack.c.b16 %v669, %v668
      %v688 = vpack.c.b16 %v671, %v670
      %v689 = vpack.c.b16 %v673, %v672
      %706 = vmatprep.subr.bf16.mxu0 0
      %707 = vmatpush1.bf16.msra.mxu0 %v674
      %708 = vmatprep.subr.bf16.mxu0 0
      %709 = vmatpush1.bf16.msra.mxu0 %v675
      %710 = vmatprep.subr.bf16.mxu0 0
      %711 = vmatpush1.bf16.msra.mxu0 %v676
      %712 = vmatprep.subr.bf16.mxu0 0
      %713 = vmatpush1.bf16.msra.mxu0 %v677
      %714 = vmatprep.subr.bf16.mxu0 0
      %715 = vmatpush1.bf16.msra.mxu0 %v678
      %716 = vmatprep.subr.bf16.mxu0 0
      %717 = vmatpush1.bf16.msra.mxu0 %v679
      %718 = vmatprep.subr.bf16.mxu0 0
      %719 = vmatpush1.bf16.msra.mxu0 %v680
      %720 = vmatprep.subr.bf16.mxu0 0
      %721 = vmatpush1.bf16.msra.mxu0 %v681
      %722 = vmatprep.subr.bf16.mxu0 0
      %723 = vmatpush1.bf16.msra.mxu0 %v682
      %724 = vmatprep.subr.bf16.mxu0 0
      %725 = vmatpush1.bf16.msra.mxu0 %v683
      %726 = vmatprep.subr.bf16.mxu0 0
      %727 = vmatpush1.bf16.msra.mxu0 %v684
      %728 = vmatprep.subr.bf16.mxu0 0
      %729 = vmatpush1.bf16.msra.mxu0 %v685
      %730 = vmatprep.subr.bf16.mxu0 0
      %731 = vmatpush1.bf16.msra.mxu0 %v686
      %732 = vmatprep.subr.bf16.mxu0 0
      %733 = vmatpush1.bf16.msra.mxu0 %v687
      %734 = vmatprep.subr.bf16.mxu0 0
      %735 = vmatpush1.bf16.msra.mxu0 %v688
      %736 = vmatprep.subr.bf16.mxu0 0
      %737 = vmatpush1.bf16.msra.mxu0 %v689
      %738 = vmatprep.mubr.bf16.mxu0 %v547
      %739 = vmatmul.mubr.bf16.gmra.mrb[0].mxu0 %v546
      %v740 = vpop.f32.mrb[0].mxu0
      %v741 = vadd.f32 0.0, %v740
      %v742 = vpop.f32.mrb[0].mxu0
      %v743 = vpop.f32.mrb[0].mxu0
      %v744 = vadd.f32 0.0, %v743
      %v745 = vpop.f32.mrb[0].mxu0
      %746 = vmatprep.mubr.bf16.mxu0 %v549
      %747 = vmatmul.mubr.bf16.gmra.mrb[0].mxu0 %v548
      %v748 = vpop.f32.mrb[0].mxu0
      %v749 = vadd.f32 0.0, %v748
      %v750 = vpop.f32.mrb[0].mxu0
      %v751 = vpop.f32.mrb[0].mxu0
      %v752 = vadd.f32 0.0, %v751
      %v753 = vpop.f32.mrb[0].mxu0
      %754 = vmatprep.mubr.bf16.mxu0 %v551
      %755 = vmatmul.mubr.bf16.gmra.mrb[0].mxu0 %v550
      %v756 = vpop.f32.mrb[0].mxu0
      %v757 = vadd.f32 0.0, %v756
      %v758 = vpop.f32.mrb[0].mxu0
      %v759 = vpop.f32.mrb[0].mxu0
      %v760 = vadd.f32 0.0, %v759
      %v761 = vpop.f32.mrb[0].mxu0
      %762 = vmatprep.mubr.bf16.mxu0 %v553
      %763 = vmatmul.mubr.bf16.gmra.mrb[0].mxu0 %v552
      %v764 = vpop.f32.mrb[0].mxu0
      %v765 = vadd.f32 0.0, %v764
      %v766 = vpop.f32.mrb[0].mxu0
      %v767 = vpop.f32.mrb[0].mxu0
      %v768 = vadd.f32 0.0, %v767
      %v769 = vpop.f32.mrb[0].mxu0
      %770 = vmatprep.mubr.bf16.mxu0 %v555
      %771 = vmatmul.mubr.bf16.gmra.mrb[0].mxu0 %v554
      %v772 = vpop.f32.mrb[0].mxu0
      %v773 = vadd.f32 0.0, %v772
      %v774 = vpop.f32.mrb[0].mxu0
      %v775 = vpop.f32.mrb[0].mxu0
      %v776 = vadd.f32 0.0, %v775
      %v777 = vpop.f32.mrb[0].mxu0
      %778 = vmatprep.mubr.bf16.mxu0 %v557
      %779 = vmatmul.mubr.bf16.gmra.mrb[0].mxu0 %v556
      %v780 = vpop.f32.mrb[0].mxu0
      %v781 = vadd.f32 0.0, %v780
      %v782 = vpop.f32.mrb[0].mxu0
      %v783 = vpop.f32.mrb[0].mxu0
      %v784 = vadd.f32 0.0, %v783
      %v785 = vpop.f32.mrb[0].mxu0
      %786 = vmatprep.mubr.bf16.mxu0 %v559
      %787 = vmatmul.mubr.bf16.gmra.mrb[0].mxu0 %v558
      %v788 = vpop.f32.mrb[0].mxu0
      %v789 = vadd.f32 0.0, %v788
      %v790 = vpop.f32.mrb[0].mxu0
      %v791 = vpop.f32.mrb[0].mxu0
      %v792 = vadd.f32 0.0, %v791
      %v793 = vpop.f32.mrb[0].mxu0
      %794 = vmatprep.mubr.bf16.mxu0 %v561
      %795 = vmatmul.mubr.bf16.gmra.mrb[0].mxu0 %v560
      %v796 = vpop.f32.mrb[0].mxu0
      %v797 = vadd.f32 0.0, %v796
      %v798 = vpop.f32.mrb[0].mxu0
      %v799 = vpop.f32.mrb[0].mxu0
      %v800 = vadd.f32 0.0, %v799
      %v801 = vpop.f32.mrb[0].mxu0
      %802 = vmatprep.mubr.bf16.mxu0 %v563
      %803 = vmatmul.mubr.bf16.gmra.mrb[0].mxu0 %v562
      %v804 = vpop.f32.mrb[0].mxu0
      %v805 = vadd.f32 0.0, %v804
      %v806 = vpop.f32.mrb[0].mxu0
      %v807 = vpop.f32.mrb[0].mxu0
      %v808 = vadd.f32 0.0, %v807
      %v809 = vpop.f32.mrb[0].mxu0
      %810 = vmatprep.mubr.bf16.mxu0 %v565
      %811 = vmatmul.mubr.bf16.gmra.mrb[0].mxu0 %v564
      %v812 = vpop.f32.mrb[0].mxu0
      %v813 = vadd.f32 0.0, %v812
      %v814 = vpop.f32.mrb[0].mxu0
      %v815 = vpop.f32.mrb[0].mxu0
      %v816 = vadd.f32 0.0, %v815
      %v817 = vpop.f32.mrb[0].mxu0
      %818 = vmatprep.mubr.bf16.mxu0 %v567
      %819 = vmatmul.mubr.bf16.gmra.mrb[0].mxu0 %v566
      %v820 = vpop.f32.mrb[0].mxu0
      %v821 = vadd.f32 0.0, %v820
      %v822 = vpop.f32.mrb[0].mxu0
      %v823 = vpop.f32.mrb[0].mxu0
      %v824 = vadd.f32 0.0, %v823
      %v825 = vpop.f32.mrb[0].mxu0
      %826 = vmatprep.mubr.bf16.mxu0 %v569
      %827 = vmatmul.mubr.bf16.gmra.mrb[0].mxu0 %v568
      %v828 = vpop.f32.mrb[0].mxu0
      %v829 = vadd.f32 0.0, %v828
      %v830 = vpop.f32.mrb[0].mxu0
      %v831 = vpop.f32.mrb[0].mxu0
      %v832 = vadd.f32 0.0, %v831
      %v833 = vpop.f32.mrb[0].mxu0
      %834 = vmatprep.mubr.bf16.mxu0 %v571
      %835 = vmatmul.mubr.bf16.gmra.mrb[0].mxu0 %v570
      %v836 = vpop.f32.mrb[0].mxu0
      %v837 = vadd.f32 0.0, %v836
      %v838 = vpop.f32.mrb[0].mxu0
      %v839 = vpop.f32.mrb[0].mxu0
      %v840 = vadd.f32 0.0, %v839
      %v841 = vpop.f32.mrb[0].mxu0
      %842 = vmatprep.mubr.bf16.mxu0 %v573
      %843 = vmatmul.mubr.bf16.gmra.mrb[0].mxu0 %v572
      %v844 = vpop.f32.mrb[0].mxu0
      %v845 = vadd.f32 0.0, %v844
      %v846 = vpop.f32.mrb[0].mxu0
      %v847 = vpop.f32.mrb[0].mxu0
      %v848 = vadd.f32 0.0, %v847
      %v849 = vpop.f32.mrb[0].mxu0
      %850 = vmatprep.mubr.bf16.mxu0 %v575
      %851 = vmatmul.mubr.bf16.gmra.mrb[0].mxu0 %v574
      %v852 = vpop.f32.mrb[0].mxu0
      %v853 = vadd.f32 0.0, %v852
      %v854 = vpop.f32.mrb[0].mxu0
      %v855 = vpop.f32.mrb[0].mxu0
      %v856 = vadd.f32 0.0, %v855
      %v857 = vpop.f32.mrb[0].mxu0
      %858 = vmatprep.mubr.bf16.mxu0 %v577
      %859 = vmatmul.mubr.bf16.gmra.mrb[0].mxu0 %v576
      %v860 = vpop.f32.mrb[0].mxu0
      %v861 = vadd.f32 0.0, %v860
      %v862 = vpop.f32.mrb[0].mxu0
      %v863 = vpop.f32.mrb[0].mxu0
      %v864 = vadd.f32 0.0, %v863
      %v865 = vpop.f32.mrb[0].mxu0
      %866 = vdwg.mxu0
      %v867 = vadd.f32 %v354, %v741
      %v868 = vadd.f32 %v355, %v744
      %v869 = vadd.f32 %v356, %v749
      %v870 = vadd.f32 %v357, %v752
      %v871 = vadd.f32 %v358, %v757
      %v872 = vadd.f32 %v359, %v760
      %v873 = vadd.f32 %v360, %v765
      %v874 = vadd.f32 %v361, %v768
      %v875 = vadd.f32 %v362, %v773
      %v876 = vadd.f32 %v363, %v776
      %v877 = vadd.f32 %v364, %v781
      %v878 = vadd.f32 %v365, %v784
      %v879 = vadd.f32 %v366, %v789
      %v880 = vadd.f32 %v367, %v792
      %v881 = vadd.f32 %v368, %v797
      %v882 = vadd.f32 %v369, %v800
      %v883 = vadd.f32 %v370, %v805
      %v884 = vadd.f32 %v371, %v808
      %v885 = vadd.f32 %v372, %v813
      %v886 = vadd.f32 %v373, %v816
      %v887 = vadd.f32 %v374, %v821
      %v888 = vadd.f32 %v375, %v824
      %v889 = vadd.f32 %v376, %v829
      %v890 = vadd.f32 %v377, %v832
      %v891 = vadd.f32 %v378, %v837
      %v892 = vadd.f32 %v379, %v840
      %v893 = vadd.f32 %v380, %v845
      %v894 = vadd.f32 %v381, %v848
      %v895 = vadd.f32 %v382, %v853
      %v896 = vadd.f32 %v383, %v856
      %v897 = vadd.f32 %v384, %v861
      %v898 = vadd.f32 %v385, %v864
      %899 = vst [vmem:[#allocation2] sm:$0xff] %v867
      %900 = vst [vmem:[#allocation2 + $0x8] sm:$0xff] %v868
      %901 = vst [vmem:[#allocation2 + $0x10] sm:$0xff] %v869
      %902 = vst [vmem:[#allocation2 + $0x18] sm:$0xff] %v870
      %903 = vst [vmem:[#allocation2 + $0x20] sm:$0xff] %v871
      %904 = vst [vmem:[#allocation2 + $0x28] sm:$0xff] %v872
      %905 = vst [vmem:[#allocation2 + $0x30] sm:$0xff] %v873
      %906 = vst [vmem:[#allocation2 + $0x38] sm:$0xff] %v874
      %907 = vst [vmem:[#allocation2 + $0x40] sm:$0xff] %v875
      %908 = vst [vmem:[#allocation2 + $0x48] sm:$0xff] %v876
      %909 = vst [vmem:[#allocation2 + $0x50] sm:$0xff] %v877
      %910 = vst [vmem:[#allocation2 + $0x58] sm:$0xff] %v878
      %911 = vst [vmem:[#allocation2 + $0x60] sm:$0xff] %v879
      %912 = vst [vmem:[#allocation2 + $0x68] sm:$0xff] %v880
      %913 = vst [vmem:[#allocation2 + $0x70] sm:$0xff] %v881
      %914 = vst [vmem:[#allocation2 + $0x78] sm:$0xff] %v882
      %915 = vst [vmem:[#allocation2 + $0x80] sm:$0xff] %v883
      %916 = vst [vmem:[#allocation2 + $0x88] sm:$0xff] %v884
      %917 = vst [vmem:[#allocation2 + $0x90] sm:$0xff] %v885
      %918 = vst [vmem:[#allocation2 + $0x98] sm:$0xff] %v886
      %919 = vst [vmem:[#allocation2 + $0xa0] sm:$0xff] %v887
      %920 = vst [vmem:[#allocation2 + $0xa8] sm:$0xff] %v888
      %921 = vst [vmem:[#allocation2 + $0xb0] sm:$0xff] %v889
      %922 = vst [vmem:[#allocation2 + $0xb8] sm:$0xff] %v890
      %923 = vst [vmem:[#allocation2 + $0xc0] sm:$0xff] %v891
      %924 = vst [vmem:[#allocation2 + $0xc8] sm:$0xff] %v892
      %925 = vst [vmem:[#allocation2 + $0xd0] sm:$0xff] %v893
      %926 = vst [vmem:[#allocation2 + $0xd8] sm:$0xff] %v894
      %927 = vst [vmem:[#allocation2 + $0xe0] sm:$0xff] %v895
      %928 = vst [vmem:[#allocation2 + $0xe8] sm:$0xff] %v896
      %929 = vst [vmem:[#allocation2 + $0xf0] sm:$0xff] %v897
      %930 = vst [vmem:[#allocation2 + $0xf8] sm:$0xff] %v898
      // Predicated region
      $region33: #{bottleneck_forward.8} parent=27 // pred_check
        %p931 = pneg %p318
      $region34: #{bottleneck_forward.8} parent=27 // pred_check_branch
        %933 = sbr.rel (%p931) target = $region36
      $region35: #{bottleneck_forward.8} parent=27 // pred_region
        %v934 = vld [vmem:[#allocation2] sm:$0xff]
        %v935 = vld [vmem:[#allocation2 + $0x8] sm:$0xff]
        %v936 = vld [vmem:[#allocation2 + $0x10] sm:$0xff]
        %v937 = vld [vmem:[#allocation2 + $0x18] sm:$0xff]
        %v938 = vld [vmem:[#allocation2 + $0x20] sm:$0xff]
        %v939 = vld [vmem:[#allocation2 + $0x28] sm:$0xff]
        %v940 = vld [vmem:[#allocation2 + $0x30] sm:$0xff]
        %v941 = vld [vmem:[#allocation2 + $0x38] sm:$0xff]
        %v942 = vld [vmem:[#allocation2 + $0x40] sm:$0xff]
        %v943 = vld [vmem:[#allocation2 + $0x48] sm:$0xff]
        %v944 = vld [vmem:[#allocation2 + $0x50] sm:$0xff]
        %v945 = vld [vmem:[#allocation2 + $0x58] sm:$0xff]
        %v946 = vld [vmem:[#allocation2 + $0x60] sm:$0xff]
        %v947 = vld [vmem:[#allocation2 + $0x68] sm:$0xff]
        %v948 = vld [vmem:[#allocation2 + $0x70] sm:$0xff]
        %v949 = vld [vmem:[#allocation2 + $0x78] sm:$0xff]
        %v950 = vld [vmem:[#allocation2 + $0x80] sm:$0xff]
        %v951 = vld [vmem:[#allocation2 + $0x88] sm:$0xff]
        %v952 = vld [vmem:[#allocation2 + $0x90] sm:$0xff]
        %v953 = vld [vmem:[#allocation2 + $0x98] sm:$0xff]
        %v954 = vld [vmem:[#allocation2 + $0xa0] sm:$0xff]
        %v955 = vld [vmem:[#allocation2 + $0xa8] sm:$0xff]
        %v956 = vld [vmem:[#allocation2 + $0xb0] sm:$0xff]
        %v957 = vld [vmem:[#allocation2 + $0xb8] sm:$0xff]
        %v958 = vld [vmem:[#allocation2 + $0xc0] sm:$0xff]
        %v959 = vld [vmem:[#allocation2 + $0xc8] sm:$0xff]
        %v960 = vld [vmem:[#allocation2 + $0xd0] sm:$0xff]
        %v961 = vld [vmem:[#allocation2 + $0xd8] sm:$0xff]
        %v962 = vld [vmem:[#allocation2 + $0xe0] sm:$0xff]
        %v963 = vld [vmem:[#allocation2 + $0xe8] sm:$0xff]
        %v964 = vld [vmem:[#allocation2 + $0xf0] sm:$0xff]
        %v965 = vld [vmem:[#allocation2 + $0xf8] sm:$0xff]
        %v966 = vpack.c.bf16 %v935, %v934
        %v967 = vpack.c.bf16 %v937, %v936
        %v968 = vpack.c.bf16 %v939, %v938
        %v969 = vpack.c.bf16 %v941, %v940
        %v970 = vpack.c.bf16 %v943, %v942
        %v971 = vpack.c.bf16 %v945, %v944
        %v972 = vpack.c.bf16 %v947, %v946
        %v973 = vpack.c.bf16 %v949, %v948
        %v974 = vpack.c.bf16 %v951, %v950
        %v975 = vpack.c.bf16 %v953, %v952
        %v976 = vpack.c.bf16 %v955, %v954
        %v977 = vpack.c.bf16 %v957, %v956
        %v978 = vpack.c.bf16 %v959, %v958
        %v979 = vpack.c.bf16 %v961, %v960
        %v980 = vpack.c.bf16 %v963, %v962
        %v981 = vpack.c.bf16 %v965, %v964
        %v998 = vunpack.c.l.b16 %v966
        %v999 = vunpack.c.h.b16 %v966
        %v1000 = vunpack.c.l.b16 %v967
        %v1001 = vunpack.c.h.b16 %v967
        %v1002 = vunpack.c.l.b16 %v968
        %v1003 = vunpack.c.h.b16 %v968
        %v1004 = vunpack.c.l.b16 %v969
        %v1005 = vunpack.c.h.b16 %v969
        %v1006 = vunpack.c.l.b16 %v970
        %v1007 = vunpack.c.h.b16 %v970
        %v1008 = vunpack.c.l.b16 %v971
        %v1009 = vunpack.c.h.b16 %v971
        %v1010 = vunpack.c.l.b16 %v972
        %v1011 = vunpack.c.h.b16 %v972
        %v1012 = vunpack.c.l.b16 %v973
        %v1013 = vunpack.c.h.b16 %v973
        %v1014 = vunpack.c.l.b16 %v974
        %v1015 = vunpack.c.h.b16 %v974
        %v1016 = vunpack.c.l.b16 %v975
        %v1017 = vunpack.c.h.b16 %v975
        %v1018 = vunpack.c.l.b16 %v976
        %v1019 = vunpack.c.h.b16 %v976
        %v1020 = vunpack.c.l.b16 %v977
        %v1021 = vunpack.c.h.b16 %v977
        %v1022 = vunpack.c.l.b16 %v978
        %v1023 = vunpack.c.h.b16 %v978
        %v1024 = vunpack.c.l.b16 %v979
        %v1025 = vunpack.c.h.b16 %v979
        %v1026 = vunpack.c.l.b16 %v980
        %v1027 = vunpack.c.h.b16 %v980
        %v1028 = vunpack.c.l.b16 %v981
        %v1029 = vunpack.c.h.b16 %v981
        %v1030 = vpack.c.b16 %v998, %v998
        %v1031 = vpack.c.b16 %v999, %v999
        %v1032 = vpack.c.b16 %v1000, %v1000
        %v1033 = vpack.c.b16 %v1001, %v1001
        %v1034 = vpack.c.b16 %v1002, %v1002
        %v1035 = vpack.c.b16 %v1003, %v1003
        %v1036 = vpack.c.b16 %v1004, %v1004
        %v1037 = vpack.c.b16 %v1005, %v1005
        %v1038 = vpack.c.b16 %v1006, %v1006
        %v1039 = vpack.c.b16 %v1007, %v1007
        %v1040 = vpack.c.b16 %v1008, %v1008
        %v1041 = vpack.c.b16 %v1009, %v1009
        %v1042 = vpack.c.b16 %v1010, %v1010
        %v1043 = vpack.c.b16 %v1011, %v1011
        %v1044 = vpack.c.b16 %v1012, %v1012
        %v1045 = vpack.c.b16 %v1013, %v1013
        %v1046 = vpack.c.b16 %v1014, %v1014
        %v1047 = vpack.c.b16 %v1015, %v1015
        %v1048 = vpack.c.b16 %v1016, %v1016
        %v1049 = vpack.c.b16 %v1017, %v1017
        %v1050 = vpack.c.b16 %v1018, %v1018
        %v1051 = vpack.c.b16 %v1019, %v1019
        %v1052 = vpack.c.b16 %v1020, %v1020
        %v1053 = vpack.c.b16 %v1021, %v1021
        %v1054 = vpack.c.b16 %v1022, %v1022
        %v1055 = vpack.c.b16 %v1023, %v1023
        %v1056 = vpack.c.b16 %v1024, %v1024
        %v1057 = vpack.c.b16 %v1025, %v1025
        %v1058 = vpack.c.b16 %v1026, %v1026
        %v1059 = vpack.c.b16 %v1027, %v1027
        %v1060 = vpack.c.b16 %v1028, %v1028
        %v1061 = vpack.c.b16 %v1029, %v1029
        %1094 = vst [vmem:[%s301] sm:$0xf] %v1030
        %1095 = vst [vmem:[%s301 + $0x4] sm:$0xf] %v1031
        %1096 = vst [vmem:[%s301 + $0x8] sm:$0xf] %v1032
        %1097 = vst [vmem:[%s301 + $0xc] sm:$0xf] %v1033
        %1098 = vst [vmem:[%s301 + $0x10] sm:$0xf] %v1034
        %1099 = vst [vmem:[%s301 + $0x14] sm:$0xf] %v1035
        %1100 = vst [vmem:[%s301 + $0x18] sm:$0xf] %v1036
        %1101 = vst [vmem:[%s301 + $0x1c] sm:$0xf] %v1037
        %1102 = vst [vmem:[%s301 + $0x20] sm:$0xf] %v1038
        %1103 = vst [vmem:[%s301 + $0x24] sm:$0xf] %v1039
        %1104 = vst [vmem:[%s301 + $0x28] sm:$0xf] %v1040
        %1105 = vst [vmem:[%s301 + $0x2c] sm:$0xf] %v1041
        %1106 = vst [vmem:[%s301 + $0x30] sm:$0xf] %v1042
        %1107 = vst [vmem:[%s301 + $0x34] sm:$0xf] %v1043
        %1108 = vst [vmem:[%s301 + $0x38] sm:$0xf] %v1044
        %1109 = vst [vmem:[%s301 + $0x3c] sm:$0xf] %v1045
        %1110 = vst [vmem:[%s301 + $0x40] sm:$0xf] %v1046
        %1111 = vst [vmem:[%s301 + $0x44] sm:$0xf] %v1047
        %1112 = vst [vmem:[%s301 + $0x48] sm:$0xf] %v1048
        %1113 = vst [vmem:[%s301 + $0x4c] sm:$0xf] %v1049
        %1114 = vst [vmem:[%s301 + $0x50] sm:$0xf] %v1050
        %1115 = vst [vmem:[%s301 + $0x54] sm:$0xf] %v1051
        %1116 = vst [vmem:[%s301 + $0x58] sm:$0xf] %v1052
        %1117 = vst [vmem:[%s301 + $0x5c] sm:$0xf] %v1053
        %1118 = vst [vmem:[%s301 + $0x60] sm:$0xf] %v1054
        %1119 = vst [vmem:[%s301 + $0x64] sm:$0xf] %v1055
        %1120 = vst [vmem:[%s301 + $0x68] sm:$0xf] %v1056
        %1121 = vst [vmem:[%s301 + $0x6c] sm:$0xf] %v1057
        %1122 = vst [vmem:[%s301 + $0x70] sm:$0xf] %v1058
        %1123 = vst [vmem:[%s301 + $0x74] sm:$0xf] %v1059
        %1124 = vst [vmem:[%s301 + $0x78] sm:$0xf] %v1060
        %1125 = vst [vmem:[%s301 + $0x7c] sm:$0xf] %v1061
        %v1126 = vadd.f32 %v934, %v935
        %v1127 = vadd.f32 %v1126, %v936
        %v1128 = vadd.f32 %v1127, %v937
        %v1129 = vadd.f32 %v1128, %v938
        %v1130 = vadd.f32 %v1129, %v939
        %v1131 = vadd.f32 %v1130, %v940
        %v1132 = vadd.f32 %v1131, %v941
        %v1133 = vadd.f32 %v1132, %v942
        %v1134 = vadd.f32 %v1133, %v943
        %v1135 = vadd.f32 %v1134, %v944
        %v1136 = vadd.f32 %v1135, %v945
        %v1137 = vadd.f32 %v1136, %v946
        %v1138 = vadd.f32 %v1137, %v947
        %v1139 = vadd.f32 %v1138, %v948
        %v1140 = vadd.f32 %v1139, %v949
        %v1141 = vadd.f32 %v1140, %v950
        %v1142 = vadd.f32 %v1141, %v951
        %v1143 = vadd.f32 %v1142, %v952
        %v1144 = vadd.f32 %v1143, %v953
        %v1145 = vadd.f32 %v1144, %v954
        %v1146 = vadd.f32 %v1145, %v955
        %v1147 = vadd.f32 %v1146, %v956
        %v1148 = vadd.f32 %v1147, %v957
        %v1149 = vadd.f32 %v1148, %v958
        %v1150 = vadd.f32 %v1149, %v959
        %v1151 = vadd.f32 %v1150, %v960
        %v1152 = vadd.f32 %v1151, %v961
        %v1153 = vadd.f32 %v1152, %v962
        %v1154 = vadd.f32 %v1153, %v963
        %v1155 = vadd.f32 %v1154, %v964
        %v1156 = vadd.f32 %v1155, %v965
        %v1157 = vrot.slane %v1156, 4
        %v1158 = vadd.f32 %v1156, %v1157
        %v1159 = vrot.slane %v1158, 2
        %v1160 = vadd.f32 %v1158, %v1159
        %v1161 = vrot.slane %v1160, 1
        %v1162 = vadd.f32 %v1160, %v1161
        %1163 = vst [vmem:[%s309] sm:$0xff] %v1162
        %v1164 = vmul.f32 %v934, %v934
        %v1165 = vmul.f32 %v935, %v935
        %v1166 = vmul.f32 %v936, %v936
        %v1167 = vmul.f32 %v937, %v937
        %v1168 = vmul.f32 %v938, %v938
        %v1169 = vmul.f32 %v939, %v939
        %v1170 = vmul.f32 %v940, %v940
        %v1171 = vmul.f32 %v941, %v941
        %v1172 = vmul.f32 %v942, %v942
        %v1173 = vmul.f32 %v943, %v943
        %v1174 = vmul.f32 %v944, %v944
        %v1175 = vmul.f32 %v945, %v945
        %v1176 = vmul.f32 %v946, %v946
        %v1177 = vmul.f32 %v947, %v947
        %v1178 = vmul.f32 %v948, %v948
        %v1179 = vmul.f32 %v949, %v949
        %v1180 = vmul.f32 %v950, %v950
        %v1181 = vmul.f32 %v951, %v951
        %v1182 = vmul.f32 %v952, %v952
        %v1183 = vmul.f32 %v953, %v953
        %v1184 = vmul.f32 %v954, %v954
        %v1185 = vmul.f32 %v955, %v955
        %v1186 = vmul.f32 %v956, %v956
        %v1187 = vmul.f32 %v957, %v957
        %v1188 = vmul.f32 %v958, %v958
        %v1189 = vmul.f32 %v959, %v959
        %v1190 = vmul.f32 %v960, %v960
        %v1191 = vmul.f32 %v961, %v961
        %v1192 = vmul.f32 %v962, %v962
        %v1193 = vmul.f32 %v963, %v963
        %v1194 = vmul.f32 %v964, %v964
        %v1195 = vmul.f32 %v965, %v965
        %v1196 = vadd.f32 %v1164, %v1165
        %v1197 = vadd.f32 %v1196, %v1166
        %v1198 = vadd.f32 %v1197, %v1167
        %v1199 = vadd.f32 %v1198, %v1168
        %v1200 = vadd.f32 %v1199, %v1169
        %v1201 = vadd.f32 %v1200, %v1170
        %v1202 = vadd.f32 %v1201, %v1171
        %v1203 = vadd.f32 %v1202, %v1172
        %v1204 = vadd.f32 %v1203, %v1173
        %v1205 = vadd.f32 %v1204, %v1174
        %v1206 = vadd.f32 %v1205, %v1175
        %v1207 = vadd.f32 %v1206, %v1176
        %v1208 = vadd.f32 %v1207, %v1177
        %v1209 = vadd.f32 %v1208, %v1178
        %v1210 = vadd.f32 %v1209, %v1179
        %v1211 = vadd.f32 %v1210, %v1180
        %v1212 = vadd.f32 %v1211, %v1181
        %v1213 = vadd.f32 %v1212, %v1182
        %v1214 = vadd.f32 %v1213, %v1183
        %v1215 = vadd.f32 %v1214, %v1184
        %v1216 = vadd.f32 %v1215, %v1185
        %v1217 = vadd.f32 %v1216, %v1186
        %v1218 = vadd.f32 %v1217, %v1187
        %v1219 = vadd.f32 %v1218, %v1188
        %v1220 = vadd.f32 %v1219, %v1189
        %v1221 = vadd.f32 %v1220, %v1190
        %v1222 = vadd.f32 %v1221, %v1191
        %v1223 = vadd.f32 %v1222, %v1192
        %v1224 = vadd.f32 %v1223, %v1193
        %v1225 = vadd.f32 %v1224, %v1194
        %v1226 = vadd.f32 %v1225, %v1195
        %v1227 = vrot.slane %v1226, 4
        %v1228 = vadd.f32 %v1226, %v1227
        %v1229 = vrot.slane %v1228, 2
        %v1230 = vadd.f32 %v1228, %v1229
        %v1231 = vrot.slane %v1230, 1
        %v1232 = vadd.f32 %v1230, %v1231
        %1233 = vst [vmem:[%s316] sm:$0xff] %v1232
      $region36: #{bottleneck_forward.8} parent=27 // pred_fallthru
        _
      %s1234 = smul.u32 32, %s21
      %p1235 = scmp.lt.s32.totalorder %s1234, 63
      %s1236 = scalar_select %p1235, %s1234, 63
      %p1237 = scmp.lt.s32.totalorder %s22, 0
      %s1238 = scalar_select %p1237, %s22, 0
      %s1239 = sadd.s32 %s1238, %s1236
      %s1240 = smul.addr %s1239, 4
      %s1241 = scalar_lea.vmem %s2, %s1240
      %p1242 = scmp.lt.s32.totalorder %s21, 1
      %s1243 = scalar_select %p1242, %s21, 1
      %p1244 = scmp.lt.s32.totalorder %s22, 0
      %s1245 = scalar_select %p1244, %s22, 0
      %s1246 = sadd.s32 %s1245, %s1243
      %s1247 = smul.addr %s1246, 8
      %s1248 = scalar_lea.vmem %s3, %s1247
      %p1249 = scmp.lt.s32.totalorder %s21, 1
      %s1250 = scalar_select %p1249, %s21, 1
      %p1251 = scmp.lt.s32.totalorder %s22, 0
      %s1252 = scalar_select %p1251, %s22, 0
      %s1253 = sadd.s32 %s1252, %s1250
      %s1254 = smul.addr %s1253, 8
      %s1255 = scalar_lea.vmem %s4, %s1254
      // Predicated region
      $region37: #{bottleneck_forward.8} parent=27 // pred_check
        %p1256 = pneg %p111
      $region38: #{bottleneck_forward.8} parent=27 // pred_check_branch
        %1258 = sbr.rel (%p1256) target = $region40
      $region39: #{bottleneck_forward.8} parent=27 // pred_region
        %s1259 = smul.u32 32, %s21
      $region40: #{bottleneck_forward.8} parent=27 // pred_fallthru
        _
      // Predicated region
      $region41: #{bottleneck_forward.8} parent=27 // pred_check
        %p1260 = pneg %p139
      $region42: #{bottleneck_forward.8} parent=27 // pred_check_branch
        %1262 = sbr.rel (%p1260) target = $region44
      $region43: #{bottleneck_forward.8} parent=27 // pred_region
        _
      $region44: #{bottleneck_forward.8} parent=27 // pred_fallthru
        _
      // Predicated region
      $region45: #{bottleneck_forward.8} parent=27 // pred_check
        %p1263 = pneg %p167
      $region46: #{bottleneck_forward.8} parent=27 // pred_check_branch
        %1265 = sbr.rel (%p1263) target = $region48
      $region47: #{bottleneck_forward.8} parent=27 // pred_region
        _
      $region48: #{bottleneck_forward.8} parent=27 // pred_fallthru
        _
    $region28: #{bottleneck_forward.8} parent=5 // pred_fallthru
      _
    %p1266 = scmp.le.s32.totalorder 2, %s11
    // Predicated region
    $region49: #{bottleneck_forward.8} parent=5 // pred_check
      %p1267 = pneg %p1266
    $region50: #{bottleneck_forward.8} parent=5 // pred_check_branch
      %1269 = sbr.rel (%p1267) target = $region52
    $region51: #{bottleneck_forward.8} parent=5 // pred_region
      %s1270 = ssub.s32 %s11, 2
      // Predicated region
      $region53: #{bottleneck_forward.8} parent=51 // pred_check
        %p1271 = pneg %p117
      $region54: #{bottleneck_forward.8} parent=51 // pred_check_branch
        %1273 = sbr.rel (%p1271) target = $region56
      $region55: #{bottleneck_forward.8} parent=51 // pred_region
        %s1274 = smul.u32 32, %s24
        %p1275 = scmp.lt.s32.totalorder %s1274, 63
        %s1276 = scalar_select %p1275, %s1274, 63
        %p1277 = scmp.lt.s32.totalorder %s25, 0
        %s1278 = scalar_select %p1277, %s25, 0
        %s1279 = sadd.s32 %s1278, %s1276
        %s1280 = smul.addr %s1279, 4
        %s1281 = scalar_lea.vmem %s2, %s1280
      $region56: #{bottleneck_forward.8} parent=51 // pred_fallthru
        _
      // Predicated region
      $region57: #{bottleneck_forward.8} parent=51 // pred_check
        %p1282 = pneg %p145
      $region58: #{bottleneck_forward.8} parent=51 // pred_check_branch
        %1284 = sbr.rel (%p1282) target = $region60
      $region59: #{bottleneck_forward.8} parent=51 // pred_region
        %p1285 = scmp.lt.s32.totalorder %s24, 1
        %s1286 = scalar_select %p1285, %s24, 1
        %p1287 = scmp.lt.s32.totalorder %s25, 0
        %s1288 = scalar_select %p1287, %s25, 0
        %s1289 = sadd.s32 %s1288, %s1286
        %s1290 = smul.addr %s1289, 8
        %s1291 = scalar_lea.vmem %s3, %s1290
      $region60: #{bottleneck_forward.8} parent=51 // pred_fallthru
        _
      // Predicated region
      $region61: #{bottleneck_forward.8} parent=51 // pred_check
        %p1292 = pneg %p173
      $region62: #{bottleneck_forward.8} parent=51 // pred_check_branch
        %1294 = sbr.rel (%p1292) target = $region64
      $region63: #{bottleneck_forward.8} parent=51 // pred_region
        %p1295 = scmp.lt.s32.totalorder %s24, 1
        %s1296 = scalar_select %p1295, %s24, 1
        %p1297 = scmp.lt.s32.totalorder %s25, 0
        %s1298 = scalar_select %p1297, %s25, 0
        %s1299 = sadd.s32 %s1298, %s1296
        %s1300 = smul.addr %s1299, 8
        %s1301 = scalar_lea.vmem %s4, %s1300
      $region64: #{bottleneck_forward.8} parent=51 // pred_fallthru
        _
    $region52: #{bottleneck_forward.8} parent=5 // pred_fallthru
      _
  $region6: #{bottleneck_forward.8} parent=0 // loop_footer
    %s15 = sadd.s32 1, %s11
  $region7: #{bottleneck_forward.8} parent=0 // loop_footer_branch
    %10 = sbr.rel target = $region3
  $region8: #{bottleneck_forward.8} parent=0 // loop_exit
    _

// kernel: bottleneck_forward.11
$region0: #{bottleneck_forward.11}
  #allocation0 [shape = 'u32[]', space=smem, size = 0x4, offset = 0x4, fixed_abs, tag = 'smem constant byte address 0x4 - core index']
  #allocation1 [shape = 'u32[144,128]{1,0:T(1,128)}', space=vmem, size = 0x12000, scoped, tag = 'internal scratch']
  %s0 = inlined_call_operand.vmem [shape: bf16[512,128], index: 0, kind: input, shape index: {}]
  %s1 = inlined_call_operand.vmem [shape: f32[1,128], index: 1, kind: input, shape index: {}]
  %s2 = inlined_call_operand.vmem [shape: f32[1,128], index: 2, kind: input, shape index: {}]
  %s3 = inlined_call_operand.vmem [shape: bf16[512,128], index: 3, kind: input, shape index: {}]
  %s4 = inlined_call_operand.vmem [shape: bf16[512,128], index: 4, kind: output, shape index: {}]
  %s5 = sld [smem:[#allocation0]]
  $region49: #{bottleneck_forward.11} parent=0
    _
  %s7 = ssub.s32 1, %s5
  %s8 = scalar_select 0, %s7, %s5
  loop: start=0, step=1, limit=4
  $region2: #{bottleneck_forward.11} parent=0 // loop_pre_header
    _
  $region3: #{bottleneck_forward.11} parent=0 // loop_header
    %s10 = sphi 0, %s14
    %p11 = scmp.ge.s32.totalorder %s10, 4
    %s20 = sphi 0, %s22
    %s23 = sphi 0, %s20
    %s24 = sphi 0, %s23
    %s40 = sphi 0, %s24
    %s44 = sphi 0, %s44
    %s46 = sphi 0, %s44
    %s47 = sphi 0, %s46
    %s61 = sphi 0, %s47
    %s65 = sphi 0, %s65
    %s67 = sphi 0, %s65
    %s68 = sphi 0, %s67
    %s82 = sphi 0, %s68
    %s88 = sphi 0, %s90
    %s91 = sphi 0, %s88
    %s92 = sphi 0, %s91
    %s108 = sphi 0, %s92
    %s114 = sphi 0, %s116
    %s117 = sphi 0, %s114
    %s118 = sphi 0, %s117
    %s134 = sphi 0, %s118
  $region4: #{bottleneck_forward.11} parent=0 // loop_header_branch
    %13 = sbr.rel (%p11) target = $region8
  $region5: #{bottleneck_forward.11} parent=0 // loop_body
    %s15 = ssub.s32 %s10, 1
    %s16 = ssub.s32 %s10, 2
    %s17 = sadd.s32 %s10, 1
    %s18 = ssub.s32 %s10, %s17
    %p19 = scmp.eq.s32.totalorder %s18, 0
    %s21 = sadd.s32 %s20, 1
    %s22 = scalar_select %p19, %s20, %s21
    %p25 = pneg %p19
    %p26 = scmp.eq.s32.totalorder %s10, 1
    %p27 = por %p25, %p26
    %p28 = scmp.ne.s32.totalorder %s20, %s23
    %p29 = scmp.eq.s32.totalorder %s10, 0
    %p30 = por %p28, %p29
    %p31 = scmp.ne.s32.totalorder %s20, %s23
    %p32 = scmp.eq.s32.totalorder %s15, 1
    %p33 = por %p31, %p32
    %p34 = scmp.ne.s32.totalorder %s23, %s24
    %p35 = scmp.eq.s32.totalorder %s15, 0
    %p36 = por %p34, %p35
    %p37 = scmp.ne.s32.totalorder %s23, %s24
    %p38 = scmp.eq.s32.totalorder %s16, 1
    %p39 = por %p37, %p38
    %p41 = scmp.ne.s32.totalorder %s24, %s40
    %p42 = scmp.eq.s32.totalorder %s16, 0
    %p43 = por %p41, %p42
    %s45 = sadd.s32 %s44, 1
    %p48 = scmp.eq.s32.totalorder %s10, 1
    %p49 = scmp.ne.s32.totalorder %s44, %s46
    %p50 = scmp.eq.s32.totalorder %s10, 0
    %p51 = por %p49, %p50
    %p52 = scmp.ne.s32.totalorder %s44, %s46
    %p53 = scmp.eq.s32.totalorder %s15, 1
    %p54 = por %p52, %p53
    %p55 = scmp.ne.s32.totalorder %s46, %s47
    %p56 = scmp.eq.s32.totalorder %s15, 0
    %p57 = por %p55, %p56
    %p58 = scmp.ne.s32.totalorder %s46, %s47
    %p59 = scmp.eq.s32.totalorder %s16, 1
    %p60 = por %p58, %p59
    %p62 = scmp.ne.s32.totalorder %s47, %s61
    %p63 = scmp.eq.s32.totalorder %s16, 0
    %p64 = por %p62, %p63
    %s66 = sadd.s32 %s65, 1
    %p69 = scmp.eq.s32.totalorder %s10, 1
    %p70 = scmp.ne.s32.totalorder %s65, %s67
    %p71 = scmp.eq.s32.totalorder %s10, 0
    %p72 = por %p70, %p71
    %p73 = scmp.ne.s32.totalorder %s65, %s67
    %p74 = scmp.eq.s32.totalorder %s15, 1
    %p75 = por %p73, %p74
    %p76 = scmp.ne.s32.totalorder %s67, %s68
    %p77 = scmp.eq.s32.totalorder %s15, 0
    %p78 = por %p76, %p77
    %p79 = scmp.ne.s32.totalorder %s67, %s68
    %p80 = scmp.eq.s32.totalorder %s16, 1
    %p81 = por %p79, %p80
    %p83 = scmp.ne.s32.totalorder %s68, %s82
    %p84 = scmp.eq.s32.totalorder %s16, 0
    %p85 = por %p83, %p84
    %s86 = ssub.s32 %s10, %s17
    %p87 = scmp.eq.s32.totalorder %s86, 0
    %s89 = sadd.s32 %s88, 1
    %s90 = scalar_select %p87, %s88, %s89
    %p93 = pneg %p87
    %p94 = scmp.eq.s32.totalorder %s10, 1
    %p95 = por %p93, %p94
    %p96 = scmp.ne.s32.totalorder %s88, %s91
    %p97 = scmp.eq.s32.totalorder %s10, 0
    %p98 = por %p96, %p97
    %p99 = scmp.ne.s32.totalorder %s88, %s91
    %p100 = scmp.eq.s32.totalorder %s15, 1
    %p101 = por %p99, %p100
    %p102 = scmp.ne.s32.totalorder %s91, %s92
    %p103 = scmp.eq.s32.totalorder %s15, 0
    %p104 = por %p102, %p103
    %p105 = scmp.ne.s32.totalorder %s91, %s92
    %p106 = scmp.eq.s32.totalorder %s16, 1
    %p107 = por %p105, %p106
    %p109 = scmp.ne.s32.totalorder %s92, %s108
    %p110 = scmp.eq.s32.totalorder %s16, 0
    %p111 = por %p109, %p110
    %s112 = ssub.s32 %s10, %s17
    %p113 = scmp.eq.s32.totalorder %s112, 0
    %s115 = sadd.s32 %s114, 1
    %s116 = scalar_select %p113, %s114, %s115
    %p119 = pneg %p113
    %p120 = scmp.eq.s32.totalorder %s10, 1
    %p121 = por %p119, %p120
    %p122 = scmp.ne.s32.totalorder %s114, %s117
    %p123 = scmp.eq.s32.totalorder %s10, 0
    %p124 = por %p122, %p123
    %p125 = scmp.ne.s32.totalorder %s114, %s117
    %p126 = scmp.eq.s32.totalorder %s15, 1
    %p127 = por %p125, %p126
    %p128 = scmp.ne.s32.totalorder %s117, %s118
    %p129 = scmp.eq.s32.totalorder %s15, 0
    %p130 = por %p128, %p129
    %p131 = scmp.ne.s32.totalorder %s117, %s118
    %p132 = scmp.eq.s32.totalorder %s16, 1
    %p133 = por %p131, %p132
    %p135 = scmp.ne.s32.totalorder %s118, %s134
    %p136 = scmp.eq.s32.totalorder %s16, 0
    %p137 = por %p135, %p136
    %p138 = scmp.le.s32.totalorder 1, %s10
    %p139 = scmp.lt.s32.totalorder %s10, 3
    %p140 = pnand %p138, %p139
    %p141 = pneg %p140
    // Predicated region
    $region9: #{bottleneck_forward.11} parent=5 // pred_check
      _
    $region10: #{bottleneck_forward.11} parent=5 // pred_check_branch
      %143 = sbr.rel (%p140) target = $region12
    $region11: #{bottleneck_forward.11} parent=5 // pred_region
      %s144 = ssub.s32 %s10, 1
      // Predicated region
      $region13: #{bottleneck_forward.11} parent=11 // pred_check
        %p145 = pneg %p57
      $region14: #{bottleneck_forward.11} parent=11 // pred_check_branch
        %147 = sbr.rel (%p145) target = $region16
      $region15: #{bottleneck_forward.11} parent=11 // pred_region
        _
      $region16: #{bottleneck_forward.11} parent=11 // pred_fallthru
        _
      // Predicated region
      $region17: #{bottleneck_forward.11} parent=11 // pred_check
        %p148 = pneg %p78
      $region18: #{bottleneck_forward.11} parent=11 // pred_check_branch
        %150 = sbr.rel (%p148) target = $region20
      $region19: #{bottleneck_forward.11} parent=11 // pred_region
        _
      $region20: #{bottleneck_forward.11} parent=11 // pred_fallthru
        _
    $region12: #{bottleneck_forward.11} parent=5 // pred_fallthru
      _
    %p151 = scmp.lt.s32.totalorder %s10, 2
    // Predicated region
    $region21: #{bottleneck_forward.11} parent=5 // pred_check
      %p152 = pneg %p151
    $region22: #{bottleneck_forward.11} parent=5 // pred_check_branch
      %154 = sbr.rel (%p152) target = $region24
    $region23: #{bottleneck_forward.11} parent=5 // pred_region
      // Predicated region
      $region25: #{bottleneck_forward.11} parent=23 // pred_check
        %p155 = pneg %p30
      $region26: #{bottleneck_forward.11} parent=23 // pred_check_branch
        %157 = sbr.rel (%p155) target = $region28
      $region27: #{bottleneck_forward.11} parent=23 // pred_region
        %s158 = smul.u32 32, %s10
        %p159 = scmp.lt.s32.totalorder %s158, 63
        %s160 = scalar_select %p159, %s158, 63
        %s161 = smul.addr %s160, 4
        %s162 = scalar_lea.vmem %s0, %s161
        %s163 = smul.u32 32, %s10
      $region28: #{bottleneck_forward.11} parent=23 // pred_fallthru
        _
      // Predicated region
      $region29: #{bottleneck_forward.11} parent=23 // pred_check
        %p164 = pneg %p98
      $region30: #{bottleneck_forward.11} parent=23 // pred_check_branch
        %166 = sbr.rel (%p164) target = $region32
      $region31: #{bottleneck_forward.11} parent=23 // pred_region
        %s167 = smul.u32 32, %s10
        %p168 = scmp.lt.s32.totalorder %s167, 63
        %s169 = scalar_select %p168, %s167, 63
        %s170 = smul.addr %s169, 4
        %s171 = scalar_lea.vmem %s3, %s170
        %s172 = smul.u32 32, %s10
      $region32: #{bottleneck_forward.11} parent=23 // pred_fallthru
        _
    $region24: #{bottleneck_forward.11} parent=5 // pred_fallthru
      _
    %p173 = scmp.le.s32.totalorder 1, %s10
    %p174 = scmp.lt.s32.totalorder %s10, 3
    %p175 = pnand %p173, %p174
    %p176 = pneg %p175
    // Predicated region
    $region33: #{bottleneck_forward.11} parent=5 // pred_check
      _
    $region34: #{bottleneck_forward.11} parent=5 // pred_check_branch
      %178 = sbr.rel (%p175) target = $region36
    $region35: #{bottleneck_forward.11} parent=5 // pred_region
      %s179 = ssub.s32 %s10, 1
      %s180 = smul.u32 32, %s15
      %p181 = scmp.lt.s32.totalorder %s180, 63
      %s182 = scalar_select %p181, %s180, 63
      %s183 = smul.addr %s182, 4
      %s184 = scalar_lea.vmem %s0, %s183
      %p185 = pneg %p36
      %p186 = pneg %p33
      %p187 = pneg %p57
      %p188 = pneg %p54
      %p189 = pneg %p78
      %p190 = pneg %p75
      %s191 = smul.u32 32, %s15
      %p192 = scmp.lt.s32.totalorder %s191, 63
      %s193 = scalar_select %p192, %s191, 63
      %s194 = smul.addr %s193, 4
      %s195 = scalar_lea.vmem %s3, %s194
      %p196 = pneg %p104
      %p197 = pneg %p101
      %p198 = pneg %p130
      %p199 = pneg %p127
      %s200 = smul.u32 32, %s15
      %p201 = scmp.lt.s32.totalorder %s200, 63
      %s202 = scalar_select %p201, %s200, 63
      %s203 = smul.addr %s202, 4
      %s204 = scalar_lea.vmem %s4, %s203
      %s205 = smul.u32 32, %s15
      %p206 = scmp.lt.s32.totalorder %s205, 63
      %s207 = scalar_select %p206, %s205, 63
      %s208 = smul.addr %s207, 4
      %s209 = scalar_lea.vmem %s0, %s208
      %s210 = smul.u32 32, %s15
      %s211 = smul.u32 32, %s15
      %p212 = scmp.lt.s32.totalorder %s211, 63
      %s213 = scalar_select %p212, %s211, 63
      %s214 = smul.addr %s213, 4
      %s215 = scalar_lea.vmem %s3, %s214
      %s216 = smul.u32 32, %s15
      %s217 = smul.u32 32, %s15
      %p218 = scmp.lt.s32.totalorder %s217, 63
      %s219 = scalar_select %p218, %s217, 63
      %s220 = smul.addr %s219, 4
      %s221 = scalar_lea.vmem %s4, %s220
      %s222 = smul.u32 32, %s15
      %v223 = vld [vmem:[%s209] sm:$0xf]
      %v224 = vld [vmem:[%s209 + $0x4] sm:$0xf]
      %v225 = vld [vmem:[%s209 + $0x8] sm:$0xf]
      %v226 = vld [vmem:[%s209 + $0xc] sm:$0xf]
      %v227 = vld [vmem:[%s209 + $0x10] sm:$0xf]
      %v228 = vld [vmem:[%s209 + $0x14] sm:$0xf]
      %v229 = vld [vmem:[%s209 + $0x18] sm:$0xf]
      %v230 = vld [vmem:[%s209 + $0x1c] sm:$0xf]
      %v231 = vld [vmem:[%s209 + $0x20] sm:$0xf]
      %v232 = vld [vmem:[%s209 + $0x24] sm:$0xf]
      %v233 = vld [vmem:[%s209 + $0x28] sm:$0xf]
      %v234 = vld [vmem:[%s209 + $0x2c] sm:$0xf]
      %v235 = vld [vmem:[%s209 + $0x30] sm:$0xf]
      %v236 = vld [vmem:[%s209 + $0x34] sm:$0xf]
      %v237 = vld [vmem:[%s209 + $0x38] sm:$0xf]
      %v238 = vld [vmem:[%s209 + $0x3c] sm:$0xf]
      %v239 = vld [vmem:[%s209 + $0x40] sm:$0xf]
      %v240 = vld [vmem:[%s209 + $0x44] sm:$0xf]
      %v241 = vld [vmem:[%s209 + $0x48] sm:$0xf]
      %v242 = vld [vmem:[%s209 + $0x4c] sm:$0xf]
      %v243 = vld [vmem:[%s209 + $0x50] sm:$0xf]
      %v244 = vld [vmem:[%s209 + $0x54] sm:$0xf]
      %v245 = vld [vmem:[%s209 + $0x58] sm:$0xf]
      %v246 = vld [vmem:[%s209 + $0x5c] sm:$0xf]
      %v247 = vld [vmem:[%s209 + $0x60] sm:$0xf]
      %v248 = vld [vmem:[%s209 + $0x64] sm:$0xf]
      %v249 = vld [vmem:[%s209 + $0x68] sm:$0xf]
      %v250 = vld [vmem:[%s209 + $0x6c] sm:$0xf]
      %v251 = vld [vmem:[%s209 + $0x70] sm:$0xf]
      %v252 = vld [vmem:[%s209 + $0x74] sm:$0xf]
      %v253 = vld [vmem:[%s209 + $0x78] sm:$0xf]
      %v254 = vld [vmem:[%s209 + $0x7c] sm:$0xf]
      %v255 = vunpack.c.l.bf16 %v223
      %v256 = vunpack.c.l.bf16 %v224
      %v257 = vunpack.c.l.bf16 %v225
      %v258 = vunpack.c.l.bf16 %v226
      %v259 = vunpack.c.l.bf16 %v227
      %v260 = vunpack.c.l.bf16 %v228
      %v261 = vunpack.c.l.bf16 %v229
      %v262 = vunpack.c.l.bf16 %v230
      %v263 = vunpack.c.l.bf16 %v231
      %v264 = vunpack.c.l.bf16 %v232
      %v265 = vunpack.c.l.bf16 %v233
      %v266 = vunpack.c.l.bf16 %v234
      %v267 = vunpack.c.l.bf16 %v235
      %v268 = vunpack.c.l.bf16 %v236
      %v269 = vunpack.c.l.bf16 %v237
      %v270 = vunpack.c.l.bf16 %v238
      %v271 = vunpack.c.l.bf16 %v239
      %v272 = vunpack.c.l.bf16 %v240
      %v273 = vunpack.c.l.bf16 %v241
      %v274 = vunpack.c.l.bf16 %v242
      %v275 = vunpack.c.l.bf16 %v243
      %v276 = vunpack.c.l.bf16 %v244
      %v277 = vunpack.c.l.bf16 %v245
      %v278 = vunpack.c.l.bf16 %v246
      %v279 = vunpack.c.l.bf16 %v247
      %v280 = vunpack.c.l.bf16 %v248
      %v281 = vunpack.c.l.bf16 %v249
      %v282 = vunpack.c.l.bf16 %v250
      %v283 = vunpack.c.l.bf16 %v251
      %v284 = vunpack.c.l.bf16 %v252
      %v285 = vunpack.c.l.bf16 %v253
      %v286 = vunpack.c.l.bf16 %v254
      %v287 = vld [vmem:[%s1] sm:$0x1]
      %v289 = vlaneseq
      %v290 = vshrl.u32 %v289, 7
      %v291 = vsub.s32 0, %v290
      %v292 = vrot.slane %v287, %v291
      %v294 = vmul.f32 %v255, %v292
      %v295 = vmul.f32 %v256, %v292
      %v296 = vmul.f32 %v257, %v292
      %v297 = vmul.f32 %v258, %v292
      %v298 = vmul.f32 %v259, %v292
      %v299 = vmul.f32 %v260, %v292
      %v300 = vmul.f32 %v261, %v292
      %v301 = vmul.f32 %v262, %v292
      %v302 = vmul.f32 %v263, %v292
      %v303 = vmul.f32 %v264, %v292
      %v304 = vmul.f32 %v265, %v292
      %v305 = vmul.f32 %v266, %v292
      %v306 = vmul.f32 %v267, %v292
      %v307 = vmul.f32 %v268, %v292
      %v308 = vmul.f32 %v269, %v292
      %v309 = vmul.f32 %v270, %v292
      %v310 = vmul.f32 %v271, %v292
      %v311 = vmul.f32 %v272, %v292
      %v312 = vmul.f32 %v273, %v292
      %v313 = vmul.f32 %v274, %v292
      %v314 = vmul.f32 %v275, %v292
      %v315 = vmul.f32 %v276, %v292
      %v316 = vmul.f32 %v277, %v292
      %v317 = vmul.f32 %v278, %v292
      %v318 = vmul.f32 %v279, %v292
      %v319 = vmul.f32 %v280, %v292
      %v320 = vmul.f32 %v281, %v292
      %v321 = vmul.f32 %v282, %v292
      %v322 = vmul.f32 %v283, %v292
      %v323 = vmul.f32 %v284, %v292
      %v324 = vmul.f32 %v285, %v292
      %v325 = vmul.f32 %v286, %v292
      %v326 = vld [vmem:[%s2] sm:$0x1]
      %v328 = vlaneseq
      %v329 = vshrl.u32 %v328, 7
      %v330 = vsub.s32 0, %v329
      %v331 = vrot.slane %v326, %v330
      %v333 = vadd.f32 %v294, %v331
      %v334 = vadd.f32 %v295, %v331
      %v335 = vadd.f32 %v296, %v331
      %v336 = vadd.f32 %v297, %v331
      %v337 = vadd.f32 %v298, %v331
      %v338 = vadd.f32 %v299, %v331
      %v339 = vadd.f32 %v300, %v331
      %v340 = vadd.f32 %v301, %v331
      %v341 = vadd.f32 %v302, %v331
      %v342 = vadd.f32 %v303, %v331
      %v343 = vadd.f32 %v304, %v331
      %v344 = vadd.f32 %v305, %v331
      %v345 = vadd.f32 %v306, %v331
      %v346 = vadd.f32 %v307, %v331
      %v347 = vadd.f32 %v308, %v331
      %v348 = vadd.f32 %v309, %v331
      %v349 = vadd.f32 %v310, %v331
      %v350 = vadd.f32 %v311, %v331
      %v351 = vadd.f32 %v312, %v331
      %v352 = vadd.f32 %v313, %v331
      %v353 = vadd.f32 %v314, %v331
      %v354 = vadd.f32 %v315, %v331
      %v355 = vadd.f32 %v316, %v331
      %v356 = vadd.f32 %v317, %v331
      %v357 = vadd.f32 %v318, %v331
      %v358 = vadd.f32 %v319, %v331
      %v359 = vadd.f32 %v320, %v331
      %v360 = vadd.f32 %v321, %v331
      %v361 = vadd.f32 %v322, %v331
      %v362 = vadd.f32 %v323, %v331
      %v363 = vadd.f32 %v324, %v331
      %v364 = vadd.f32 %v325, %v331
      %v365 = vld [vmem:[%s215] sm:$0xf]
      %v366 = vld [vmem:[%s215 + $0x4] sm:$0xf]
      %v367 = vld [vmem:[%s215 + $0x8] sm:$0xf]
      %v368 = vld [vmem:[%s215 + $0xc] sm:$0xf]
      %v369 = vld [vmem:[%s215 + $0x10] sm:$0xf]
      %v370 = vld [vmem:[%s215 + $0x14] sm:$0xf]
      %v371 = vld [vmem:[%s215 + $0x18] sm:$0xf]
      %v372 = vld [vmem:[%s215 + $0x1c] sm:$0xf]
      %v373 = vld [vmem:[%s215 + $0x20] sm:$0xf]
      %v374 = vld [vmem:[%s215 + $0x24] sm:$0xf]
      %v375 = vld [vmem:[%s215 + $0x28] sm:$0xf]
      %v376 = vld [vmem:[%s215 + $0x2c] sm:$0xf]
      %v377 = vld [vmem:[%s215 + $0x30] sm:$0xf]
      %v378 = vld [vmem:[%s215 + $0x34] sm:$0xf]
      %v379 = vld [vmem:[%s215 + $0x38] sm:$0xf]
      %v380 = vld [vmem:[%s215 + $0x3c] sm:$0xf]
      %v381 = vld [vmem:[%s215 + $0x40] sm:$0xf]
      %v382 = vld [vmem:[%s215 + $0x44] sm:$0xf]
      %v383 = vld [vmem:[%s215 + $0x48] sm:$0xf]
      %v384 = vld [vmem:[%s215 + $0x4c] sm:$0xf]
      %v385 = vld [vmem:[%s215 + $0x50] sm:$0xf]
      %v386 = vld [vmem:[%s215 + $0x54] sm:$0xf]
      %v387 = vld [vmem:[%s215 + $0x58] sm:$0xf]
      %v388 = vld [vmem:[%s215 + $0x5c] sm:$0xf]
      %v389 = vld [vmem:[%s215 + $0x60] sm:$0xf]
      %v390 = vld [vmem:[%s215 + $0x64] sm:$0xf]
      %v391 = vld [vmem:[%s215 + $0x68] sm:$0xf]
      %v392 = vld [vmem:[%s215 + $0x6c] sm:$0xf]
      %v393 = vld [vmem:[%s215 + $0x70] sm:$0xf]
      %v394 = vld [vmem:[%s215 + $0x74] sm:$0xf]
      %v395 = vld [vmem:[%s215 + $0x78] sm:$0xf]
      %v396 = vld [vmem:[%s215 + $0x7c] sm:$0xf]
      %v397 = vunpack.c.l.bf16 %v365
      %v398 = vunpack.c.l.bf16 %v366
      %v399 = vunpack.c.l.bf16 %v367
      %v400 = vunpack.c.l.bf16 %v368
      %v401 = vunpack.c.l.bf16 %v369
      %v402 = vunpack.c.l.bf16 %v370
      %v403 = vunpack.c.l.bf16 %v371
      %v404 = vunpack.c.l.bf16 %v372
      %v405 = vunpack.c.l.bf16 %v373
      %v406 = vunpack.c.l.bf16 %v374
      %v407 = vunpack.c.l.bf16 %v375
      %v408 = vunpack.c.l.bf16 %v376
      %v409 = vunpack.c.l.bf16 %v377
      %v410 = vunpack.c.l.bf16 %v378
      %v411 = vunpack.c.l.bf16 %v379
      %v412 = vunpack.c.l.bf16 %v380
      %v413 = vunpack.c.l.bf16 %v381
      %v414 = vunpack.c.l.bf16 %v382
      %v415 = vunpack.c.l.bf16 %v383
      %v416 = vunpack.c.l.bf16 %v384
      %v417 = vunpack.c.l.bf16 %v385
      %v418 = vunpack.c.l.bf16 %v386
      %v419 = vunpack.c.l.bf16 %v387
      %v420 = vunpack.c.l.bf16 %v388
      %v421 = vunpack.c.l.bf16 %v389
      %v422 = vunpack.c.l.bf16 %v390
      %v423 = vunpack.c.l.bf16 %v391
      %v424 = vunpack.c.l.bf16 %v392
      %v425 = vunpack.c.l.bf16 %v393
      %v426 = vunpack.c.l.bf16 %v394
      %v427 = vunpack.c.l.bf16 %v395
      %v428 = vunpack.c.l.bf16 %v396
      %v429 = vadd.f32 %v333, %v397
      %v430 = vadd.f32 %v334, %v398
      %v431 = vadd.f32 %v335, %v399
      %v432 = vadd.f32 %v336, %v400
      %v433 = vadd.f32 %v337, %v401
      %v434 = vadd.f32 %v338, %v402
      %v435 = vadd.f32 %v339, %v403
      %v436 = vadd.f32 %v340, %v404
      %v437 = vadd.f32 %v341, %v405
      %v438 = vadd.f32 %v342, %v406
      %v439 = vadd.f32 %v343, %v407
      %v440 = vadd.f32 %v344, %v408
      %v441 = vadd.f32 %v345, %v409
      %v442 = vadd.f32 %v346, %v410
      %v443 = vadd.f32 %v347, %v411
      %v444 = vadd.f32 %v348, %v412
      %v445 = vadd.f32 %v349, %v413
      %v446 = vadd.f32 %v350, %v414
      %v447 = vadd.f32 %v351, %v415
      %v448 = vadd.f32 %v352, %v416
      %v449 = vadd.f32 %v353, %v417
      %v450 = vadd.f32 %v354, %v418
      %v451 = vadd.f32 %v355, %v419
      %v452 = vadd.f32 %v356, %v420
      %v453 = vadd.f32 %v357, %v421
      %v454 = vadd.f32 %v358, %v422
      %v455 = vadd.f32 %v359, %v423
      %v456 = vadd.f32 %v360, %v424
      %v457 = vadd.f32 %v361, %v425
      %v458 = vadd.f32 %v362, %v426
      %v459 = vadd.f32 %v363, %v427
      %v460 = vadd.f32 %v364, %v428
      %v461 = vmax.f32 %v429, 0.0
      %v462 = vmax.f32 %v430, 0.0
      %v463 = vmax.f32 %v431, 0.0
      %v464 = vmax.f32 %v432, 0.0
      %v465 = vmax.f32 %v433, 0.0
      %v466 = vmax.f32 %v434, 0.0
      %v467 = vmax.f32 %v435, 0.0
      %v468 = vmax.f32 %v436, 0.0
      %v469 = vmax.f32 %v437, 0.0
      %v470 = vmax.f32 %v438, 0.0
      %v471 = vmax.f32 %v439, 0.0
      %v472 = vmax.f32 %v440, 0.0
      %v473 = vmax.f32 %v441, 0.0
      %v474 = vmax.f32 %v442, 0.0
      %v475 = vmax.f32 %v443, 0.0
      %v476 = vmax.f32 %v444, 0.0
      %v477 = vmax.f32 %v445, 0.0
      %v478 = vmax.f32 %v446, 0.0
      %v479 = vmax.f32 %v447, 0.0
      %v480 = vmax.f32 %v448, 0.0
      %v481 = vmax.f32 %v449, 0.0
      %v482 = vmax.f32 %v450, 0.0
      %v483 = vmax.f32 %v451, 0.0
      %v484 = vmax.f32 %v452, 0.0
      %v485 = vmax.f32 %v453, 0.0
      %v486 = vmax.f32 %v454, 0.0
      %v487 = vmax.f32 %v455, 0.0
      %v488 = vmax.f32 %v456, 0.0
      %v489 = vmax.f32 %v457, 0.0
      %v490 = vmax.f32 %v458, 0.0
      %v491 = vmax.f32 %v459, 0.0
      %v492 = vmax.f32 %v460, 0.0
      %v493 = vpack.c.bf16 %v462, %v461
      %v494 = vpack.c.bf16 %v464, %v463
      %v495 = vpack.c.bf16 %v466, %v465
      %v496 = vpack.c.bf16 %v468, %v467
      %v497 = vpack.c.bf16 %v470, %v469
      %v498 = vpack.c.bf16 %v472, %v471
      %v499 = vpack.c.bf16 %v474, %v473
      %v500 = vpack.c.bf16 %v476, %v475
      %v501 = vpack.c.bf16 %v478, %v477
      %v502 = vpack.c.bf16 %v480, %v479
      %v503 = vpack.c.bf16 %v482, %v481
      %v504 = vpack.c.bf16 %v484, %v483
      %v505 = vpack.c.bf16 %v486, %v485
      %v506 = vpack.c.bf16 %v488, %v487
      %v507 = vpack.c.bf16 %v490, %v489
      %v508 = vpack.c.bf16 %v492, %v491
      %v525 = vunpack.c.l.b16 %v493
      %v526 = vunpack.c.h.b16 %v493
      %v527 = vunpack.c.l.b16 %v494
      %v528 = vunpack.c.h.b16 %v494
      %v529 = vunpack.c.l.b16 %v495
      %v530 = vunpack.c.h.b16 %v495
      %v531 = vunpack.c.l.b16 %v496
      %v532 = vunpack.c.h.b16 %v496
      %v533 = vunpack.c.l.b16 %v497
      %v534 = vunpack.c.h.b16 %v497
      %v535 = vunpack.c.l.b16 %v498
      %v536 = vunpack.c.h.b16 %v498
      %v537 = vunpack.c.l.b16 %v499
      %v538 = vunpack.c.h.b16 %v499
      %v539 = vunpack.c.l.b16 %v500
      %v540 = vunpack.c.h.b16 %v500
      %v541 = vunpack.c.l.b16 %v501
      %v542 = vunpack.c.h.b16 %v501
      %v543 = vunpack.c.l.b16 %v502
      %v544 = vunpack.c.h.b16 %v502
      %v545 = vunpack.c.l.b16 %v503
      %v546 = vunpack.c.h.b16 %v503
      %v547 = vunpack.c.l.b16 %v504
      %v548 = vunpack.c.h.b16 %v504
      %v549 = vunpack.c.l.b16 %v505
      %v550 = vunpack.c.h.b16 %v505
      %v551 = vunpack.c.l.b16 %v506
      %v552 = vunpack.c.h.b16 %v506
      %v553 = vunpack.c.l.b16 %v507
      %v554 = vunpack.c.h.b16 %v507
      %v555 = vunpack.c.l.b16 %v508
      %v556 = vunpack.c.h.b16 %v508
      %v557 = vpack.c.b16 %v525, %v525
      %v558 = vpack.c.b16 %v526, %v526
      %v559 = vpack.c.b16 %v527, %v527
      %v560 = vpack.c.b16 %v528, %v528
      %v561 = vpack.c.b16 %v529, %v529
      %v562 = vpack.c.b16 %v530, %v530
      %v563 = vpack.c.b16 %v531, %v531
      %v564 = vpack.c.b16 %v532, %v532
      %v565 = vpack.c.b16 %v533, %v533
      %v566 = vpack.c.b16 %v534, %v534
      %v567 = vpack.c.b16 %v535, %v535
      %v568 = vpack.c.b16 %v536, %v536
      %v569 = vpack.c.b16 %v537, %v537
      %v570 = vpack.c.b16 %v538, %v538
      %v571 = vpack.c.b16 %v539, %v539
      %v572 = vpack.c.b16 %v540, %v540
      %v573 = vpack.c.b16 %v541, %v541
      %v574 = vpack.c.b16 %v542, %v542
      %v575 = vpack.c.b16 %v543, %v543
      %v576 = vpack.c.b16 %v544, %v544
      %v577 = vpack.c.b16 %v545, %v545
      %v578 = vpack.c.b16 %v546, %v546
      %v579 = vpack.c.b16 %v547, %v547
      %v580 = vpack.c.b16 %v548, %v548
      %v581 = vpack.c.b16 %v549, %v549
      %v582 = vpack.c.b16 %v550, %v550
      %v583 = vpack.c.b16 %v551, %v551
      %v584 = vpack.c.b16 %v552, %v552
      %v585 = vpack.c.b16 %v553, %v553
      %v586 = vpack.c.b16 %v554, %v554
      %v587 = vpack.c.b16 %v555, %v555
      %v588 = vpack.c.b16 %v556, %v556
      %621 = vst [vmem:[%s221] sm:$0xf] %v557
      %622 = vst [vmem:[%s221 + $0x4] sm:$0xf] %v558
      %623 = vst [vmem:[%s221 + $0x8] sm:$0xf] %v559
      %624 = vst [vmem:[%s221 + $0xc] sm:$0xf] %v560
      %625 = vst [vmem:[%s221 + $0x10] sm:$0xf] %v561
      %626 = vst [vmem:[%s221 + $0x14] sm:$0xf] %v562
      %627 = vst [vmem:[%s221 + $0x18] sm:$0xf] %v563
      %628 = vst [vmem:[%s221 + $0x1c] sm:$0xf] %v564
      %629 = vst [vmem:[%s221 + $0x20] sm:$0xf] %v565
      %630 = vst [vmem:[%s221 + $0x24] sm:$0xf] %v566
      %631 = vst [vmem:[%s221 + $0x28] sm:$0xf] %v567
      %632 = vst [vmem:[%s221 + $0x2c] sm:$0xf] %v568
      %633 = vst [vmem:[%s221 + $0x30] sm:$0xf] %v569
      %634 = vst [vmem:[%s221 + $0x34] sm:$0xf] %v570
      %635 = vst [vmem:[%s221 + $0x38] sm:$0xf] %v571
      %636 = vst [vmem:[%s221 + $0x3c] sm:$0xf] %v572
      %637 = vst [vmem:[%s221 + $0x40] sm:$0xf] %v573
      %638 = vst [vmem:[%s221 + $0x44] sm:$0xf] %v574
      %639 = vst [vmem:[%s221 + $0x48] sm:$0xf] %v575
      %640 = vst [vmem:[%s221 + $0x4c] sm:$0xf] %v576
      %641 = vst [vmem:[%s221 + $0x50] sm:$0xf] %v577
      %642 = vst [vmem:[%s221 + $0x54] sm:$0xf] %v578
      %643 = vst [vmem:[%s221 + $0x58] sm:$0xf] %v579
      %644 = vst [vmem:[%s221 + $0x5c] sm:$0xf] %v580
      %645 = vst [vmem:[%s221 + $0x60] sm:$0xf] %v581
      %646 = vst [vmem:[%s221 + $0x64] sm:$0xf] %v582
      %647 = vst [vmem:[%s221 + $0x68] sm:$0xf] %v583
      %648 = vst [vmem:[%s221 + $0x6c] sm:$0xf] %v584
      %649 = vst [vmem:[%s221 + $0x70] sm:$0xf] %v585
      %650 = vst [vmem:[%s221 + $0x74] sm:$0xf] %v586
      %651 = vst [vmem:[%s221 + $0x78] sm:$0xf] %v587
      %652 = vst [vmem:[%s221 + $0x7c] sm:$0xf] %v588
      %s653 = smul.u32 32, %s15
      %p654 = scmp.lt.s32.totalorder %s653, 63
      %s655 = scalar_select %p654, %s653, 63
      %s656 = smul.addr %s655, 4
      %s657 = scalar_lea.vmem %s4, %s656
      // Predicated region
      $region37: #{bottleneck_forward.11} parent=35 // pred_check
        %p658 = pneg %p127
      $region38: #{bottleneck_forward.11} parent=35 // pred_check_branch
        %660 = sbr.rel (%p658) target = $region40
      $region39: #{bottleneck_forward.11} parent=35 // pred_region
        %s661 = smul.u32 32, %s15
      $region40: #{bottleneck_forward.11} parent=35 // pred_fallthru
        _
    $region36: #{bottleneck_forward.11} parent=5 // pred_fallthru
      _
    %p662 = scmp.le.s32.totalorder 2, %s10
    // Predicated region
    $region41: #{bottleneck_forward.11} parent=5 // pred_check
      %p663 = pneg %p662
    $region42: #{bottleneck_forward.11} parent=5 // pred_check_branch
      %665 = sbr.rel (%p663) target = $region44
    $region43: #{bottleneck_forward.11} parent=5 // pred_region
      %s666 = ssub.s32 %s10, 2
      // Predicated region
      $region45: #{bottleneck_forward.11} parent=43 // pred_check
        %p667 = pneg %p133
      $region46: #{bottleneck_forward.11} parent=43 // pred_check_branch
        %669 = sbr.rel (%p667) target = $region48
      $region47: #{bottleneck_forward.11} parent=43 // pred_region
        %s670 = smul.u32 32, %s16
        %p671 = scmp.lt.s32.totalorder %s670, 63
        %s672 = scalar_select %p671, %s670, 63
        %s673 = smul.addr %s672, 4
        %s674 = scalar_lea.vmem %s4, %s673
      $region48: #{bottleneck_forward.11} parent=43 // pred_fallthru
        _
    $region44: #{bottleneck_forward.11} parent=5 // pred_fallthru
      _
  $region6: #{bottleneck_forward.11} parent=0 // loop_footer
    %s14 = sadd.s32 1, %s10
  $region7: #{bottleneck_forward.11} parent=0 // loop_footer_branch
    %9 = sbr.rel target = $region3
  $region8: #{bottleneck_forward.11} parent=0 // loop_exit
    _

</llo_original>
